<compile_context>
chip_gen: v5e
topology: v5e:2x2
jax: 0.10.0
libtpu: 0.0.40
codegen_flags: <defaults>
</compile_context>

<pallas_src>
import functools
import math

import jax
import jax.numpy as jnp
from jax.experimental import pallas as pl
from jax.experimental.pallas import tpu as pltpu


# ----------------------------- Pallas kernel --------------------------------

def _bilstm_layer_kernel(x_ref, wih_ref, whh_f_ref, whh_b_ref, b_ref, len_ref,
                         out_ref, gf_ref, gb_ref, sf_ref=None, sb_ref=None,
                         *, S, B, H, pool):
    """One bidirectional LSTM layer (both directions, full sequence),
    optionally with the length-masked max-pool fused in.

    x_ref:     (S*B, Din) f32   time-major inputs, row t*B + b  <->  (t, b)
    wih_ref:   (Din, 8H)  f32   [W_ih_fwd^T | W_ih_bwd^T]
    whh_f_ref: (H, 4H)    f32   W_hh_fwd^T
    whh_b_ref: (H, 4H)    f32   W_hh_bwd^T
    b_ref:     (1, 8H)    f32   [b_ih_fwd + b_hh_fwd | b_ih_bwd + b_hh_bwd]
    len_ref:   (B, 1)     i32   valid lengths
    out_ref:   (B, 2H)  if pool else (S*B, 2H)
    gf_ref/gb_ref: (S*B, 4H) f32 scratch — hoisted input-gate preactivations
    sf_ref/sb_ref: (S*B, H)  f32 scratch — per-step hidden states (non-pool layers)
    Gate order follows PyTorch: [i, f, g, o].
    """
    H4 = 4 * H

    # ---- hoisted input projection: one big MXU GEMM over all timesteps ----
    gx = jnp.dot(x_ref[...], wih_ref[...],
                 preferred_element_type=jnp.float32) + b_ref[...]        # (S*B, 8H)
    gf_ref[...] = gx[:, :H4]
    gb_ref[...] = gx[:, H4:]

    # ---- invariant loads hoisted out of the serial time loop ----
    whh_f = whh_f_ref[...]                                               # (H, 4H)
    whh_b = whh_b_ref[...]                                               # (H, 4H)
    lengths = len_ref[...]                                               # (B, 1)

    def cell(g_pre, h, c, whh):
        gates = g_pre + jnp.dot(h, whh, preferred_element_type=jnp.float32)
        i_g = jax.nn.sigmoid(gates[:, 0 * H:1 * H])
        f_g = jax.nn.sigmoid(gates[:, 1 * H:2 * H])
        g_g = jnp.tanh(gates[:, 2 * H:3 * H])
        o_g = jax.nn.sigmoid(gates[:, 3 * H:4 * H])
        c_new = f_g * c + i_g * g_g
        h_new = o_g * jnp.tanh(c_new)
        return h_new, c_new

    def step(t, carry):
        if pool:
            h_f, c_f, h_b, c_b, m_f, m_b = carry
        else:
            h_f, c_f, h_b, c_b = carry
        tf = t            # forward direction position
        tb = S - 1 - t    # backward direction position

        # Forward direction.
        g_f = gf_ref[pl.ds(tf * B, B), :]                                # (B, 4H)
        hn_f, cn_f = cell(g_f, h_f, c_f, whh_f)
        v_f = lengths > tf                                               # (B, 1)

        # Backward direction (interleaved: independent matmul -> more ILP).
        g_b = gb_ref[pl.ds(tb * B, B), :]                                # (B, 4H)
        hn_b, cn_b = cell(g_b, h_b, c_b, whh_b)
        v_b = lengths > tb                                               # (B, 1)

        if pool:
            # Fused length-masked running max (only valid steps contribute).
            m_f = jnp.where(v_f, jnp.maximum(m_f, hn_f), m_f)
            m_b = jnp.where(v_b, jnp.maximum(m_b, hn_b), m_b)
        else:
            # Full-lane-width per-direction scratch stores (lane-dense at real H).
            sf_ref[pl.ds(tf * B, B), :] = jnp.where(v_f, hn_f, 0.0)
            sb_ref[pl.ds(tb * B, B), :] = jnp.where(v_b, hn_b, 0.0)

        # packed-sequence semantics: state only advances on valid steps.
        h_f = jnp.where(v_f, hn_f, h_f)
        c_f = jnp.where(v_f, cn_f, c_f)
        h_b = jnp.where(v_b, hn_b, h_b)
        c_b = jnp.where(v_b, cn_b, c_b)
        if pool:
            return (h_f, c_f, h_b, c_b, m_f, m_b)
        return (h_f, c_f, h_b, c_b)

    zeros = jnp.zeros((B, H), jnp.float32)
    if pool:
        neg = jnp.full((B, H), -jnp.inf, jnp.float32)
        carry0 = (zeros, zeros, zeros, zeros, neg, neg)
    else:
        carry0 = (zeros, zeros, zeros, zeros)

    # Unroll short sequences so the scheduler can overlap the recurrent matmuls with
    # the gate nonlinearities and stores across steps.
    carry = jax.lax.fori_loop(0, S, step, carry0,
                              unroll=True if S <= 32 else 8)

    if pool:
        m_f, m_b = carry[4], carry[5]
        nonempty = lengths >= 1        # guard: length-0 rows pool to 0, not -inf
        out_ref[:, :H] = jnp.where(nonempty, m_f, 0.0)
        out_ref[:, H:] = jnp.where(nonempty, m_b, 0.0)
    else:
        # Two bulk stores instead of 2*S per-step partial-lane stores.
        out_ref[:, :H] = sf_ref[...]
        out_ref[:, H:] = sb_ref[...]


# ------------------------------ JAX wrappers ---------------------------------

_VMEM = pl.BlockSpec(memory_space=pltpu.MemorySpace.VMEM)


def _bilstm_layer(x2d, w_ih, w_hh_f, w_hh_b, bias, len2, *, S, B, pool):
    """x2d: (S*B, Din) time-major. Returns (B, 2H) if pool else (S*B, 2H)."""
    H = w_hh_f.shape[0]
    out_shape = (jax.ShapeDtypeStruct((B, 2 * H), jnp.float32) if pool
                 else jax.ShapeDtypeStruct((S * B, 2 * H), jnp.float32))
    scratch = [pltpu.VMEM((S * B, 4 * H), jnp.float32),
               pltpu.VMEM((S * B, 4 * H), jnp.float32)]
    if not pool:
        scratch += [pltpu.VMEM((S * B, H), jnp.float32),
                    pltpu.VMEM((S * B, H), jnp.float32)]
    kernel = functools.partial(_bilstm_layer_kernel, S=S, B=B, H=H, pool=pool)
    # NOTE: grid-less (whole arrays resident in VMEM) — fine at these shapes.  For
    # production sizes, add a batch-tiled grid (dimension_semantics=("parallel",))
    # blocking x/out/lengths along B, and bf16 MXU operands on v5e/v6e.
    return pl.pallas_call(
        kernel,
        out_shape=out_shape,
        in_specs=[_VMEM] * 6,
        out_specs=_VMEM,
        scratch_shapes=scratch,
    )(x2d, w_ih, w_hh_f, w_hh_b, bias, len2)


def lstm_encoder_forward(params, inputs, lengths):
    """inputs: (B, S) int32, lengths: (B,) int32 -> (B, hidden_size) f32."""
    B, S = inputs.shape
    # Embedding lookup (glue).  emb_p / input_p / hidden_p / output_p are 0 and the
    # module is in eval mode, so every dropout layer is the identity.
    embed = jnp.take(params["emb"], inputs, axis=0).astype(jnp.float32)   # (B, S, E)
    # Time-major + flattened to 2D so the whole-sequence input projection is a single
    # GEMM and per-step rows are contiguous: row t*B + b  <->  (t, b).
    x2d = jnp.transpose(embed, (1, 0, 2)).reshape(S * B, -1)              # (S*B, E)
    len2 = lengths.reshape(B, 1).astype(jnp.int32)

    n_layers = len(params["lstm"])
    for li, layer in enumerate(params["lstm"]):
        x2d = _bilstm_layer(x2d, layer["w_ih"], layer["w_hh_f"], layer["w_hh_b"],
                            layer["b"], len2, S=S, B=B, pool=(li == n_layers - 1))
    # Last layer fuses the length-masked max pool -> (B, hidden_size).
    return x2d


# ---------------------------- parameter init ---------------------------------

def init_params(key, vocab_size, emb_size, hidden_size, num_layers, bidirectional=True):
    assert bidirectional
    H = hidden_size // 2
    keys = jax.random.split(key, 1 + num_layers * 2 * 4)
    ki = iter(keys)

    emb_bound = math.sqrt(6.0 / emb_size)
    emb = jax.random.uniform(next(ki), (vocab_size, emb_size),
                             minval=-emb_bound, maxval=emb_bound, dtype=jnp.float32)

    stdv = 1.0 / math.sqrt(H)
    layers = []
    for layer in range(num_layers):
        din = emb_size if layer == 0 else hidden_size
        wih_dirs, whh_dirs, b_dirs = [], [], []
        for _ in range(2):  # forward, backward
            w_ih = jax.random.uniform(next(ki), (4 * H, din), minval=-stdv,
                                      maxval=stdv, dtype=jnp.float32)
            w_hh = jax.random.uniform(next(ki), (4 * H, H), minval=-stdv,
                                      maxval=stdv, dtype=jnp.float32)
            b_ih = jax.random.uniform(next(ki), (4 * H,), minval=-stdv,
                                      maxval=stdv, dtype=jnp.float32)
            b_hh = jax.random.uniform(next(ki), (4 * H,), minval=-stdv,
                                      maxval=stdv, dtype=jnp.float32)
            wih_dirs.append(w_ih.T)            # (din, 4H)  — pre-transposed once
            whh_dirs.append(w_hh.T)            # (H, 4H)    — pre-transposed once
            b_dirs.append(b_ih + b_hh)
        layers.append({
            "w_ih": jnp.concatenate(wih_dirs, axis=1),            # (din, 8H)
            "w_hh_f": whh_dirs[0],                                # (H, 4H)
            "w_hh_b": whh_dirs[1],                                # (H, 4H)
            "b": jnp.concatenate(b_dirs).reshape(1, 8 * H),       # (1, 8H)
        })
    return {"emb": emb, "lstm": layers}


# --------------------------------- main ---------------------------------------

if __name__ == "__main__":
    VOCAB, EMB, HIDDEN, LAYERS = 50, 32, 32, 2
    B, S = 2, 8

    key = jax.random.PRNGKey(0)
    pkey, ikey = jax.random.split(key)
    params = init_params(pkey, VOCAB, EMB, HIDDEN, LAYERS)

    inputs = jax.random.randint(ikey, (B, S), 0, VOCAB, dtype=jnp.int32)
    lengths = jnp.array([8, 5], dtype=jnp.int32)

    out = jax.jit(lstm_encoder_forward)(params, inputs, lengths)
    out = jax.block_until_ready(out)
    assert out.shape == (B, HIDDEN), out.shape
    assert bool(jnp.all(jnp.isfinite(out)))
    print("KERNEL_OK")
</pallas_src>

<mosaic_0001>
module attributes {stable_mosaic.version = 11 : i64} {
  func.func @_bilstm_layer_kernel(%arg0: memref<16x32xf32, #tpu.memory_space<vmem>>, %arg1: memref<32x128xf32, #tpu.memory_space<vmem>>, %arg2: memref<16x64xf32, #tpu.memory_space<vmem>>, %arg3: memref<16x64xf32, #tpu.memory_space<vmem>>, %arg4: memref<1x128xf32, #tpu.memory_space<vmem>>, %arg5: memref<2x1xi32, #tpu.memory_space<vmem>>, %arg6: memref<16x32xf32, #tpu.memory_space<vmem>>, %arg7: memref<16x64xf32, #tpu.memory_space<vmem>>, %arg8: memref<16x64xf32, #tpu.memory_space<vmem>>, %arg9: memref<16x16xf32, #tpu.memory_space<vmem>>, %arg10: memref<16x16xf32, #tpu.memory_space<vmem>>) attributes {dimension_semantics = [], scalar_prefetch = 0 : i64, scratch_operands = 4 : i64, tpu.core_type = #tpu.core_type<tc>} {
    %c0 = arith.constant 0 : index
    %c0_0 = arith.constant 0 : index
    %0 = vector.load %arg0[%c0, %c0_0] : memref<16x32xf32, #tpu.memory_space<vmem>>, vector<16x32xf32>
    %c0_1 = arith.constant 0 : index
    %c0_2 = arith.constant 0 : index
    %1 = vector.load %arg1[%c0_1, %c0_2] : memref<32x128xf32, #tpu.memory_space<vmem>>, vector<32x128xf32>
    %cst = arith.constant dense<0.000000e+00> : vector<16x128xf32>
    %2 = tpu.matmul %0, %1, %cst {dimension_numbers = #tpu.dot_dimension_numbers<[1], [0], [0], [1], [0, 0, 1, 1], [], []>} : vector<16x32xf32>, vector<32x128xf32>, vector<16x128xf32> -> vector<16x128xf32>
    %c0_3 = arith.constant 0 : index
    %c0_4 = arith.constant 0 : index
    %3 = vector.load %arg4[%c0_3, %c0_4] : memref<1x128xf32, #tpu.memory_space<vmem>>, vector<1x128xf32>
    %4 = vector.broadcast %3 : vector<1x128xf32> to vector<16x128xf32>
    %5 = arith.addf %2, %4 : vector<16x128xf32>
    %6 = vector.extract_strided_slice %5 {offsets = [0, 0], sizes = [16, 64], strides = [1, 1]} : vector<16x128xf32> to vector<16x64xf32>
    %c0_5 = arith.constant 0 : index
    %c0_6 = arith.constant 0 : index
    %7 = vector.load %arg7[%c0_5, %c0_6] : memref<16x64xf32, #tpu.memory_space<vmem>>, vector<16x64xf32>
    tpu.vector_store %arg7[%c0_5, %c0_6], %6 {strides = array<i32>} : memref<16x64xf32, #tpu.memory_space<vmem>>, vector<16x64xf32>,
    %8 = vector.extract_strided_slice %5 {offsets = [0, 64], sizes = [16, 64], strides = [1, 1]} : vector<16x128xf32> to vector<16x64xf32>
    %c0_7 = arith.constant 0 : index
    %c0_8 = arith.constant 0 : index
    %9 = vector.load %arg8[%c0_7, %c0_8] : memref<16x64xf32, #tpu.memory_space<vmem>>, vector<16x64xf32>
    tpu.vector_store %arg8[%c0_7, %c0_8], %8 {strides = array<i32>} : memref<16x64xf32, #tpu.memory_space<vmem>>, vector<16x64xf32>,
    %c0_9 = arith.constant 0 : index
    %c0_10 = arith.constant 0 : index
    %10 = vector.load %arg2[%c0_9, %c0_10] : memref<16x64xf32, #tpu.memory_space<vmem>>, vector<16x64xf32>
    %c0_11 = arith.constant 0 : index
    %c0_12 = arith.constant 0 : index
    %11 = vector.load %arg3[%c0_11, %c0_12] : memref<16x64xf32, #tpu.memory_space<vmem>>, vector<16x64xf32>
    %c0_13 = arith.constant 0 : index
    %c0_14 = arith.constant 0 : index
    %12 = vector.load %arg5[%c0_13, %c0_14] : memref<2x1xi32, #tpu.memory_space<vmem>>, vector<2x1xi32>
    %cst_15 = arith.constant 0.000000e+00 : f32
    %13 = vector.broadcast %cst_15 : f32 to vector<2x16xf32>
    %c0_i32 = arith.constant 0 : i32
    %c7_i32 = arith.constant 7 : i32
    %14 = arith.subi %c7_i32, %c0_i32 : i32
    %c2_i32 = arith.constant 2 : i32
    %15 = arith.muli %c0_i32, %c2_i32 : i32
    %16 = arith.index_cast %15 : i32 to index
    %c0_16 = arith.constant 0 : index
    %17 = vector.load %arg7[%16, %c0_16] : memref<16x64xf32, #tpu.memory_space<vmem>>, vector<2x64xf32>
    %cst_17 = arith.constant dense<0.000000e+00> : vector<2x64xf32>
    %18 = tpu.matmul %13, %10, %cst_17 {dimension_numbers = #tpu.dot_dimension_numbers<[1], [0], [0], [1], [0, 0, 1, 1], [], []>} : vector<2x16xf32>, vector<16x64xf32>, vector<2x64xf32> -> vector<2x64xf32>
    %19 = arith.addf %17, %18 : vector<2x64xf32>
    %20 = vector.extract_strided_slice %19 {offsets = [0, 0], sizes = [2, 16], strides = [1, 1]} : vector<2x64xf32> to vector<2x16xf32>
    %21 = arith.negf %20 : vector<2x16xf32>
    %22 = math.exp %21 : vector<2x16xf32>
    %cst_18 = arith.constant 1.000000e+00 : f32
    %23 = vector.broadcast %cst_18 : f32 to vector<2x16xf32>
    %24 = arith.addf %23, %22 : vector<2x16xf32>
    %25 = arith.divf %23, %24 : vector<2x16xf32>
    %26 = vector.extract_strided_slice %19 {offsets = [0, 16], sizes = [2, 16], strides = [1, 1]} : vector<2x64xf32> to vector<2x16xf32>
    %27 = arith.negf %26 : vector<2x16xf32>
    %28 = math.exp %27 : vector<2x16xf32>
    %cst_19 = arith.constant 1.000000e+00 : f32
    %29 = vector.broadcast %cst_19 : f32 to vector<2x16xf32>
    %30 = arith.addf %29, %28 : vector<2x16xf32>
    %31 = arith.divf %29, %30 : vector<2x16xf32>
    %32 = vector.extract_strided_slice %19 {offsets = [0, 32], sizes = [2, 16], strides = [1, 1]} : vector<2x64xf32> to vector<2x16xf32>
    %33 = math.tanh %32 : vector<2x16xf32>
    %34 = vector.extract_strided_slice %19 {offsets = [0, 48], sizes = [2, 16], strides = [1, 1]} : vector<2x64xf32> to vector<2x16xf32>
    %35 = arith.negf %34 : vector<2x16xf32>
    %36 = math.exp %35 : vector<2x16xf32>
    %cst_20 = arith.constant 1.000000e+00 : f32
    %37 = vector.broadcast %cst_20 : f32 to vector<2x16xf32>
    %38 = arith.addf %37, %36 : vector<2x16xf32>
    %39 = arith.divf %37, %38 : vector<2x16xf32>
    %40 = arith.mulf %31, %13 : vector<2x16xf32>
    %41 = arith.mulf %25, %33 : vector<2x16xf32>
    %42 = arith.addf %40, %41 : vector<2x16xf32>
    %43 = math.tanh %42 : vector<2x16xf32>
    %44 = arith.mulf %39, %43 : vector<2x16xf32>
    %45 = vector.broadcast %c0_i32 : i32 to vector<2x1xi32>
    %46 = arith.cmpi sgt, %12, %45 : vector<2x1xi32>
    %c2_i32_21 = arith.constant 2 : i32
    %47 = arith.muli %14, %c2_i32_21 : i32
    %48 = arith.index_cast %47 : i32 to index
    %c0_22 = arith.constant 0 : index
    %49 = vector.load %arg8[%48, %c0_22] : memref<16x64xf32, #tpu.memory_space<vmem>>, vector<2x64xf32>
    %cst_23 = arith.constant dense<0.000000e+00> : vector<2x64xf32>
    %50 = tpu.matmul %13, %11, %cst_23 {dimension_numbers = #tpu.dot_dimension_numbers<[1], [0], [0], [1], [0, 0, 1, 1], [], []>} : vector<2x16xf32>, vector<16x64xf32>, vector<2x64xf32> -> vector<2x64xf32>
    %51 = arith.addf %49, %50 : vector<2x64xf32>
    %52 = vector.extract_strided_slice %51 {offsets = [0, 0], sizes = [2, 16], strides = [1, 1]} : vector<2x64xf32> to vector<2x16xf32>
    %53 = arith.negf %52 : vector<2x16xf32>
    %54 = math.exp %53 : vector<2x16xf32>
    %cst_24 = arith.constant 1.000000e+00 : f32
    %55 = vector.broadcast %cst_24 : f32 to vector<2x16xf32>
    %56 = arith.addf %55, %54 : vector<2x16xf32>
    %57 = arith.divf %55, %56 : vector<2x16xf32>
    %58 = vector.extract_strided_slice %51 {offsets = [0, 16], sizes = [2, 16], strides = [1, 1]} : vector<2x64xf32> to vector<2x16xf32>
    %59 = arith.negf %58 : vector<2x16xf32>
    %60 = math.exp %59 : vector<2x16xf32>
    %cst_25 = arith.constant 1.000000e+00 : f32
    %61 = vector.broadcast %cst_25 : f32 to vector<2x16xf32>
    %62 = arith.addf %61, %60 : vector<2x16xf32>
    %63 = arith.divf %61, %62 : vector<2x16xf32>
    %64 = vector.extract_strided_slice %51 {offsets = [0, 32], sizes = [2, 16], strides = [1, 1]} : vector<2x64xf32> to vector<2x16xf32>
    %65 = math.tanh %64 : vector<2x16xf32>
    %66 = vector.extract_strided_slice %51 {offsets = [0, 48], sizes = [2, 16], strides = [1, 1]} : vector<2x64xf32> to vector<2x16xf32>
    %67 = arith.negf %66 : vector<2x16xf32>
    %68 = math.exp %67 : vector<2x16xf32>
    %cst_26 = arith.constant 1.000000e+00 : f32
    %69 = vector.broadcast %cst_26 : f32 to vector<2x16xf32>
    %70 = arith.addf %69, %68 : vector<2x16xf32>
    %71 = arith.divf %69, %70 : vector<2x16xf32>
    %72 = arith.mulf %63, %13 : vector<2x16xf32>
    %73 = arith.mulf %57, %65 : vector<2x16xf32>
    %74 = arith.addf %72, %73 : vector<2x16xf32>
    %75 = math.tanh %74 : vector<2x16xf32>
    %76 = arith.mulf %71, %75 : vector<2x16xf32>
    %77 = vector.broadcast %14 : i32 to vector<2x1xi32>
    %78 = arith.cmpi sgt, %12, %77 : vector<2x1xi32>
    %cst_27 = arith.constant 0.000000e+00 : f32
    %79 = vector.shape_cast %46 : vector<2x1xi1> to vector<2x1xi1>
    %80 = vector.broadcast %79 : vector<2x1xi1> to vector<2x16xi1>
    %81 = vector.broadcast %cst_27 : f32 to vector<2x16xf32>
    %82 = arith.select %80, %44, %81 : vector<2x16xi1>, vector<2x16xf32>
    %c2_i32_28 = arith.constant 2 : i32
    %83 = arith.muli %c0_i32, %c2_i32_28 : i32
    %84 = arith.index_cast %83 : i32 to index
    %c0_29 = arith.constant 0 : index
    %85 = vector.load %arg9[%84, %c0_29] : memref<16x16xf32, #tpu.memory_space<vmem>>, vector<2x16xf32>
    tpu.vector_store %arg9[%84, %c0_29], %82 {strides = array<i32>} : memref<16x16xf32, #tpu.memory_space<vmem>>, vector<2x16xf32>,
    %cst_30 = arith.constant 0.000000e+00 : f32
    %86 = vector.shape_cast %78 : vector<2x1xi1> to vector<2x1xi1>
    %87 = vector.broadcast %86 : vector<2x1xi1> to vector<2x16xi1>
    %88 = vector.broadcast %cst_30 : f32 to vector<2x16xf32>
    %89 = arith.select %87, %76, %88 : vector<2x16xi1>, vector<2x16xf32>
    %c2_i32_31 = arith.constant 2 : i32
    %90 = arith.muli %14, %c2_i32_31 : i32
    %91 = arith.index_cast %90 : i32 to index
    %c0_32 = arith.constant 0 : index
    %92 = vector.load %arg10[%91, %c0_32] : memref<16x16xf32, #tpu.memory_space<vmem>>, vector<2x16xf32>
    tpu.vector_store %arg10[%91, %c0_32], %89 {strides = array<i32>} : memref<16x16xf32, #tpu.memory_space<vmem>>, vector<2x16xf32>,
    %93 = vector.shape_cast %46 : vector<2x1xi1> to vector<2x1xi1>
    %94 = vector.broadcast %93 : vector<2x1xi1> to vector<2x16xi1>
    %95 = arith.select %94, %44, %13 : vector<2x16xi1>, vector<2x16xf32>
    %96 = vector.shape_cast %46 : vector<2x1xi1> to vector<2x1xi1>
    %97 = vector.broadcast %96 : vector<2x1xi1> to vector<2x16xi1>
    %98 = arith.select %97, %42, %13 : vector<2x16xi1>, vector<2x16xf32>
    %99 = vector.shape_cast %78 : vector<2x1xi1> to vector<2x1xi1>
    %100 = vector.broadcast %99 : vector<2x1xi1> to vector<2x16xi1>
    %101 = arith.select %100, %76, %13 : vector<2x16xi1>, vector<2x16xf32>
    %102 = vector.shape_cast %78 : vector<2x1xi1> to vector<2x1xi1>
    %103 = vector.broadcast %102 : vector<2x1xi1> to vector<2x16xi1>
    %104 = arith.select %103, %74, %13 : vector<2x16xi1>, vector<2x16xf32>
    %c1_i32 = arith.constant 1 : i32
    %c7_i32_33 = arith.constant 7 : i32
    %105 = arith.subi %c7_i32_33, %c1_i32 : i32
    %c2_i32_34 = arith.constant 2 : i32
    %106 = arith.muli %c1_i32, %c2_i32_34 : i32
    %107 = arith.index_cast %106 : i32 to index
    %c0_35 = arith.constant 0 : index
    %108 = vector.load %arg7[%107, %c0_35] : memref<16x64xf32, #tpu.memory_space<vmem>>, vector<2x64xf32>
    %cst_36 = arith.constant dense<0.000000e+00> : vector<2x64xf32>
    %109 = tpu.matmul %95, %10, %cst_36 {dimension_numbers = #tpu.dot_dimension_numbers<[1], [0], [0], [1], [0, 0, 1, 1], [], []>} : vector<2x16xf32>, vector<16x64xf32>, vector<2x64xf32> -> vector<2x64xf32>
    %110 = arith.addf %108, %109 : vector<2x64xf32>
    %111 = vector.extract_strided_slice %110 {offsets = [0, 0], sizes = [2, 16], strides = [1, 1]} : vector<2x64xf32> to vector<2x16xf32>
    %112 = arith.negf %111 : vector<2x16xf32>
    %113 = math.exp %112 : vector<2x16xf32>
    %cst_37 = arith.constant 1.000000e+00 : f32
    %114 = vector.broadcast %cst_37 : f32 to vector<2x16xf32>
    %115 = arith.addf %114, %113 : vector<2x16xf32>
    %116 = arith.divf %114, %115 : vector<2x16xf32>
    %117 = vector.extract_strided_slice %110 {offsets = [0, 16], sizes = [2, 16], strides = [1, 1]} : vector<2x64xf32> to vector<2x16xf32>
    %118 = arith.negf %117 : vector<2x16xf32>
    %119 = math.exp %118 : vector<2x16xf32>
    %cst_38 = arith.constant 1.000000e+00 : f32
    %120 = vector.broadcast %cst_38 : f32 to vector<2x16xf32>
    %121 = arith.addf %120, %119 : vector<2x16xf32>
    %122 = arith.divf %120, %121 : vector<2x16xf32>
    %123 = vector.extract_strided_slice %110 {offsets = [0, 32], sizes = [2, 16], strides = [1, 1]} : vector<2x64xf32> to vector<2x16xf32>
    %124 = math.tanh %123 : vector<2x16xf32>
    %125 = vector.extract_strided_slice %110 {offsets = [0, 48], sizes = [2, 16], strides = [1, 1]} : vector<2x64xf32> to vector<2x16xf32>
    %126 = arith.negf %125 : vector<2x16xf32>
    %127 = math.exp %126 : vector<2x16xf32>
    %cst_39 = arith.constant 1.000000e+00 : f32
    %128 = vector.broadcast %cst_39 : f32 to vector<2x16xf32>
    %129 = arith.addf %128, %127 : vector<2x16xf32>
    %130 = arith.divf %128, %129 : vector<2x16xf32>
    %131 = arith.mulf %122, %98 : vector<2x16xf32>
    %132 = arith.mulf %116, %124 : vector<2x16xf32>
    %133 = arith.addf %131, %132 : vector<2x16xf32>
    %134 = math.tanh %133 : vector<2x16xf32>
    %135 = arith.mulf %130, %134 : vector<2x16xf32>
    %136 = vector.broadcast %c1_i32 : i32 to vector<2x1xi32>
    %137 = arith.cmpi sgt, %12, %136 : vector<2x1xi32>
    %c2_i32_40 = arith.constant 2 : i32
    %138 = arith.muli %105, %c2_i32_40 : i32
    %139 = arith.index_cast %138 : i32 to index
    %c0_41 = arith.constant 0 : index
    %140 = vector.load %arg8[%139, %c0_41] : memref<16x64xf32, #tpu.memory_space<vmem>>, vector<2x64xf32>
    %cst_42 = arith.constant dense<0.000000e+00> : vector<2x64xf32>
    %141 = tpu.matmul %101, %11, %cst_42 {dimension_numbers = #tpu.dot_dimension_numbers<[1], [0], [0], [1], [0, 0, 1, 1], [], []>} : vector<2x16xf32>, vector<16x64xf32>, vector<2x64xf32> -> vector<2x64xf32>
    %142 = arith.addf %140, %141 : vector<2x64xf32>
    %143 = vector.extract_strided_slice %142 {offsets = [0, 0], sizes = [2, 16], strides = [1, 1]} : vector<2x64xf32> to vector<2x16xf32>
    %144 = arith.negf %143 : vector<2x16xf32>
    %145 = math.exp %144 : vector<2x16xf32>
    %cst_43 = arith.constant 1.000000e+00 : f32
    %146 = vector.broadcast %cst_43 : f32 to vector<2x16xf32>
    %147 = arith.addf %146, %145 : vector<2x16xf32>
    %148 = arith.divf %146, %147 : vector<2x16xf32>
    %149 = vector.extract_strided_slice %142 {offsets = [0, 16], sizes = [2, 16], strides = [1, 1]} : vector<2x64xf32> to vector<2x16xf32>
    %150 = arith.negf %149 : vector<2x16xf32>
    %151 = math.exp %150 : vector<2x16xf32>
    %cst_44 = arith.constant 1.000000e+00 : f32
    %152 = vector.broadcast %cst_44 : f32 to vector<2x16xf32>
    %153 = arith.addf %152, %151 : vector<2x16xf32>
    %154 = arith.divf %152, %153 : vector<2x16xf32>
    %155 = vector.extract_strided_slice %142 {offsets = [0, 32], sizes = [2, 16], strides = [1, 1]} : vector<2x64xf32> to vector<2x16xf32>
    %156 = math.tanh %155 : vector<2x16xf32>
    %157 = vector.extract_strided_slice %142 {offsets = [0, 48], sizes = [2, 16], strides = [1, 1]} : vector<2x64xf32> to vector<2x16xf32>
    %158 = arith.negf %157 : vector<2x16xf32>
    %159 = math.exp %158 : vector<2x16xf32>
    %cst_45 = arith.constant 1.000000e+00 : f32
    %160 = vector.broadcast %cst_45 : f32 to vector<2x16xf32>
    %161 = arith.addf %160, %159 : vector<2x16xf32>
    %162 = arith.divf %160, %161 : vector<2x16xf32>
    %163 = arith.mulf %154, %104 : vector<2x16xf32>
    %164 = arith.mulf %148, %156 : vector<2x16xf32>
    %165 = arith.addf %163, %164 : vector<2x16xf32>
    %166 = math.tanh %165 : vector<2x16xf32>
    %167 = arith.mulf %162, %166 : vector<2x16xf32>
    %168 = vector.broadcast %105 : i32 to vector<2x1xi32>
    %169 = arith.cmpi sgt, %12, %168 : vector<2x1xi32>
    %cst_46 = arith.constant 0.000000e+00 : f32
    %170 = vector.shape_cast %137 : vector<2x1xi1> to vector<2x1xi1>
    %171 = vector.broadcast %170 : vector<2x1xi1> to vector<2x16xi1>
    %172 = vector.broadcast %cst_46 : f32 to vector<2x16xf32>
    %173 = arith.select %171, %135, %172 : vector<2x16xi1>, vector<2x16xf32>
    %c2_i32_47 = arith.constant 2 : i32
    %174 = arith.muli %c1_i32, %c2_i32_47 : i32
    %175 = arith.index_cast %174 : i32 to index
    %c0_48 = arith.constant 0 : index
    %176 = vector.load %arg9[%175, %c0_48] : memref<16x16xf32, #tpu.memory_space<vmem>>, vector<2x16xf32>
    tpu.vector_store %arg9[%175, %c0_48], %173 {strides = array<i32>} : memref<16x16xf32, #tpu.memory_space<vmem>>, vector<2x16xf32>,
    %cst_49 = arith.constant 0.000000e+00 : f32
    %177 = vector.shape_cast %169 : vector<2x1xi1> to vector<2x1xi1>
    %178 = vector.broadcast %177 : vector<2x1xi1> to vector<2x16xi1>
    %179 = vector.broadcast %cst_49 : f32 to vector<2x16xf32>
    %180 = arith.select %178, %167, %179 : vector<2x16xi1>, vector<2x16xf32>
    %c2_i32_50 = arith.constant 2 : i32
    %181 = arith.muli %105, %c2_i32_50 : i32
    %182 = arith.index_cast %181 : i32 to index
    %c0_51 = arith.constant 0 : index
    %183 = vector.load %arg10[%182, %c0_51] : memref<16x16xf32, #tpu.memory_space<vmem>>, vector<2x16xf32>
    tpu.vector_store %arg10[%182, %c0_51], %180 {strides = array<i32>} : memref<16x16xf32, #tpu.memory_space<vmem>>, vector<2x16xf32>,
    %184 = vector.shape_cast %137 : vector<2x1xi1> to vector<2x1xi1>
    %185 = vector.broadcast %184 : vector<2x1xi1> to vector<2x16xi1>
    %186 = arith.select %185, %135, %95 : vector<2x16xi1>, vector<2x16xf32>
    %187 = vector.shape_cast %137 : vector<2x1xi1> to vector<2x1xi1>
    %188 = vector.broadcast %187 : vector<2x1xi1> to vector<2x16xi1>
    %189 = arith.select %188, %133, %98 : vector<2x16xi1>, vector<2x16xf32>
    %190 = vector.shape_cast %169 : vector<2x1xi1> to vector<2x1xi1>
    %191 = vector.broadcast %190 : vector<2x1xi1> to vector<2x16xi1>
    %192 = arith.select %191, %167, %101 : vector<2x16xi1>, vector<2x16xf32>
    %193 = vector.shape_cast %169 : vector<2x1xi1> to vector<2x1xi1>
    %194 = vector.broadcast %193 : vector<2x1xi1> to vector<2x16xi1>
    %195 = arith.select %194, %165, %104 : vector<2x16xi1>, vector<2x16xf32>
    %c2_i32_52 = arith.constant 2 : i32
    %c7_i32_53 = arith.constant 7 : i32
    %196 = arith.subi %c7_i32_53, %c2_i32_52 : i32
    %c2_i32_54 = arith.constant 2 : i32
    %197 = arith.muli %c2_i32_52, %c2_i32_54 : i32
    %198 = arith.index_cast %197 : i32 to index
    %c0_55 = arith.constant 0 : index
    %199 = vector.load %arg7[%198, %c0_55] : memref<16x64xf32, #tpu.memory_space<vmem>>, vector<2x64xf32>
    %cst_56 = arith.constant dense<0.000000e+00> : vector<2x64xf32>
    %200 = tpu.matmul %186, %10, %cst_56 {dimension_numbers = #tpu.dot_dimension_numbers<[1], [0], [0], [1], [0, 0, 1, 1], [], []>} : vector<2x16xf32>, vector<16x64xf32>, vector<2x64xf32> -> vector<2x64xf32>
    %201 = arith.addf %199, %200 : vector<2x64xf32>
    %202 = vector.extract_strided_slice %201 {offsets = [0, 0], sizes = [2, 16], strides = [1, 1]} : vector<2x64xf32> to vector<2x16xf32>
    %203 = arith.negf %202 : vector<2x16xf32>
    %204 = math.exp %203 : vector<2x16xf32>
    %cst_57 = arith.constant 1.000000e+00 : f32
    %205 = vector.broadcast %cst_57 : f32 to vector<2x16xf32>
    %206 = arith.addf %205, %204 : vector<2x16xf32>
    %207 = arith.divf %205, %206 : vector<2x16xf32>
    %208 = vector.extract_strided_slice %201 {offsets = [0, 16], sizes = [2, 16], strides = [1, 1]} : vector<2x64xf32> to vector<2x16xf32>
    %209 = arith.negf %208 : vector<2x16xf32>
    %210 = math.exp %209 : vector<2x16xf32>
    %cst_58 = arith.constant 1.000000e+00 : f32
    %211 = vector.broadcast %cst_58 : f32 to vector<2x16xf32>
    %212 = arith.addf %211, %210 : vector<2x16xf32>
    %213 = arith.divf %211, %212 : vector<2x16xf32>
    %214 = vector.extract_strided_slice %201 {offsets = [0, 32], sizes = [2, 16], strides = [1, 1]} : vector<2x64xf32> to vector<2x16xf32>
    %215 = math.tanh %214 : vector<2x16xf32>
    %216 = vector.extract_strided_slice %201 {offsets = [0, 48], sizes = [2, 16], strides = [1, 1]} : vector<2x64xf32> to vector<2x16xf32>
    %217 = arith.negf %216 : vector<2x16xf32>
    %218 = math.exp %217 : vector<2x16xf32>
    %cst_59 = arith.constant 1.000000e+00 : f32
    %219 = vector.broadcast %cst_59 : f32 to vector<2x16xf32>
    %220 = arith.addf %219, %218 : vector<2x16xf32>
    %221 = arith.divf %219, %220 : vector<2x16xf32>
    %222 = arith.mulf %213, %189 : vector<2x16xf32>
    %223 = arith.mulf %207, %215 : vector<2x16xf32>
    %224 = arith.addf %222, %223 : vector<2x16xf32>
    %225 = math.tanh %224 : vector<2x16xf32>
    %226 = arith.mulf %221, %225 : vector<2x16xf32>
    %227 = vector.broadcast %c2_i32_52 : i32 to vector<2x1xi32>
    %228 = arith.cmpi sgt, %12, %227 : vector<2x1xi32>
    %c2_i32_60 = arith.constant 2 : i32
    %229 = arith.muli %196, %c2_i32_60 : i32
    %230 = arith.index_cast %229 : i32 to index
    %c0_61 = arith.constant 0 : index
    %231 = vector.load %arg8[%230, %c0_61] : memref<16x64xf32, #tpu.memory_space<vmem>>, vector<2x64xf32>
    %cst_62 = arith.constant dense<0.000000e+00> : vector<2x64xf32>
    %232 = tpu.matmul %192, %11, %cst_62 {dimension_numbers = #tpu.dot_dimension_numbers<[1], [0], [0], [1], [0, 0, 1, 1], [], []>} : vector<2x16xf32>, vector<16x64xf32>, vector<2x64xf32> -> vector<2x64xf32>
    %233 = arith.addf %231, %232 : vector<2x64xf32>
    %234 = vector.extract_strided_slice %233 {offsets = [0, 0], sizes = [2, 16], strides = [1, 1]} : vector<2x64xf32> to vector<2x16xf32>
    %235 = arith.negf %234 : vector<2x16xf32>
    %236 = math.exp %235 : vector<2x16xf32>
    %cst_63 = arith.constant 1.000000e+00 : f32
    %237 = vector.broadcast %cst_63 : f32 to vector<2x16xf32>
    %238 = arith.addf %237, %236 : vector<2x16xf32>
    %239 = arith.divf %237, %238 : vector<2x16xf32>
    %240 = vector.extract_strided_slice %233 {offsets = [0, 16], sizes = [2, 16], strides = [1, 1]} : vector<2x64xf32> to vector<2x16xf32>
    %241 = arith.negf %240 : vector<2x16xf32>
    %242 = math.exp %241 : vector<2x16xf32>
    %cst_64 = arith.constant 1.000000e+00 : f32
    %243 = vector.broadcast %cst_64 : f32 to vector<2x16xf32>
    %244 = arith.addf %243, %242 : vector<2x16xf32>
    %245 = arith.divf %243, %244 : vector<2x16xf32>
    %246 = vector.extract_strided_slice %233 {offsets = [0, 32], sizes = [2, 16], strides = [1, 1]} : vector<2x64xf32> to vector<2x16xf32>
    %247 = math.tanh %246 : vector<2x16xf32>
    %248 = vector.extract_strided_slice %233 {offsets = [0, 48], sizes = [2, 16], strides = [1, 1]} : vector<2x64xf32> to vector<2x16xf32>
    %249 = arith.negf %248 : vector<2x16xf32>
    %250 = math.exp %249 : vector<2x16xf32>
    %cst_65 = arith.constant 1.000000e+00 : f32
    %251 = vector.broadcast %cst_65 : f32 to vector<2x16xf32>
    %252 = arith.addf %251, %250 : vector<2x16xf32>
    %253 = arith.divf %251, %252 : vector<2x16xf32>
    %254 = arith.mulf %245, %195 : vector<2x16xf32>
    %255 = arith.mulf %239, %247 : vector<2x16xf32>
    %256 = arith.addf %254, %255 : vector<2x16xf32>
    %257 = math.tanh %256 : vector<2x16xf32>
    %258 = arith.mulf %253, %257 : vector<2x16xf32>
    %259 = vector.broadcast %196 : i32 to vector<2x1xi32>
    %260 = arith.cmpi sgt, %12, %259 : vector<2x1xi32>
    %cst_66 = arith.constant 0.000000e+00 : f32
    %261 = vector.shape_cast %228 : vector<2x1xi1> to vector<2x1xi1>
    %262 = vector.broadcast %261 : vector<2x1xi1> to vector<2x16xi1>
    %263 = vector.broadcast %cst_66 : f32 to vector<2x16xf32>
    %264 = arith.select %262, %226, %263 : vector<2x16xi1>, vector<2x16xf32>
    %c2_i32_67 = arith.constant 2 : i32
    %265 = arith.muli %c2_i32_52, %c2_i32_67 : i32
    %266 = arith.index_cast %265 : i32 to index
    %c0_68 = arith.constant 0 : index
    %267 = vector.load %arg9[%266, %c0_68] : memref<16x16xf32, #tpu.memory_space<vmem>>, vector<2x16xf32>
    tpu.vector_store %arg9[%266, %c0_68], %264 {strides = array<i32>} : memref<16x16xf32, #tpu.memory_space<vmem>>, vector<2x16xf32>,
    %cst_69 = arith.constant 0.000000e+00 : f32
    %268 = vector.shape_cast %260 : vector<2x1xi1> to vector<2x1xi1>
    %269 = vector.broadcast %268 : vector<2x1xi1> to vector<2x16xi1>
    %270 = vector.broadcast %cst_69 : f32 to vector<2x16xf32>
    %271 = arith.select %269, %258, %270 : vector<2x16xi1>, vector<2x16xf32>
    %c2_i32_70 = arith.constant 2 : i32
    %272 = arith.muli %196, %c2_i32_70 : i32
    %273 = arith.index_cast %272 : i32 to index
    %c0_71 = arith.constant 0 : index
    %274 = vector.load %arg10[%273, %c0_71] : memref<16x16xf32, #tpu.memory_space<vmem>>, vector<2x16xf32>
    tpu.vector_store %arg10[%273, %c0_71], %271 {strides = array<i32>} : memref<16x16xf32, #tpu.memory_space<vmem>>, vector<2x16xf32>,
    %275 = vector.shape_cast %228 : vector<2x1xi1> to vector<2x1xi1>
    %276 = vector.broadcast %275 : vector<2x1xi1> to vector<2x16xi1>
    %277 = arith.select %276, %226, %186 : vector<2x16xi1>, vector<2x16xf32>
    %278 = vector.shape_cast %228 : vector<2x1xi1> to vector<2x1xi1>
    %279 = vector.broadcast %278 : vector<2x1xi1> to vector<2x16xi1>
    %280 = arith.select %279, %224, %189 : vector<2x16xi1>, vector<2x16xf32>
    %281 = vector.shape_cast %260 : vector<2x1xi1> to vector<2x1xi1>
    %282 = vector.broadcast %281 : vector<2x1xi1> to vector<2x16xi1>
    %283 = arith.select %282, %258, %192 : vector<2x16xi1>, vector<2x16xf32>
    %284 = vector.shape_cast %260 : vector<2x1xi1> to vector<2x1xi1>
    %285 = vector.broadcast %284 : vector<2x1xi1> to vector<2x16xi1>
    %286 = arith.select %285, %256, %195 : vector<2x16xi1>, vector<2x16xf32>
    %c3_i32 = arith.constant 3 : i32
    %c7_i32_72 = arith.constant 7 : i32
    %287 = arith.subi %c7_i32_72, %c3_i32 : i32
    %c2_i32_73 = arith.constant 2 : i32
    %288 = arith.muli %c3_i32, %c2_i32_73 : i32
    %289 = arith.index_cast %288 : i32 to index
    %c0_74 = arith.constant 0 : index
    %290 = vector.load %arg7[%289, %c0_74] : memref<16x64xf32, #tpu.memory_space<vmem>>, vector<2x64xf32>
    %cst_75 = arith.constant dense<0.000000e+00> : vector<2x64xf32>
    %291 = tpu.matmul %277, %10, %cst_75 {dimension_numbers = #tpu.dot_dimension_numbers<[1], [0], [0], [1], [0, 0, 1, 1], [], []>} : vector<2x16xf32>, vector<16x64xf32>, vector<2x64xf32> -> vector<2x64xf32>
    %292 = arith.addf %290, %291 : vector<2x64xf32>
    %293 = vector.extract_strided_slice %292 {offsets = [0, 0], sizes = [2, 16], strides = [1, 1]} : vector<2x64xf32> to vector<2x16xf32>
    %294 = arith.negf %293 : vector<2x16xf32>
    %295 = math.exp %294 : vector<2x16xf32>
    %cst_76 = arith.constant 1.000000e+00 : f32
    %296 = vector.broadcast %cst_76 : f32 to vector<2x16xf32>
    %297 = arith.addf %296, %295 : vector<2x16xf32>
    %298 = arith.divf %296, %297 : vector<2x16xf32>
    %299 = vector.extract_strided_slice %292 {offsets = [0, 16], sizes = [2, 16], strides = [1, 1]} : vector<2x64xf32> to vector<2x16xf32>
    %300 = arith.negf %299 : vector<2x16xf32>
    %301 = math.exp %300 : vector<2x16xf32>
    %cst_77 = arith.constant 1.000000e+00 : f32
    %302 = vector.broadcast %cst_77 : f32 to vector<2x16xf32>
    %303 = arith.addf %302, %301 : vector<2x16xf32>
    %304 = arith.divf %302, %303 : vector<2x16xf32>
    %305 = vector.extract_strided_slice %292 {offsets = [0, 32], sizes = [2, 16], strides = [1, 1]} : vector<2x64xf32> to vector<2x16xf32>
    %306 = math.tanh %305 : vector<2x16xf32>
    %307 = vector.extract_strided_slice %292 {offsets = [0, 48], sizes = [2, 16], strides = [1, 1]} : vector<2x64xf32> to vector<2x16xf32>
    %308 = arith.negf %307 : vector<2x16xf32>
    %309 = math.exp %308 : vector<2x16xf32>
    %cst_78 = arith.constant 1.000000e+00 : f32
    %310 = vector.broadcast %cst_78 : f32 to vector<2x16xf32>
    %311 = arith.addf %310, %309 : vector<2x16xf32>
    %312 = arith.divf %310, %311 : vector<2x16xf32>
    %313 = arith.mulf %304, %280 : vector<2x16xf32>
    %314 = arith.mulf %298, %306 : vector<2x16xf32>
    %315 = arith.addf %313, %314 : vector<2x16xf32>
    %316 = math.tanh %315 : vector<2x16xf32>
    %317 = arith.mulf %312, %316 : vector<2x16xf32>
    %318 = vector.broadcast %c3_i32 : i32 to vector<2x1xi32>
    %319 = arith.cmpi sgt, %12, %318 : vector<2x1xi32>
    %c2_i32_79 = arith.constant 2 : i32
    %320 = arith.muli %287, %c2_i32_79 : i32
    %321 = arith.index_cast %320 : i32 to index
    %c0_80 = arith.constant 0 : index
    %322 = vector.load %arg8[%321, %c0_80] : memref<16x64xf32, #tpu.memory_space<vmem>>, vector<2x64xf32>
    %cst_81 = arith.constant dense<0.000000e+00> : vector<2x64xf32>
    %323 = tpu.matmul %283, %11, %cst_81 {dimension_numbers = #tpu.dot_dimension_numbers<[1], [0], [0], [1], [0, 0, 1, 1], [], []>} : vector<2x16xf32>, vector<16x64xf32>, vector<2x64xf32> -> vector<2x64xf32>
    %324 = arith.addf %322, %323 : vector<2x64xf32>
    %325 = vector.extract_strided_slice %324 {offsets = [0, 0], sizes = [2, 16], strides = [1, 1]} : vector<2x64xf32> to vector<2x16xf32>
    %326 = arith.negf %325 : vector<2x16xf32>
    %327 = math.exp %326 : vector<2x16xf32>
    %cst_82 = arith.constant 1.000000e+00 : f32
    %328 = vector.broadcast %cst_82 : f32 to vector<2x16xf32>
    %329 = arith.addf %328, %327 : vector<2x16xf32>
    %330 = arith.divf %328, %329 : vector<2x16xf32>
    %331 = vector.extract_strided_slice %324 {offsets = [0, 16], sizes = [2, 16], strides = [1, 1]} : vector<2x64xf32> to vector<2x16xf32>
    %332 = arith.negf %331 : vector<2x16xf32>
    %333 = math.exp %332 : vector<2x16xf32>
    %cst_83 = arith.constant 1.000000e+00 : f32
    %334 = vector.broadcast %cst_83 : f32 to vector<2x16xf32>
    %335 = arith.addf %334, %333 : vector<2x16xf32>
    %336 = arith.divf %334, %335 : vector<2x16xf32>
    %337 = vector.extract_strided_slice %324 {offsets = [0, 32], sizes = [2, 16], strides = [1, 1]} : vector<2x64xf32> to vector<2x16xf32>
    %338 = math.tanh %337 : vector<2x16xf32>
    %339 = vector.extract_strided_slice %324 {offsets = [0, 48], sizes = [2, 16], strides = [1, 1]} : vector<2x64xf32> to vector<2x16xf32>
    %340 = arith.negf %339 : vector<2x16xf32>
    %341 = math.exp %340 : vector<2x16xf32>
    %cst_84 = arith.constant 1.000000e+00 : f32
    %342 = vector.broadcast %cst_84 : f32 to vector<2x16xf32>
    %343 = arith.addf %342, %341 : vector<2x16xf32>
    %344 = arith.divf %342, %343 : vector<2x16xf32>
    %345 = arith.mulf %336, %286 : vector<2x16xf32>
    %346 = arith.mulf %330, %338 : vector<2x16xf32>
    %347 = arith.addf %345, %346 : vector<2x16xf32>
    %348 = math.tanh %347 : vector<2x16xf32>
    %349 = arith.mulf %344, %348 : vector<2x16xf32>
    %350 = vector.broadcast %287 : i32 to vector<2x1xi32>
    %351 = arith.cmpi sgt, %12, %350 : vector<2x1xi32>
    %cst_85 = arith.constant 0.000000e+00 : f32
    %352 = vector.shape_cast %319 : vector<2x1xi1> to vector<2x1xi1>
    %353 = vector.broadcast %352 : vector<2x1xi1> to vector<2x16xi1>
    %354 = vector.broadcast %cst_85 : f32 to vector<2x16xf32>
    %355 = arith.select %353, %317, %354 : vector<2x16xi1>, vector<2x16xf32>
    %c2_i32_86 = arith.constant 2 : i32
    %356 = arith.muli %c3_i32, %c2_i32_86 : i32
    %357 = arith.index_cast %356 : i32 to index
    %c0_87 = arith.constant 0 : index
    %358 = vector.load %arg9[%357, %c0_87] : memref<16x16xf32, #tpu.memory_space<vmem>>, vector<2x16xf32>
    tpu.vector_store %arg9[%357, %c0_87], %355 {strides = array<i32>} : memref<16x16xf32, #tpu.memory_space<vmem>>, vector<2x16xf32>,
    %cst_88 = arith.constant 0.000000e+00 : f32
    %359 = vector.shape_cast %351 : vector<2x1xi1> to vector<2x1xi1>
    %360 = vector.broadcast %359 : vector<2x1xi1> to vector<2x16xi1>
    %361 = vector.broadcast %cst_88 : f32 to vector<2x16xf32>
    %362 = arith.select %360, %349, %361 : vector<2x16xi1>, vector<2x16xf32>
    %c2_i32_89 = arith.constant 2 : i32
    %363 = arith.muli %287, %c2_i32_89 : i32
    %364 = arith.index_cast %363 : i32 to index
    %c0_90 = arith.constant 0 : index
    %365 = vector.load %arg10[%364, %c0_90] : memref<16x16xf32, #tpu.memory_space<vmem>>, vector<2x16xf32>
    tpu.vector_store %arg10[%364, %c0_90], %362 {strides = array<i32>} : memref<16x16xf32, #tpu.memory_space<vmem>>, vector<2x16xf32>,
    %366 = vector.shape_cast %319 : vector<2x1xi1> to vector<2x1xi1>
    %367 = vector.broadcast %366 : vector<2x1xi1> to vector<2x16xi1>
    %368 = arith.select %367, %317, %277 : vector<2x16xi1>, vector<2x16xf32>
    %369 = vector.shape_cast %319 : vector<2x1xi1> to vector<2x1xi1>
    %370 = vector.broadcast %369 : vector<2x1xi1> to vector<2x16xi1>
    %371 = arith.select %370, %315, %280 : vector<2x16xi1>, vector<2x16xf32>
    %372 = vector.shape_cast %351 : vector<2x1xi1> to vector<2x1xi1>
    %373 = vector.broadcast %372 : vector<2x1xi1> to vector<2x16xi1>
    %374 = arith.select %373, %349, %283 : vector<2x16xi1>, vector<2x16xf32>
    %375 = vector.shape_cast %351 : vector<2x1xi1> to vector<2x1xi1>
    %376 = vector.broadcast %375 : vector<2x1xi1> to vector<2x16xi1>
    %377 = arith.select %376, %347, %286 : vector<2x16xi1>, vector<2x16xf32>
    %c4_i32 = arith.constant 4 : i32
    %c7_i32_91 = arith.constant 7 : i32
    %378 = arith.subi %c7_i32_91, %c4_i32 : i32
    %c2_i32_92 = arith.constant 2 : i32
    %379 = arith.muli %c4_i32, %c2_i32_92 : i32
    %380 = arith.index_cast %379 : i32 to index
    %c0_93 = arith.constant 0 : index
    %381 = vector.load %arg7[%380, %c0_93] : memref<16x64xf32, #tpu.memory_space<vmem>>, vector<2x64xf32>
    %cst_94 = arith.constant dense<0.000000e+00> : vector<2x64xf32>
    %382 = tpu.matmul %368, %10, %cst_94 {dimension_numbers = #tpu.dot_dimension_numbers<[1], [0], [0], [1], [0, 0, 1, 1], [], []>} : vector<2x16xf32>, vector<16x64xf32>, vector<2x64xf32> -> vector<2x64xf32>
    %383 = arith.addf %381, %382 : vector<2x64xf32>
    %384 = vector.extract_strided_slice %383 {offsets = [0, 0], sizes = [2, 16], strides = [1, 1]} : vector<2x64xf32> to vector<2x16xf32>
    %385 = arith.negf %384 : vector<2x16xf32>
    %386 = math.exp %385 : vector<2x16xf32>
    %cst_95 = arith.constant 1.000000e+00 : f32
    %387 = vector.broadcast %cst_95 : f32 to vector<2x16xf32>
    %388 = arith.addf %387, %386 : vector<2x16xf32>
    %389 = arith.divf %387, %388 : vector<2x16xf32>
    %390 = vector.extract_strided_slice %383 {offsets = [0, 16], sizes = [2, 16], strides = [1, 1]} : vector<2x64xf32> to vector<2x16xf32>
    %391 = arith.negf %390 : vector<2x16xf32>
    %392 = math.exp %391 : vector<2x16xf32>
    %cst_96 = arith.constant 1.000000e+00 : f32
    %393 = vector.broadcast %cst_96 : f32 to vector<2x16xf32>
    %394 = arith.addf %393, %392 : vector<2x16xf32>
    %395 = arith.divf %393, %394 : vector<2x16xf32>
    %396 = vector.extract_strided_slice %383 {offsets = [0, 32], sizes = [2, 16], strides = [1, 1]} : vector<2x64xf32> to vector<2x16xf32>
    %397 = math.tanh %396 : vector<2x16xf32>
    %398 = vector.extract_strided_slice %383 {offsets = [0, 48], sizes = [2, 16], strides = [1, 1]} : vector<2x64xf32> to vector<2x16xf32>
    %399 = arith.negf %398 : vector<2x16xf32>
    %400 = math.exp %399 : vector<2x16xf32>
    %cst_97 = arith.constant 1.000000e+00 : f32
    %401 = vector.broadcast %cst_97 : f32 to vector<2x16xf32>
    %402 = arith.addf %401, %400 : vector<2x16xf32>
    %403 = arith.divf %401, %402 : vector<2x16xf32>
    %404 = arith.mulf %395, %371 : vector<2x16xf32>
    %405 = arith.mulf %389, %397 : vector<2x16xf32>
    %406 = arith.addf %404, %405 : vector<2x16xf32>
    %407 = math.tanh %406 : vector<2x16xf32>
    %408 = arith.mulf %403, %407 : vector<2x16xf32>
    %409 = vector.broadcast %c4_i32 : i32 to vector<2x1xi32>
    %410 = arith.cmpi sgt, %12, %409 : vector<2x1xi32>
    %c2_i32_98 = arith.constant 2 : i32
    %411 = arith.muli %378, %c2_i32_98 : i32
    %412 = arith.index_cast %411 : i32 to index
    %c0_99 = arith.constant 0 : index
    %413 = vector.load %arg8[%412, %c0_99] : memref<16x64xf32, #tpu.memory_space<vmem>>, vector<2x64xf32>
    %cst_100 = arith.constant dense<0.000000e+00> : vector<2x64xf32>
    %414 = tpu.matmul %374, %11, %cst_100 {dimension_numbers = #tpu.dot_dimension_numbers<[1], [0], [0], [1], [0, 0, 1, 1], [], []>} : vector<2x16xf32>, vector<16x64xf32>, vector<2x64xf32> -> vector<2x64xf32>
    %415 = arith.addf %413, %414 : vector<2x64xf32>
    %416 = vector.extract_strided_slice %415 {offsets = [0, 0], sizes = [2, 16], strides = [1, 1]} : vector<2x64xf32> to vector<2x16xf32>
    %417 = arith.negf %416 : vector<2x16xf32>
    %418 = math.exp %417 : vector<2x16xf32>
    %cst_101 = arith.constant 1.000000e+00 : f32
    %419 = vector.broadcast %cst_101 : f32 to vector<2x16xf32>
    %420 = arith.addf %419, %418 : vector<2x16xf32>
    %421 = arith.divf %419, %420 : vector<2x16xf32>
    %422 = vector.extract_strided_slice %415 {offsets = [0, 16], sizes = [2, 16], strides = [1, 1]} : vector<2x64xf32> to vector<2x16xf32>
    %423 = arith.negf %422 : vector<2x16xf32>
    %424 = math.exp %423 : vector<2x16xf32>
    %cst_102 = arith.constant 1.000000e+00 : f32
    %425 = vector.broadcast %cst_102 : f32 to vector<2x16xf32>
    %426 = arith.addf %425, %424 : vector<2x16xf32>
    %427 = arith.divf %425, %426 : vector<2x16xf32>
    %428 = vector.extract_strided_slice %415 {offsets = [0, 32], sizes = [2, 16], strides = [1, 1]} : vector<2x64xf32> to vector<2x16xf32>
    %429 = math.tanh %428 : vector<2x16xf32>
    %430 = vector.extract_strided_slice %415 {offsets = [0, 48], sizes = [2, 16], strides = [1, 1]} : vector<2x64xf32> to vector<2x16xf32>
    %431 = arith.negf %430 : vector<2x16xf32>
    %432 = math.exp %431 : vector<2x16xf32>
    %cst_103 = arith.constant 1.000000e+00 : f32
    %433 = vector.broadcast %cst_103 : f32 to vector<2x16xf32>
    %434 = arith.addf %433, %432 : vector<2x16xf32>
    %435 = arith.divf %433, %434 : vector<2x16xf32>
    %436 = arith.mulf %427, %377 : vector<2x16xf32>
    %437 = arith.mulf %421, %429 : vector<2x16xf32>
    %438 = arith.addf %436, %437 : vector<2x16xf32>
    %439 = math.tanh %438 : vector<2x16xf32>
    %440 = arith.mulf %435, %439 : vector<2x16xf32>
    %441 = vector.broadcast %378 : i32 to vector<2x1xi32>
    %442 = arith.cmpi sgt, %12, %441 : vector<2x1xi32>
    %cst_104 = arith.constant 0.000000e+00 : f32
    %443 = vector.shape_cast %410 : vector<2x1xi1> to vector<2x1xi1>
    %444 = vector.broadcast %443 : vector<2x1xi1> to vector<2x16xi1>
    %445 = vector.broadcast %cst_104 : f32 to vector<2x16xf32>
    %446 = arith.select %444, %408, %445 : vector<2x16xi1>, vector<2x16xf32>
    %c2_i32_105 = arith.constant 2 : i32
    %447 = arith.muli %c4_i32, %c2_i32_105 : i32
    %448 = arith.index_cast %447 : i32 to index
    %c0_106 = arith.constant 0 : index
    %449 = vector.load %arg9[%448, %c0_106] : memref<16x16xf32, #tpu.memory_space<vmem>>, vector<2x16xf32>
    tpu.vector_store %arg9[%448, %c0_106], %446 {strides = array<i32>} : memref<16x16xf32, #tpu.memory_space<vmem>>, vector<2x16xf32>,
    %cst_107 = arith.constant 0.000000e+00 : f32
    %450 = vector.shape_cast %442 : vector<2x1xi1> to vector<2x1xi1>
    %451 = vector.broadcast %450 : vector<2x1xi1> to vector<2x16xi1>
    %452 = vector.broadcast %cst_107 : f32 to vector<2x16xf32>
    %453 = arith.select %451, %440, %452 : vector<2x16xi1>, vector<2x16xf32>
    %c2_i32_108 = arith.constant 2 : i32
    %454 = arith.muli %378, %c2_i32_108 : i32
    %455 = arith.index_cast %454 : i32 to index
    %c0_109 = arith.constant 0 : index
    %456 = vector.load %arg10[%455, %c0_109] : memref<16x16xf32, #tpu.memory_space<vmem>>, vector<2x16xf32>
    tpu.vector_store %arg10[%455, %c0_109], %453 {strides = array<i32>} : memref<16x16xf32, #tpu.memory_space<vmem>>, vector<2x16xf32>,
    %457 = vector.shape_cast %410 : vector<2x1xi1> to vector<2x1xi1>
    %458 = vector.broadcast %457 : vector<2x1xi1> to vector<2x16xi1>
    %459 = arith.select %458, %408, %368 : vector<2x16xi1>, vector<2x16xf32>
    %460 = vector.shape_cast %410 : vector<2x1xi1> to vector<2x1xi1>
    %461 = vector.broadcast %460 : vector<2x1xi1> to vector<2x16xi1>
    %462 = arith.select %461, %406, %371 : vector<2x16xi1>, vector<2x16xf32>
    %463 = vector.shape_cast %442 : vector<2x1xi1> to vector<2x1xi1>
    %464 = vector.broadcast %463 : vector<2x1xi1> to vector<2x16xi1>
    %465 = arith.select %464, %440, %374 : vector<2x16xi1>, vector<2x16xf32>
    %466 = vector.shape_cast %442 : vector<2x1xi1> to vector<2x1xi1>
    %467 = vector.broadcast %466 : vector<2x1xi1> to vector<2x16xi1>
    %468 = arith.select %467, %438, %377 : vector<2x16xi1>, vector<2x16xf32>
    %c5_i32 = arith.constant 5 : i32
    %c7_i32_110 = arith.constant 7 : i32
    %469 = arith.subi %c7_i32_110, %c5_i32 : i32
    %c2_i32_111 = arith.constant 2 : i32
    %470 = arith.muli %c5_i32, %c2_i32_111 : i32
    %471 = arith.index_cast %470 : i32 to index
    %c0_112 = arith.constant 0 : index
    %472 = vector.load %arg7[%471, %c0_112] : memref<16x64xf32, #tpu.memory_space<vmem>>, vector<2x64xf32>
    %cst_113 = arith.constant dense<0.000000e+00> : vector<2x64xf32>
    %473 = tpu.matmul %459, %10, %cst_113 {dimension_numbers = #tpu.dot_dimension_numbers<[1], [0], [0], [1], [0, 0, 1, 1], [], []>} : vector<2x16xf32>, vector<16x64xf32>, vector<2x64xf32> -> vector<2x64xf32>
    %474 = arith.addf %472, %473 : vector<2x64xf32>
    %475 = vector.extract_strided_slice %474 {offsets = [0, 0], sizes = [2, 16], strides = [1, 1]} : vector<2x64xf32> to vector<2x16xf32>
    %476 = arith.negf %475 : vector<2x16xf32>
    %477 = math.exp %476 : vector<2x16xf32>
    %cst_114 = arith.constant 1.000000e+00 : f32
    %478 = vector.broadcast %cst_114 : f32 to vector<2x16xf32>
    %479 = arith.addf %478, %477 : vector<2x16xf32>
    %480 = arith.divf %478, %479 : vector<2x16xf32>
    %481 = vector.extract_strided_slice %474 {offsets = [0, 16], sizes = [2, 16], strides = [1, 1]} : vector<2x64xf32> to vector<2x16xf32>
    %482 = arith.negf %481 : vector<2x16xf32>
    %483 = math.exp %482 : vector<2x16xf32>
    %cst_115 = arith.constant 1.000000e+00 : f32
    %484 = vector.broadcast %cst_115 : f32 to vector<2x16xf32>
    %485 = arith.addf %484, %483 : vector<2x16xf32>
    %486 = arith.divf %484, %485 : vector<2x16xf32>
    %487 = vector.extract_strided_slice %474 {offsets = [0, 32], sizes = [2, 16], strides = [1, 1]} : vector<2x64xf32> to vector<2x16xf32>
    %488 = math.tanh %487 : vector<2x16xf32>
    %489 = vector.extract_strided_slice %474 {offsets = [0, 48], sizes = [2, 16], strides = [1, 1]} : vector<2x64xf32> to vector<2x16xf32>
    %490 = arith.negf %489 : vector<2x16xf32>
    %491 = math.exp %490 : vector<2x16xf32>
    %cst_116 = arith.constant 1.000000e+00 : f32
    %492 = vector.broadcast %cst_116 : f32 to vector<2x16xf32>
    %493 = arith.addf %492, %491 : vector<2x16xf32>
    %494 = arith.divf %492, %493 : vector<2x16xf32>
    %495 = arith.mulf %486, %462 : vector<2x16xf32>
    %496 = arith.mulf %480, %488 : vector<2x16xf32>
    %497 = arith.addf %495, %496 : vector<2x16xf32>
    %498 = math.tanh %497 : vector<2x16xf32>
    %499 = arith.mulf %494, %498 : vector<2x16xf32>
    %500 = vector.broadcast %c5_i32 : i32 to vector<2x1xi32>
    %501 = arith.cmpi sgt, %12, %500 : vector<2x1xi32>
    %c2_i32_117 = arith.constant 2 : i32
    %502 = arith.muli %469, %c2_i32_117 : i32
    %503 = arith.index_cast %502 : i32 to index
    %c0_118 = arith.constant 0 : index
    %504 = vector.load %arg8[%503, %c0_118] : memref<16x64xf32, #tpu.memory_space<vmem>>, vector<2x64xf32>
    %cst_119 = arith.constant dense<0.000000e+00> : vector<2x64xf32>
    %505 = tpu.matmul %465, %11, %cst_119 {dimension_numbers = #tpu.dot_dimension_numbers<[1], [0], [0], [1], [0, 0, 1, 1], [], []>} : vector<2x16xf32>, vector<16x64xf32>, vector<2x64xf32> -> vector<2x64xf32>
    %506 = arith.addf %504, %505 : vector<2x64xf32>
    %507 = vector.extract_strided_slice %506 {offsets = [0, 0], sizes = [2, 16], strides = [1, 1]} : vector<2x64xf32> to vector<2x16xf32>
    %508 = arith.negf %507 : vector<2x16xf32>
    %509 = math.exp %508 : vector<2x16xf32>
    %cst_120 = arith.constant 1.000000e+00 : f32
    %510 = vector.broadcast %cst_120 : f32 to vector<2x16xf32>
    %511 = arith.addf %510, %509 : vector<2x16xf32>
    %512 = arith.divf %510, %511 : vector<2x16xf32>
    %513 = vector.extract_strided_slice %506 {offsets = [0, 16], sizes = [2, 16], strides = [1, 1]} : vector<2x64xf32> to vector<2x16xf32>
    %514 = arith.negf %513 : vector<2x16xf32>
    %515 = math.exp %514 : vector<2x16xf32>
    %cst_121 = arith.constant 1.000000e+00 : f32
    %516 = vector.broadcast %cst_121 : f32 to vector<2x16xf32>
    %517 = arith.addf %516, %515 : vector<2x16xf32>
    %518 = arith.divf %516, %517 : vector<2x16xf32>
    %519 = vector.extract_strided_slice %506 {offsets = [0, 32], sizes = [2, 16], strides = [1, 1]} : vector<2x64xf32> to vector<2x16xf32>
    %520 = math.tanh %519 : vector<2x16xf32>
    %521 = vector.extract_strided_slice %506 {offsets = [0, 48], sizes = [2, 16], strides = [1, 1]} : vector<2x64xf32> to vector<2x16xf32>
    %522 = arith.negf %521 : vector<2x16xf32>
    %523 = math.exp %522 : vector<2x16xf32>
    %cst_122 = arith.constant 1.000000e+00 : f32
    %524 = vector.broadcast %cst_122 : f32 to vector<2x16xf32>
    %525 = arith.addf %524, %523 : vector<2x16xf32>
    %526 = arith.divf %524, %525 : vector<2x16xf32>
    %527 = arith.mulf %518, %468 : vector<2x16xf32>
    %528 = arith.mulf %512, %520 : vector<2x16xf32>
    %529 = arith.addf %527, %528 : vector<2x16xf32>
    %530 = math.tanh %529 : vector<2x16xf32>
    %531 = arith.mulf %526, %530 : vector<2x16xf32>
    %532 = vector.broadcast %469 : i32 to vector<2x1xi32>
    %533 = arith.cmpi sgt, %12, %532 : vector<2x1xi32>
    %cst_123 = arith.constant 0.000000e+00 : f32
    %534 = vector.shape_cast %501 : vector<2x1xi1> to vector<2x1xi1>
    %535 = vector.broadcast %534 : vector<2x1xi1> to vector<2x16xi1>
    %536 = vector.broadcast %cst_123 : f32 to vector<2x16xf32>
    %537 = arith.select %535, %499, %536 : vector<2x16xi1>, vector<2x16xf32>
    %c2_i32_124 = arith.constant 2 : i32
    %538 = arith.muli %c5_i32, %c2_i32_124 : i32
    %539 = arith.index_cast %538 : i32 to index
    %c0_125 = arith.constant 0 : index
    %540 = vector.load %arg9[%539, %c0_125] : memref<16x16xf32, #tpu.memory_space<vmem>>, vector<2x16xf32>
    tpu.vector_store %arg9[%539, %c0_125], %537 {strides = array<i32>} : memref<16x16xf32, #tpu.memory_space<vmem>>, vector<2x16xf32>,
    %cst_126 = arith.constant 0.000000e+00 : f32
    %541 = vector.shape_cast %533 : vector<2x1xi1> to vector<2x1xi1>
    %542 = vector.broadcast %541 : vector<2x1xi1> to vector<2x16xi1>
    %543 = vector.broadcast %cst_126 : f32 to vector<2x16xf32>
    %544 = arith.select %542, %531, %543 : vector<2x16xi1>, vector<2x16xf32>
    %c2_i32_127 = arith.constant 2 : i32
    %545 = arith.muli %469, %c2_i32_127 : i32
    %546 = arith.index_cast %545 : i32 to index
    %c0_128 = arith.constant 0 : index
    %547 = vector.load %arg10[%546, %c0_128] : memref<16x16xf32, #tpu.memory_space<vmem>>, vector<2x16xf32>
    tpu.vector_store %arg10[%546, %c0_128], %544 {strides = array<i32>} : memref<16x16xf32, #tpu.memory_space<vmem>>, vector<2x16xf32>,
    %548 = vector.shape_cast %501 : vector<2x1xi1> to vector<2x1xi1>
    %549 = vector.broadcast %548 : vector<2x1xi1> to vector<2x16xi1>
    %550 = arith.select %549, %499, %459 : vector<2x16xi1>, vector<2x16xf32>
    %551 = vector.shape_cast %501 : vector<2x1xi1> to vector<2x1xi1>
    %552 = vector.broadcast %551 : vector<2x1xi1> to vector<2x16xi1>
    %553 = arith.select %552, %497, %462 : vector<2x16xi1>, vector<2x16xf32>
    %554 = vector.shape_cast %533 : vector<2x1xi1> to vector<2x1xi1>
    %555 = vector.broadcast %554 : vector<2x1xi1> to vector<2x16xi1>
    %556 = arith.select %555, %531, %465 : vector<2x16xi1>, vector<2x16xf32>
    %557 = vector.shape_cast %533 : vector<2x1xi1> to vector<2x1xi1>
    %558 = vector.broadcast %557 : vector<2x1xi1> to vector<2x16xi1>
    %559 = arith.select %558, %529, %468 : vector<2x16xi1>, vector<2x16xf32>
    %c6_i32 = arith.constant 6 : i32
    %c7_i32_129 = arith.constant 7 : i32
    %560 = arith.subi %c7_i32_129, %c6_i32 : i32
    %c2_i32_130 = arith.constant 2 : i32
    %561 = arith.muli %c6_i32, %c2_i32_130 : i32
    %562 = arith.index_cast %561 : i32 to index
    %c0_131 = arith.constant 0 : index
    %563 = vector.load %arg7[%562, %c0_131] : memref<16x64xf32, #tpu.memory_space<vmem>>, vector<2x64xf32>
    %cst_132 = arith.constant dense<0.000000e+00> : vector<2x64xf32>
    %564 = tpu.matmul %550, %10, %cst_132 {dimension_numbers = #tpu.dot_dimension_numbers<[1], [0], [0], [1], [0, 0, 1, 1], [], []>} : vector<2x16xf32>, vector<16x64xf32>, vector<2x64xf32> -> vector<2x64xf32>
    %565 = arith.addf %563, %564 : vector<2x64xf32>
    %566 = vector.extract_strided_slice %565 {offsets = [0, 0], sizes = [2, 16], strides = [1, 1]} : vector<2x64xf32> to vector<2x16xf32>
    %567 = arith.negf %566 : vector<2x16xf32>
    %568 = math.exp %567 : vector<2x16xf32>
    %cst_133 = arith.constant 1.000000e+00 : f32
    %569 = vector.broadcast %cst_133 : f32 to vector<2x16xf32>
    %570 = arith.addf %569, %568 : vector<2x16xf32>
    %571 = arith.divf %569, %570 : vector<2x16xf32>
    %572 = vector.extract_strided_slice %565 {offsets = [0, 16], sizes = [2, 16], strides = [1, 1]} : vector<2x64xf32> to vector<2x16xf32>
    %573 = arith.negf %572 : vector<2x16xf32>
    %574 = math.exp %573 : vector<2x16xf32>
    %cst_134 = arith.constant 1.000000e+00 : f32
    %575 = vector.broadcast %cst_134 : f32 to vector<2x16xf32>
    %576 = arith.addf %575, %574 : vector<2x16xf32>
    %577 = arith.divf %575, %576 : vector<2x16xf32>
    %578 = vector.extract_strided_slice %565 {offsets = [0, 32], sizes = [2, 16], strides = [1, 1]} : vector<2x64xf32> to vector<2x16xf32>
    %579 = math.tanh %578 : vector<2x16xf32>
    %580 = vector.extract_strided_slice %565 {offsets = [0, 48], sizes = [2, 16], strides = [1, 1]} : vector<2x64xf32> to vector<2x16xf32>
    %581 = arith.negf %580 : vector<2x16xf32>
    %582 = math.exp %581 : vector<2x16xf32>
    %cst_135 = arith.constant 1.000000e+00 : f32
    %583 = vector.broadcast %cst_135 : f32 to vector<2x16xf32>
    %584 = arith.addf %583, %582 : vector<2x16xf32>
    %585 = arith.divf %583, %584 : vector<2x16xf32>
    %586 = arith.mulf %577, %553 : vector<2x16xf32>
    %587 = arith.mulf %571, %579 : vector<2x16xf32>
    %588 = arith.addf %586, %587 : vector<2x16xf32>
    %589 = math.tanh %588 : vector<2x16xf32>
    %590 = arith.mulf %585, %589 : vector<2x16xf32>
    %591 = vector.broadcast %c6_i32 : i32 to vector<2x1xi32>
    %592 = arith.cmpi sgt, %12, %591 : vector<2x1xi32>
    %c2_i32_136 = arith.constant 2 : i32
    %593 = arith.muli %560, %c2_i32_136 : i32
    %594 = arith.index_cast %593 : i32 to index
    %c0_137 = arith.constant 0 : index
    %595 = vector.load %arg8[%594, %c0_137] : memref<16x64xf32, #tpu.memory_space<vmem>>, vector<2x64xf32>
    %cst_138 = arith.constant dense<0.000000e+00> : vector<2x64xf32>
    %596 = tpu.matmul %556, %11, %cst_138 {dimension_numbers = #tpu.dot_dimension_numbers<[1], [0], [0], [1], [0, 0, 1, 1], [], []>} : vector<2x16xf32>, vector<16x64xf32>, vector<2x64xf32> -> vector<2x64xf32>
    %597 = arith.addf %595, %596 : vector<2x64xf32>
    %598 = vector.extract_strided_slice %597 {offsets = [0, 0], sizes = [2, 16], strides = [1, 1]} : vector<2x64xf32> to vector<2x16xf32>
    %599 = arith.negf %598 : vector<2x16xf32>
    %600 = math.exp %599 : vector<2x16xf32>
    %cst_139 = arith.constant 1.000000e+00 : f32
    %601 = vector.broadcast %cst_139 : f32 to vector<2x16xf32>
    %602 = arith.addf %601, %600 : vector<2x16xf32>
    %603 = arith.divf %601, %602 : vector<2x16xf32>
    %604 = vector.extract_strided_slice %597 {offsets = [0, 16], sizes = [2, 16], strides = [1, 1]} : vector<2x64xf32> to vector<2x16xf32>
    %605 = arith.negf %604 : vector<2x16xf32>
    %606 = math.exp %605 : vector<2x16xf32>
    %cst_140 = arith.constant 1.000000e+00 : f32
    %607 = vector.broadcast %cst_140 : f32 to vector<2x16xf32>
    %608 = arith.addf %607, %606 : vector<2x16xf32>
    %609 = arith.divf %607, %608 : vector<2x16xf32>
    %610 = vector.extract_strided_slice %597 {offsets = [0, 32], sizes = [2, 16], strides = [1, 1]} : vector<2x64xf32> to vector<2x16xf32>
    %611 = math.tanh %610 : vector<2x16xf32>
    %612 = vector.extract_strided_slice %597 {offsets = [0, 48], sizes = [2, 16], strides = [1, 1]} : vector<2x64xf32> to vector<2x16xf32>
    %613 = arith.negf %612 : vector<2x16xf32>
    %614 = math.exp %613 : vector<2x16xf32>
    %cst_141 = arith.constant 1.000000e+00 : f32
    %615 = vector.broadcast %cst_141 : f32 to vector<2x16xf32>
    %616 = arith.addf %615, %614 : vector<2x16xf32>
    %617 = arith.divf %615, %616 : vector<2x16xf32>
    %618 = arith.mulf %609, %559 : vector<2x16xf32>
    %619 = arith.mulf %603, %611 : vector<2x16xf32>
    %620 = arith.addf %618, %619 : vector<2x16xf32>
    %621 = math.tanh %620 : vector<2x16xf32>
    %622 = arith.mulf %617, %621 : vector<2x16xf32>
    %623 = vector.broadcast %560 : i32 to vector<2x1xi32>
    %624 = arith.cmpi sgt, %12, %623 : vector<2x1xi32>
    %cst_142 = arith.constant 0.000000e+00 : f32
    %625 = vector.shape_cast %592 : vector<2x1xi1> to vector<2x1xi1>
    %626 = vector.broadcast %625 : vector<2x1xi1> to vector<2x16xi1>
    %627 = vector.broadcast %cst_142 : f32 to vector<2x16xf32>
    %628 = arith.select %626, %590, %627 : vector<2x16xi1>, vector<2x16xf32>
    %c2_i32_143 = arith.constant 2 : i32
    %629 = arith.muli %c6_i32, %c2_i32_143 : i32
    %630 = arith.index_cast %629 : i32 to index
    %c0_144 = arith.constant 0 : index
    %631 = vector.load %arg9[%630, %c0_144] : memref<16x16xf32, #tpu.memory_space<vmem>>, vector<2x16xf32>
    tpu.vector_store %arg9[%630, %c0_144], %628 {strides = array<i32>} : memref<16x16xf32, #tpu.memory_space<vmem>>, vector<2x16xf32>,
    %cst_145 = arith.constant 0.000000e+00 : f32
    %632 = vector.shape_cast %624 : vector<2x1xi1> to vector<2x1xi1>
    %633 = vector.broadcast %632 : vector<2x1xi1> to vector<2x16xi1>
    %634 = vector.broadcast %cst_145 : f32 to vector<2x16xf32>
    %635 = arith.select %633, %622, %634 : vector<2x16xi1>, vector<2x16xf32>
    %c2_i32_146 = arith.constant 2 : i32
    %636 = arith.muli %560, %c2_i32_146 : i32
    %637 = arith.index_cast %636 : i32 to index
    %c0_147 = arith.constant 0 : index
    %638 = vector.load %arg10[%637, %c0_147] : memref<16x16xf32, #tpu.memory_space<vmem>>, vector<2x16xf32>
    tpu.vector_store %arg10[%637, %c0_147], %635 {strides = array<i32>} : memref<16x16xf32, #tpu.memory_space<vmem>>, vector<2x16xf32>,
    %639 = vector.shape_cast %592 : vector<2x1xi1> to vector<2x1xi1>
    %640 = vector.broadcast %639 : vector<2x1xi1> to vector<2x16xi1>
    %641 = arith.select %640, %590, %550 : vector<2x16xi1>, vector<2x16xf32>
    %642 = vector.shape_cast %592 : vector<2x1xi1> to vector<2x1xi1>
    %643 = vector.broadcast %642 : vector<2x1xi1> to vector<2x16xi1>
    %644 = arith.select %643, %588, %553 : vector<2x16xi1>, vector<2x16xf32>
    %645 = vector.shape_cast %624 : vector<2x1xi1> to vector<2x1xi1>
    %646 = vector.broadcast %645 : vector<2x1xi1> to vector<2x16xi1>
    %647 = arith.select %646, %622, %556 : vector<2x16xi1>, vector<2x16xf32>
    %648 = vector.shape_cast %624 : vector<2x1xi1> to vector<2x1xi1>
    %649 = vector.broadcast %648 : vector<2x1xi1> to vector<2x16xi1>
    %650 = arith.select %649, %620, %559 : vector<2x16xi1>, vector<2x16xf32>
    %c7_i32_148 = arith.constant 7 : i32
    %c7_i32_149 = arith.constant 7 : i32
    %651 = arith.subi %c7_i32_149, %c7_i32_148 : i32
    %c2_i32_150 = arith.constant 2 : i32
    %652 = arith.muli %c7_i32_148, %c2_i32_150 : i32
    %653 = arith.index_cast %652 : i32 to index
    %c0_151 = arith.constant 0 : index
    %654 = vector.load %arg7[%653, %c0_151] : memref<16x64xf32, #tpu.memory_space<vmem>>, vector<2x64xf32>
    %cst_152 = arith.constant dense<0.000000e+00> : vector<2x64xf32>
    %655 = tpu.matmul %641, %10, %cst_152 {dimension_numbers = #tpu.dot_dimension_numbers<[1], [0], [0], [1], [0, 0, 1, 1], [], []>} : vector<2x16xf32>, vector<16x64xf32>, vector<2x64xf32> -> vector<2x64xf32>
    %656 = arith.addf %654, %655 : vector<2x64xf32>
    %657 = vector.extract_strided_slice %656 {offsets = [0, 0], sizes = [2, 16], strides = [1, 1]} : vector<2x64xf32> to vector<2x16xf32>
    %658 = arith.negf %657 : vector<2x16xf32>
    %659 = math.exp %658 : vector<2x16xf32>
    %cst_153 = arith.constant 1.000000e+00 : f32
    %660 = vector.broadcast %cst_153 : f32 to vector<2x16xf32>
    %661 = arith.addf %660, %659 : vector<2x16xf32>
    %662 = arith.divf %660, %661 : vector<2x16xf32>
    %663 = vector.extract_strided_slice %656 {offsets = [0, 16], sizes = [2, 16], strides = [1, 1]} : vector<2x64xf32> to vector<2x16xf32>
    %664 = arith.negf %663 : vector<2x16xf32>
    %665 = math.exp %664 : vector<2x16xf32>
    %cst_154 = arith.constant 1.000000e+00 : f32
    %666 = vector.broadcast %cst_154 : f32 to vector<2x16xf32>
    %667 = arith.addf %666, %665 : vector<2x16xf32>
    %668 = arith.divf %666, %667 : vector<2x16xf32>
    %669 = vector.extract_strided_slice %656 {offsets = [0, 32], sizes = [2, 16], strides = [1, 1]} : vector<2x64xf32> to vector<2x16xf32>
    %670 = math.tanh %669 : vector<2x16xf32>
    %671 = vector.extract_strided_slice %656 {offsets = [0, 48], sizes = [2, 16], strides = [1, 1]} : vector<2x64xf32> to vector<2x16xf32>
    %672 = arith.negf %671 : vector<2x16xf32>
    %673 = math.exp %672 : vector<2x16xf32>
    %cst_155 = arith.constant 1.000000e+00 : f32
    %674 = vector.broadcast %cst_155 : f32 to vector<2x16xf32>
    %675 = arith.addf %674, %673 : vector<2x16xf32>
    %676 = arith.divf %674, %675 : vector<2x16xf32>
    %677 = arith.mulf %668, %644 : vector<2x16xf32>
    %678 = arith.mulf %662, %670 : vector<2x16xf32>
    %679 = arith.addf %677, %678 : vector<2x16xf32>
    %680 = math.tanh %679 : vector<2x16xf32>
    %681 = arith.mulf %676, %680 : vector<2x16xf32>
    %682 = vector.broadcast %c7_i32_148 : i32 to vector<2x1xi32>
    %683 = arith.cmpi sgt, %12, %682 : vector<2x1xi32>
    %c2_i32_156 = arith.constant 2 : i32
    %684 = arith.muli %651, %c2_i32_156 : i32
    %685 = arith.index_cast %684 : i32 to index
    %c0_157 = arith.constant 0 : index
    %686 = vector.load %arg8[%685, %c0_157] : memref<16x64xf32, #tpu.memory_space<vmem>>, vector<2x64xf32>
    %cst_158 = arith.constant dense<0.000000e+00> : vector<2x64xf32>
    %687 = tpu.matmul %647, %11, %cst_158 {dimension_numbers = #tpu.dot_dimension_numbers<[1], [0], [0], [1], [0, 0, 1, 1], [], []>} : vector<2x16xf32>, vector<16x64xf32>, vector<2x64xf32> -> vector<2x64xf32>
    %688 = arith.addf %686, %687 : vector<2x64xf32>
    %689 = vector.extract_strided_slice %688 {offsets = [0, 0], sizes = [2, 16], strides = [1, 1]} : vector<2x64xf32> to vector<2x16xf32>
    %690 = arith.negf %689 : vector<2x16xf32>
    %691 = math.exp %690 : vector<2x16xf32>
    %cst_159 = arith.constant 1.000000e+00 : f32
    %692 = vector.broadcast %cst_159 : f32 to vector<2x16xf32>
    %693 = arith.addf %692, %691 : vector<2x16xf32>
    %694 = arith.divf %692, %693 : vector<2x16xf32>
    %695 = vector.extract_strided_slice %688 {offsets = [0, 16], sizes = [2, 16], strides = [1, 1]} : vector<2x64xf32> to vector<2x16xf32>
    %696 = arith.negf %695 : vector<2x16xf32>
    %697 = math.exp %696 : vector<2x16xf32>
    %cst_160 = arith.constant 1.000000e+00 : f32
    %698 = vector.broadcast %cst_160 : f32 to vector<2x16xf32>
    %699 = arith.addf %698, %697 : vector<2x16xf32>
    %700 = arith.divf %698, %699 : vector<2x16xf32>
    %701 = vector.extract_strided_slice %688 {offsets = [0, 32], sizes = [2, 16], strides = [1, 1]} : vector<2x64xf32> to vector<2x16xf32>
    %702 = math.tanh %701 : vector<2x16xf32>
    %703 = vector.extract_strided_slice %688 {offsets = [0, 48], sizes = [2, 16], strides = [1, 1]} : vector<2x64xf32> to vector<2x16xf32>
    %704 = arith.negf %703 : vector<2x16xf32>
    %705 = math.exp %704 : vector<2x16xf32>
    %cst_161 = arith.constant 1.000000e+00 : f32
    %706 = vector.broadcast %cst_161 : f32 to vector<2x16xf32>
    %707 = arith.addf %706, %705 : vector<2x16xf32>
    %708 = arith.divf %706, %707 : vector<2x16xf32>
    %709 = arith.mulf %700, %650 : vector<2x16xf32>
    %710 = arith.mulf %694, %702 : vector<2x16xf32>
    %711 = arith.addf %709, %710 : vector<2x16xf32>
    %712 = math.tanh %711 : vector<2x16xf32>
    %713 = arith.mulf %708, %712 : vector<2x16xf32>
    %714 = vector.broadcast %651 : i32 to vector<2x1xi32>
    %715 = arith.cmpi sgt, %12, %714 : vector<2x1xi32>
    %cst_162 = arith.constant 0.000000e+00 : f32
    %716 = vector.shape_cast %683 : vector<2x1xi1> to vector<2x1xi1>
    %717 = vector.broadcast %716 : vector<2x1xi1> to vector<2x16xi1>
    %718 = vector.broadcast %cst_162 : f32 to vector<2x16xf32>
    %719 = arith.select %717, %681, %718 : vector<2x16xi1>, vector<2x16xf32>
    %c2_i32_163 = arith.constant 2 : i32
    %720 = arith.muli %c7_i32_148, %c2_i32_163 : i32
    %721 = arith.index_cast %720 : i32 to index
    %c0_164 = arith.constant 0 : index
    %722 = vector.load %arg9[%721, %c0_164] : memref<16x16xf32, #tpu.memory_space<vmem>>, vector<2x16xf32>
    tpu.vector_store %arg9[%721, %c0_164], %719 {strides = array<i32>} : memref<16x16xf32, #tpu.memory_space<vmem>>, vector<2x16xf32>,
    %cst_165 = arith.constant 0.000000e+00 : f32
    %723 = vector.shape_cast %715 : vector<2x1xi1> to vector<2x1xi1>
    %724 = vector.broadcast %723 : vector<2x1xi1> to vector<2x16xi1>
    %725 = vector.broadcast %cst_165 : f32 to vector<2x16xf32>
    %726 = arith.select %724, %713, %725 : vector<2x16xi1>, vector<2x16xf32>
    %c2_i32_166 = arith.constant 2 : i32
    %727 = arith.muli %651, %c2_i32_166 : i32
    %728 = arith.index_cast %727 : i32 to index
    %c0_167 = arith.constant 0 : index
    %729 = vector.load %arg10[%728, %c0_167] : memref<16x16xf32, #tpu.memory_space<vmem>>, vector<2x16xf32>
    tpu.vector_store %arg10[%728, %c0_167], %726 {strides = array<i32>} : memref<16x16xf32, #tpu.memory_space<vmem>>, vector<2x16xf32>,
    %730 = vector.shape_cast %683 : vector<2x1xi1> to vector<2x1xi1>
    %731 = vector.broadcast %730 : vector<2x1xi1> to vector<2x16xi1>
    %732 = arith.select %731, %681, %641 : vector<2x16xi1>, vector<2x16xf32>
    %733 = vector.shape_cast %683 : vector<2x1xi1> to vector<2x1xi1>
    %734 = vector.broadcast %733 : vector<2x1xi1> to vector<2x16xi1>
    %735 = arith.select %734, %679, %644 : vector<2x16xi1>, vector<2x16xf32>
    %736 = vector.shape_cast %715 : vector<2x1xi1> to vector<2x1xi1>
    %737 = vector.broadcast %736 : vector<2x1xi1> to vector<2x16xi1>
    %738 = arith.select %737, %713, %647 : vector<2x16xi1>, vector<2x16xf32>
    %739 = vector.shape_cast %715 : vector<2x1xi1> to vector<2x1xi1>
    %740 = vector.broadcast %739 : vector<2x1xi1> to vector<2x16xi1>
    %741 = arith.select %740, %711, %650 : vector<2x16xi1>, vector<2x16xf32>
    %c8_i32 = arith.constant 8 : i32
    %c0_168 = arith.constant 0 : index
    %c0_169 = arith.constant 0 : index
    %742 = vector.load %arg9[%c0_168, %c0_169] : memref<16x16xf32, #tpu.memory_space<vmem>>, vector<16x16xf32>
    %c0_170 = arith.constant 0 : index
    %c0_171 = arith.constant 0 : index
    %743 = vector.load %arg6[%c0_170, %c0_171] : memref<16x32xf32, #tpu.memory_space<vmem>>, vector<16x16xf32>
    tpu.vector_store %arg6[%c0_170, %c0_171], %742 {strides = array<i32>} : memref<16x32xf32, #tpu.memory_space<vmem>>, vector<16x16xf32>,
    %c0_172 = arith.constant 0 : index
    %c0_173 = arith.constant 0 : index
    %744 = vector.load %arg10[%c0_172, %c0_173] : memref<16x16xf32, #tpu.memory_space<vmem>>, vector<16x16xf32>
    %c0_174 = arith.constant 0 : index
    %c16 = arith.constant 16 : index
    %745 = vector.load %arg6[%c0_174, %c16] : memref<16x32xf32, #tpu.memory_space<vmem>>, vector<16x16xf32>
    tpu.vector_store %arg6[%c0_174, %c16], %744 {strides = array<i32>} : memref<16x32xf32, #tpu.memory_space<vmem>>, vector<16x16xf32>,
    return
  }
}

module attributes {stable_mosaic.version = 11 : i64} {
  func.func @_bilstm_layer_kernel(%arg0: memref<16x32xf32, #tpu.memory_space<vmem>>, %arg1: memref<32x128xf32, #tpu.memory_space<vmem>>, %arg2: memref<16x64xf32, #tpu.memory_space<vmem>>, %arg3: memref<16x64xf32, #tpu.memory_space<vmem>>, %arg4: memref<1x128xf32, #tpu.memory_space<vmem>>, %arg5: memref<2x1xi32, #tpu.memory_space<vmem>>, %arg6: memref<2x32xf32, #tpu.memory_space<vmem>>, %arg7: memref<16x64xf32, #tpu.memory_space<vmem>>, %arg8: memref<16x64xf32, #tpu.memory_space<vmem>>) attributes {dimension_semantics = [], scalar_prefetch = 0 : i64, scratch_operands = 2 : i64, tpu.core_type = #tpu.core_type<tc>} {
    %c0 = arith.constant 0 : index
    %c0_0 = arith.constant 0 : index
    %0 = vector.load %arg0[%c0, %c0_0] : memref<16x32xf32, #tpu.memory_space<vmem>>, vector<16x32xf32>
    %c0_1 = arith.constant 0 : index
    %c0_2 = arith.constant 0 : index
    %1 = vector.load %arg1[%c0_1, %c0_2] : memref<32x128xf32, #tpu.memory_space<vmem>>, vector<32x128xf32>
    %cst = arith.constant dense<0.000000e+00> : vector<16x128xf32>
    %2 = tpu.matmul %0, %1, %cst {dimension_numbers = #tpu.dot_dimension_numbers<[1], [0], [0], [1], [0, 0, 1, 1], [], []>} : vector<16x32xf32>, vector<32x128xf32>, vector<16x128xf32> -> vector<16x128xf32>
    %c0_3 = arith.constant 0 : index
    %c0_4 = arith.constant 0 : index
    %3 = vector.load %arg4[%c0_3, %c0_4] : memref<1x128xf32, #tpu.memory_space<vmem>>, vector<1x128xf32>
    %4 = vector.broadcast %3 : vector<1x128xf32> to vector<16x128xf32>
    %5 = arith.addf %2, %4 : vector<16x128xf32>
    %6 = vector.extract_strided_slice %5 {offsets = [0, 0], sizes = [16, 64], strides = [1, 1]} : vector<16x128xf32> to vector<16x64xf32>
    %c0_5 = arith.constant 0 : index
    %c0_6 = arith.constant 0 : index
    %7 = vector.load %arg7[%c0_5, %c0_6] : memref<16x64xf32, #tpu.memory_space<vmem>>, vector<16x64xf32>
    tpu.vector_store %arg7[%c0_5, %c0_6], %6 {strides = array<i32>} : memref<16x64xf32, #tpu.memory_space<vmem>>, vector<16x64xf32>,
    %8 = vector.extract_strided_slice %5 {offsets = [0, 64], sizes = [16, 64], strides = [1, 1]} : vector<16x128xf32> to vector<16x64xf32>
    %c0_7 = arith.constant 0 : index
    %c0_8 = arith.constant 0 : index
    %9 = vector.load %arg8[%c0_7, %c0_8] : memref<16x64xf32, #tpu.memory_space<vmem>>, vector<16x64xf32>
    tpu.vector_store %arg8[%c0_7, %c0_8], %8 {strides = array<i32>} : memref<16x64xf32, #tpu.memory_space<vmem>>, vector<16x64xf32>,
    %c0_9 = arith.constant 0 : index
    %c0_10 = arith.constant 0 : index
    %10 = vector.load %arg2[%c0_9, %c0_10] : memref<16x64xf32, #tpu.memory_space<vmem>>, vector<16x64xf32>
    %c0_11 = arith.constant 0 : index
    %c0_12 = arith.constant 0 : index
    %11 = vector.load %arg3[%c0_11, %c0_12] : memref<16x64xf32, #tpu.memory_space<vmem>>, vector<16x64xf32>
    %c0_13 = arith.constant 0 : index
    %c0_14 = arith.constant 0 : index
    %12 = vector.load %arg5[%c0_13, %c0_14] : memref<2x1xi32, #tpu.memory_space<vmem>>, vector<2x1xi32>
    %cst_15 = arith.constant 0.000000e+00 : f32
    %13 = vector.broadcast %cst_15 : f32 to vector<2x16xf32>
    %cst_16 = arith.constant 0xFF800000 : f32
    %14 = vector.broadcast %cst_16 : f32 to vector<2x16xf32>
    %c0_i32 = arith.constant 0 : i32
    %c7_i32 = arith.constant 7 : i32
    %15 = arith.subi %c7_i32, %c0_i32 : i32
    %c2_i32 = arith.constant 2 : i32
    %16 = arith.muli %c0_i32, %c2_i32 : i32
    %17 = arith.index_cast %16 : i32 to index
    %c0_17 = arith.constant 0 : index
    %18 = vector.load %arg7[%17, %c0_17] : memref<16x64xf32, #tpu.memory_space<vmem>>, vector<2x64xf32>
    %cst_18 = arith.constant dense<0.000000e+00> : vector<2x64xf32>
    %19 = tpu.matmul %13, %10, %cst_18 {dimension_numbers = #tpu.dot_dimension_numbers<[1], [0], [0], [1], [0, 0, 1, 1], [], []>} : vector<2x16xf32>, vector<16x64xf32>, vector<2x64xf32> -> vector<2x64xf32>
    %20 = arith.addf %18, %19 : vector<2x64xf32>
    %21 = vector.extract_strided_slice %20 {offsets = [0, 0], sizes = [2, 16], strides = [1, 1]} : vector<2x64xf32> to vector<2x16xf32>
    %22 = arith.negf %21 : vector<2x16xf32>
    %23 = math.exp %22 : vector<2x16xf32>
    %cst_19 = arith.constant 1.000000e+00 : f32
    %24 = vector.broadcast %cst_19 : f32 to vector<2x16xf32>
    %25 = arith.addf %24, %23 : vector<2x16xf32>
    %26 = arith.divf %24, %25 : vector<2x16xf32>
    %27 = vector.extract_strided_slice %20 {offsets = [0, 16], sizes = [2, 16], strides = [1, 1]} : vector<2x64xf32> to vector<2x16xf32>
    %28 = arith.negf %27 : vector<2x16xf32>
    %29 = math.exp %28 : vector<2x16xf32>
    %cst_20 = arith.constant 1.000000e+00 : f32
    %30 = vector.broadcast %cst_20 : f32 to vector<2x16xf32>
    %31 = arith.addf %30, %29 : vector<2x16xf32>
    %32 = arith.divf %30, %31 : vector<2x16xf32>
    %33 = vector.extract_strided_slice %20 {offsets = [0, 32], sizes = [2, 16], strides = [1, 1]} : vector<2x64xf32> to vector<2x16xf32>
    %34 = math.tanh %33 : vector<2x16xf32>
    %35 = vector.extract_strided_slice %20 {offsets = [0, 48], sizes = [2, 16], strides = [1, 1]} : vector<2x64xf32> to vector<2x16xf32>
    %36 = arith.negf %35 : vector<2x16xf32>
    %37 = math.exp %36 : vector<2x16xf32>
    %cst_21 = arith.constant 1.000000e+00 : f32
    %38 = vector.broadcast %cst_21 : f32 to vector<2x16xf32>
    %39 = arith.addf %38, %37 : vector<2x16xf32>
    %40 = arith.divf %38, %39 : vector<2x16xf32>
    %41 = arith.mulf %32, %13 : vector<2x16xf32>
    %42 = arith.mulf %26, %34 : vector<2x16xf32>
    %43 = arith.addf %41, %42 : vector<2x16xf32>
    %44 = math.tanh %43 : vector<2x16xf32>
    %45 = arith.mulf %40, %44 : vector<2x16xf32>
    %46 = vector.broadcast %c0_i32 : i32 to vector<2x1xi32>
    %47 = arith.cmpi sgt, %12, %46 : vector<2x1xi32>
    %c2_i32_22 = arith.constant 2 : i32
    %48 = arith.muli %15, %c2_i32_22 : i32
    %49 = arith.index_cast %48 : i32 to index
    %c0_23 = arith.constant 0 : index
    %50 = vector.load %arg8[%49, %c0_23] : memref<16x64xf32, #tpu.memory_space<vmem>>, vector<2x64xf32>
    %cst_24 = arith.constant dense<0.000000e+00> : vector<2x64xf32>
    %51 = tpu.matmul %13, %11, %cst_24 {dimension_numbers = #tpu.dot_dimension_numbers<[1], [0], [0], [1], [0, 0, 1, 1], [], []>} : vector<2x16xf32>, vector<16x64xf32>, vector<2x64xf32> -> vector<2x64xf32>
    %52 = arith.addf %50, %51 : vector<2x64xf32>
    %53 = vector.extract_strided_slice %52 {offsets = [0, 0], sizes = [2, 16], strides = [1, 1]} : vector<2x64xf32> to vector<2x16xf32>
    %54 = arith.negf %53 : vector<2x16xf32>
    %55 = math.exp %54 : vector<2x16xf32>
    %cst_25 = arith.constant 1.000000e+00 : f32
    %56 = vector.broadcast %cst_25 : f32 to vector<2x16xf32>
    %57 = arith.addf %56, %55 : vector<2x16xf32>
    %58 = arith.divf %56, %57 : vector<2x16xf32>
    %59 = vector.extract_strided_slice %52 {offsets = [0, 16], sizes = [2, 16], strides = [1, 1]} : vector<2x64xf32> to vector<2x16xf32>
    %60 = arith.negf %59 : vector<2x16xf32>
    %61 = math.exp %60 : vector<2x16xf32>
    %cst_26 = arith.constant 1.000000e+00 : f32
    %62 = vector.broadcast %cst_26 : f32 to vector<2x16xf32>
    %63 = arith.addf %62, %61 : vector<2x16xf32>
    %64 = arith.divf %62, %63 : vector<2x16xf32>
    %65 = vector.extract_strided_slice %52 {offsets = [0, 32], sizes = [2, 16], strides = [1, 1]} : vector<2x64xf32> to vector<2x16xf32>
    %66 = math.tanh %65 : vector<2x16xf32>
    %67 = vector.extract_strided_slice %52 {offsets = [0, 48], sizes = [2, 16], strides = [1, 1]} : vector<2x64xf32> to vector<2x16xf32>
    %68 = arith.negf %67 : vector<2x16xf32>
    %69 = math.exp %68 : vector<2x16xf32>
    %cst_27 = arith.constant 1.000000e+00 : f32
    %70 = vector.broadcast %cst_27 : f32 to vector<2x16xf32>
    %71 = arith.addf %70, %69 : vector<2x16xf32>
    %72 = arith.divf %70, %71 : vector<2x16xf32>
    %73 = arith.mulf %64, %13 : vector<2x16xf32>
    %74 = arith.mulf %58, %66 : vector<2x16xf32>
    %75 = arith.addf %73, %74 : vector<2x16xf32>
    %76 = math.tanh %75 : vector<2x16xf32>
    %77 = arith.mulf %72, %76 : vector<2x16xf32>
    %78 = vector.broadcast %15 : i32 to vector<2x1xi32>
    %79 = arith.cmpi sgt, %12, %78 : vector<2x1xi32>
    %80 = arith.maximumf %14, %45 : vector<2x16xf32>
    %81 = vector.shape_cast %47 : vector<2x1xi1> to vector<2x1xi1>
    %82 = vector.broadcast %81 : vector<2x1xi1> to vector<2x16xi1>
    %83 = arith.select %82, %80, %14 : vector<2x16xi1>, vector<2x16xf32>
    %84 = arith.maximumf %14, %77 : vector<2x16xf32>
    %85 = vector.shape_cast %79 : vector<2x1xi1> to vector<2x1xi1>
    %86 = vector.broadcast %85 : vector<2x1xi1> to vector<2x16xi1>
    %87 = arith.select %86, %84, %14 : vector<2x16xi1>, vector<2x16xf32>
    %88 = vector.shape_cast %47 : vector<2x1xi1> to vector<2x1xi1>
    %89 = vector.broadcast %88 : vector<2x1xi1> to vector<2x16xi1>
    %90 = arith.select %89, %45, %13 : vector<2x16xi1>, vector<2x16xf32>
    %91 = vector.shape_cast %47 : vector<2x1xi1> to vector<2x1xi1>
    %92 = vector.broadcast %91 : vector<2x1xi1> to vector<2x16xi1>
    %93 = arith.select %92, %43, %13 : vector<2x16xi1>, vector<2x16xf32>
    %94 = vector.shape_cast %79 : vector<2x1xi1> to vector<2x1xi1>
    %95 = vector.broadcast %94 : vector<2x1xi1> to vector<2x16xi1>
    %96 = arith.select %95, %77, %13 : vector<2x16xi1>, vector<2x16xf32>
    %97 = vector.shape_cast %79 : vector<2x1xi1> to vector<2x1xi1>
    %98 = vector.broadcast %97 : vector<2x1xi1> to vector<2x16xi1>
    %99 = arith.select %98, %75, %13 : vector<2x16xi1>, vector<2x16xf32>
    %c1_i32 = arith.constant 1 : i32
    %c7_i32_28 = arith.constant 7 : i32
    %100 = arith.subi %c7_i32_28, %c1_i32 : i32
    %c2_i32_29 = arith.constant 2 : i32
    %101 = arith.muli %c1_i32, %c2_i32_29 : i32
    %102 = arith.index_cast %101 : i32 to index
    %c0_30 = arith.constant 0 : index
    %103 = vector.load %arg7[%102, %c0_30] : memref<16x64xf32, #tpu.memory_space<vmem>>, vector<2x64xf32>
    %cst_31 = arith.constant dense<0.000000e+00> : vector<2x64xf32>
    %104 = tpu.matmul %90, %10, %cst_31 {dimension_numbers = #tpu.dot_dimension_numbers<[1], [0], [0], [1], [0, 0, 1, 1], [], []>} : vector<2x16xf32>, vector<16x64xf32>, vector<2x64xf32> -> vector<2x64xf32>
    %105 = arith.addf %103, %104 : vector<2x64xf32>
    %106 = vector.extract_strided_slice %105 {offsets = [0, 0], sizes = [2, 16], strides = [1, 1]} : vector<2x64xf32> to vector<2x16xf32>
    %107 = arith.negf %106 : vector<2x16xf32>
    %108 = math.exp %107 : vector<2x16xf32>
    %cst_32 = arith.constant 1.000000e+00 : f32
    %109 = vector.broadcast %cst_32 : f32 to vector<2x16xf32>
    %110 = arith.addf %109, %108 : vector<2x16xf32>
    %111 = arith.divf %109, %110 : vector<2x16xf32>
    %112 = vector.extract_strided_slice %105 {offsets = [0, 16], sizes = [2, 16], strides = [1, 1]} : vector<2x64xf32> to vector<2x16xf32>
    %113 = arith.negf %112 : vector<2x16xf32>
    %114 = math.exp %113 : vector<2x16xf32>
    %cst_33 = arith.constant 1.000000e+00 : f32
    %115 = vector.broadcast %cst_33 : f32 to vector<2x16xf32>
    %116 = arith.addf %115, %114 : vector<2x16xf32>
    %117 = arith.divf %115, %116 : vector<2x16xf32>
    %118 = vector.extract_strided_slice %105 {offsets = [0, 32], sizes = [2, 16], strides = [1, 1]} : vector<2x64xf32> to vector<2x16xf32>
    %119 = math.tanh %118 : vector<2x16xf32>
    %120 = vector.extract_strided_slice %105 {offsets = [0, 48], sizes = [2, 16], strides = [1, 1]} : vector<2x64xf32> to vector<2x16xf32>
    %121 = arith.negf %120 : vector<2x16xf32>
    %122 = math.exp %121 : vector<2x16xf32>
    %cst_34 = arith.constant 1.000000e+00 : f32
    %123 = vector.broadcast %cst_34 : f32 to vector<2x16xf32>
    %124 = arith.addf %123, %122 : vector<2x16xf32>
    %125 = arith.divf %123, %124 : vector<2x16xf32>
    %126 = arith.mulf %117, %93 : vector<2x16xf32>
    %127 = arith.mulf %111, %119 : vector<2x16xf32>
    %128 = arith.addf %126, %127 : vector<2x16xf32>
    %129 = math.tanh %128 : vector<2x16xf32>
    %130 = arith.mulf %125, %129 : vector<2x16xf32>
    %131 = vector.broadcast %c1_i32 : i32 to vector<2x1xi32>
    %132 = arith.cmpi sgt, %12, %131 : vector<2x1xi32>
    %c2_i32_35 = arith.constant 2 : i32
    %133 = arith.muli %100, %c2_i32_35 : i32
    %134 = arith.index_cast %133 : i32 to index
    %c0_36 = arith.constant 0 : index
    %135 = vector.load %arg8[%134, %c0_36] : memref<16x64xf32, #tpu.memory_space<vmem>>, vector<2x64xf32>
    %cst_37 = arith.constant dense<0.000000e+00> : vector<2x64xf32>
    %136 = tpu.matmul %96, %11, %cst_37 {dimension_numbers = #tpu.dot_dimension_numbers<[1], [0], [0], [1], [0, 0, 1, 1], [], []>} : vector<2x16xf32>, vector<16x64xf32>, vector<2x64xf32> -> vector<2x64xf32>
    %137 = arith.addf %135, %136 : vector<2x64xf32>
    %138 = vector.extract_strided_slice %137 {offsets = [0, 0], sizes = [2, 16], strides = [1, 1]} : vector<2x64xf32> to vector<2x16xf32>
    %139 = arith.negf %138 : vector<2x16xf32>
    %140 = math.exp %139 : vector<2x16xf32>
    %cst_38 = arith.constant 1.000000e+00 : f32
    %141 = vector.broadcast %cst_38 : f32 to vector<2x16xf32>
    %142 = arith.addf %141, %140 : vector<2x16xf32>
    %143 = arith.divf %141, %142 : vector<2x16xf32>
    %144 = vector.extract_strided_slice %137 {offsets = [0, 16], sizes = [2, 16], strides = [1, 1]} : vector<2x64xf32> to vector<2x16xf32>
    %145 = arith.negf %144 : vector<2x16xf32>
    %146 = math.exp %145 : vector<2x16xf32>
    %cst_39 = arith.constant 1.000000e+00 : f32
    %147 = vector.broadcast %cst_39 : f32 to vector<2x16xf32>
    %148 = arith.addf %147, %146 : vector<2x16xf32>
    %149 = arith.divf %147, %148 : vector<2x16xf32>
    %150 = vector.extract_strided_slice %137 {offsets = [0, 32], sizes = [2, 16], strides = [1, 1]} : vector<2x64xf32> to vector<2x16xf32>
    %151 = math.tanh %150 : vector<2x16xf32>
    %152 = vector.extract_strided_slice %137 {offsets = [0, 48], sizes = [2, 16], strides = [1, 1]} : vector<2x64xf32> to vector<2x16xf32>
    %153 = arith.negf %152 : vector<2x16xf32>
    %154 = math.exp %153 : vector<2x16xf32>
    %cst_40 = arith.constant 1.000000e+00 : f32
    %155 = vector.broadcast %cst_40 : f32 to vector<2x16xf32>
    %156 = arith.addf %155, %154 : vector<2x16xf32>
    %157 = arith.divf %155, %156 : vector<2x16xf32>
    %158 = arith.mulf %149, %99 : vector<2x16xf32>
    %159 = arith.mulf %143, %151 : vector<2x16xf32>
    %160 = arith.addf %158, %159 : vector<2x16xf32>
    %161 = math.tanh %160 : vector<2x16xf32>
    %162 = arith.mulf %157, %161 : vector<2x16xf32>
    %163 = vector.broadcast %100 : i32 to vector<2x1xi32>
    %164 = arith.cmpi sgt, %12, %163 : vector<2x1xi32>
    %165 = arith.maximumf %83, %130 : vector<2x16xf32>
    %166 = vector.shape_cast %132 : vector<2x1xi1> to vector<2x1xi1>
    %167 = vector.broadcast %166 : vector<2x1xi1> to vector<2x16xi1>
    %168 = arith.select %167, %165, %83 : vector<2x16xi1>, vector<2x16xf32>
    %169 = arith.maximumf %87, %162 : vector<2x16xf32>
    %170 = vector.shape_cast %164 : vector<2x1xi1> to vector<2x1xi1>
    %171 = vector.broadcast %170 : vector<2x1xi1> to vector<2x16xi1>
    %172 = arith.select %171, %169, %87 : vector<2x16xi1>, vector<2x16xf32>
    %173 = vector.shape_cast %132 : vector<2x1xi1> to vector<2x1xi1>
    %174 = vector.broadcast %173 : vector<2x1xi1> to vector<2x16xi1>
    %175 = arith.select %174, %130, %90 : vector<2x16xi1>, vector<2x16xf32>
    %176 = vector.shape_cast %132 : vector<2x1xi1> to vector<2x1xi1>
    %177 = vector.broadcast %176 : vector<2x1xi1> to vector<2x16xi1>
    %178 = arith.select %177, %128, %93 : vector<2x16xi1>, vector<2x16xf32>
    %179 = vector.shape_cast %164 : vector<2x1xi1> to vector<2x1xi1>
    %180 = vector.broadcast %179 : vector<2x1xi1> to vector<2x16xi1>
    %181 = arith.select %180, %162, %96 : vector<2x16xi1>, vector<2x16xf32>
    %182 = vector.shape_cast %164 : vector<2x1xi1> to vector<2x1xi1>
    %183 = vector.broadcast %182 : vector<2x1xi1> to vector<2x16xi1>
    %184 = arith.select %183, %160, %99 : vector<2x16xi1>, vector<2x16xf32>
    %c2_i32_41 = arith.constant 2 : i32
    %c7_i32_42 = arith.constant 7 : i32
    %185 = arith.subi %c7_i32_42, %c2_i32_41 : i32
    %c2_i32_43 = arith.constant 2 : i32
    %186 = arith.muli %c2_i32_41, %c2_i32_43 : i32
    %187 = arith.index_cast %186 : i32 to index
    %c0_44 = arith.constant 0 : index
    %188 = vector.load %arg7[%187, %c0_44] : memref<16x64xf32, #tpu.memory_space<vmem>>, vector<2x64xf32>
    %cst_45 = arith.constant dense<0.000000e+00> : vector<2x64xf32>
    %189 = tpu.matmul %175, %10, %cst_45 {dimension_numbers = #tpu.dot_dimension_numbers<[1], [0], [0], [1], [0, 0, 1, 1], [], []>} : vector<2x16xf32>, vector<16x64xf32>, vector<2x64xf32> -> vector<2x64xf32>
    %190 = arith.addf %188, %189 : vector<2x64xf32>
    %191 = vector.extract_strided_slice %190 {offsets = [0, 0], sizes = [2, 16], strides = [1, 1]} : vector<2x64xf32> to vector<2x16xf32>
    %192 = arith.negf %191 : vector<2x16xf32>
    %193 = math.exp %192 : vector<2x16xf32>
    %cst_46 = arith.constant 1.000000e+00 : f32
    %194 = vector.broadcast %cst_46 : f32 to vector<2x16xf32>
    %195 = arith.addf %194, %193 : vector<2x16xf32>
    %196 = arith.divf %194, %195 : vector<2x16xf32>
    %197 = vector.extract_strided_slice %190 {offsets = [0, 16], sizes = [2, 16], strides = [1, 1]} : vector<2x64xf32> to vector<2x16xf32>
    %198 = arith.negf %197 : vector<2x16xf32>
    %199 = math.exp %198 : vector<2x16xf32>
    %cst_47 = arith.constant 1.000000e+00 : f32
    %200 = vector.broadcast %cst_47 : f32 to vector<2x16xf32>
    %201 = arith.addf %200, %199 : vector<2x16xf32>
    %202 = arith.divf %200, %201 : vector<2x16xf32>
    %203 = vector.extract_strided_slice %190 {offsets = [0, 32], sizes = [2, 16], strides = [1, 1]} : vector<2x64xf32> to vector<2x16xf32>
    %204 = math.tanh %203 : vector<2x16xf32>
    %205 = vector.extract_strided_slice %190 {offsets = [0, 48], sizes = [2, 16], strides = [1, 1]} : vector<2x64xf32> to vector<2x16xf32>
    %206 = arith.negf %205 : vector<2x16xf32>
    %207 = math.exp %206 : vector<2x16xf32>
    %cst_48 = arith.constant 1.000000e+00 : f32
    %208 = vector.broadcast %cst_48 : f32 to vector<2x16xf32>
    %209 = arith.addf %208, %207 : vector<2x16xf32>
    %210 = arith.divf %208, %209 : vector<2x16xf32>
    %211 = arith.mulf %202, %178 : vector<2x16xf32>
    %212 = arith.mulf %196, %204 : vector<2x16xf32>
    %213 = arith.addf %211, %212 : vector<2x16xf32>
    %214 = math.tanh %213 : vector<2x16xf32>
    %215 = arith.mulf %210, %214 : vector<2x16xf32>
    %216 = vector.broadcast %c2_i32_41 : i32 to vector<2x1xi32>
    %217 = arith.cmpi sgt, %12, %216 : vector<2x1xi32>
    %c2_i32_49 = arith.constant 2 : i32
    %218 = arith.muli %185, %c2_i32_49 : i32
    %219 = arith.index_cast %218 : i32 to index
    %c0_50 = arith.constant 0 : index
    %220 = vector.load %arg8[%219, %c0_50] : memref<16x64xf32, #tpu.memory_space<vmem>>, vector<2x64xf32>
    %cst_51 = arith.constant dense<0.000000e+00> : vector<2x64xf32>
    %221 = tpu.matmul %181, %11, %cst_51 {dimension_numbers = #tpu.dot_dimension_numbers<[1], [0], [0], [1], [0, 0, 1, 1], [], []>} : vector<2x16xf32>, vector<16x64xf32>, vector<2x64xf32> -> vector<2x64xf32>
    %222 = arith.addf %220, %221 : vector<2x64xf32>
    %223 = vector.extract_strided_slice %222 {offsets = [0, 0], sizes = [2, 16], strides = [1, 1]} : vector<2x64xf32> to vector<2x16xf32>
    %224 = arith.negf %223 : vector<2x16xf32>
    %225 = math.exp %224 : vector<2x16xf32>
    %cst_52 = arith.constant 1.000000e+00 : f32
    %226 = vector.broadcast %cst_52 : f32 to vector<2x16xf32>
    %227 = arith.addf %226, %225 : vector<2x16xf32>
    %228 = arith.divf %226, %227 : vector<2x16xf32>
    %229 = vector.extract_strided_slice %222 {offsets = [0, 16], sizes = [2, 16], strides = [1, 1]} : vector<2x64xf32> to vector<2x16xf32>
    %230 = arith.negf %229 : vector<2x16xf32>
    %231 = math.exp %230 : vector<2x16xf32>
    %cst_53 = arith.constant 1.000000e+00 : f32
    %232 = vector.broadcast %cst_53 : f32 to vector<2x16xf32>
    %233 = arith.addf %232, %231 : vector<2x16xf32>
    %234 = arith.divf %232, %233 : vector<2x16xf32>
    %235 = vector.extract_strided_slice %222 {offsets = [0, 32], sizes = [2, 16], strides = [1, 1]} : vector<2x64xf32> to vector<2x16xf32>
    %236 = math.tanh %235 : vector<2x16xf32>
    %237 = vector.extract_strided_slice %222 {offsets = [0, 48], sizes = [2, 16], strides = [1, 1]} : vector<2x64xf32> to vector<2x16xf32>
    %238 = arith.negf %237 : vector<2x16xf32>
    %239 = math.exp %238 : vector<2x16xf32>
    %cst_54 = arith.constant 1.000000e+00 : f32
    %240 = vector.broadcast %cst_54 : f32 to vector<2x16xf32>
    %241 = arith.addf %240, %239 : vector<2x16xf32>
    %242 = arith.divf %240, %241 : vector<2x16xf32>
    %243 = arith.mulf %234, %184 : vector<2x16xf32>
    %244 = arith.mulf %228, %236 : vector<2x16xf32>
    %245 = arith.addf %243, %244 : vector<2x16xf32>
    %246 = math.tanh %245 : vector<2x16xf32>
    %247 = arith.mulf %242, %246 : vector<2x16xf32>
    %248 = vector.broadcast %185 : i32 to vector<2x1xi32>
    %249 = arith.cmpi sgt, %12, %248 : vector<2x1xi32>
    %250 = arith.maximumf %168, %215 : vector<2x16xf32>
    %251 = vector.shape_cast %217 : vector<2x1xi1> to vector<2x1xi1>
    %252 = vector.broadcast %251 : vector<2x1xi1> to vector<2x16xi1>
    %253 = arith.select %252, %250, %168 : vector<2x16xi1>, vector<2x16xf32>
    %254 = arith.maximumf %172, %247 : vector<2x16xf32>
    %255 = vector.shape_cast %249 : vector<2x1xi1> to vector<2x1xi1>
    %256 = vector.broadcast %255 : vector<2x1xi1> to vector<2x16xi1>
    %257 = arith.select %256, %254, %172 : vector<2x16xi1>, vector<2x16xf32>
    %258 = vector.shape_cast %217 : vector<2x1xi1> to vector<2x1xi1>
    %259 = vector.broadcast %258 : vector<2x1xi1> to vector<2x16xi1>
    %260 = arith.select %259, %215, %175 : vector<2x16xi1>, vector<2x16xf32>
    %261 = vector.shape_cast %217 : vector<2x1xi1> to vector<2x1xi1>
    %262 = vector.broadcast %261 : vector<2x1xi1> to vector<2x16xi1>
    %263 = arith.select %262, %213, %178 : vector<2x16xi1>, vector<2x16xf32>
    %264 = vector.shape_cast %249 : vector<2x1xi1> to vector<2x1xi1>
    %265 = vector.broadcast %264 : vector<2x1xi1> to vector<2x16xi1>
    %266 = arith.select %265, %247, %181 : vector<2x16xi1>, vector<2x16xf32>
    %267 = vector.shape_cast %249 : vector<2x1xi1> to vector<2x1xi1>
    %268 = vector.broadcast %267 : vector<2x1xi1> to vector<2x16xi1>
    %269 = arith.select %268, %245, %184 : vector<2x16xi1>, vector<2x16xf32>
    %c3_i32 = arith.constant 3 : i32
    %c7_i32_55 = arith.constant 7 : i32
    %270 = arith.subi %c7_i32_55, %c3_i32 : i32
    %c2_i32_56 = arith.constant 2 : i32
    %271 = arith.muli %c3_i32, %c2_i32_56 : i32
    %272 = arith.index_cast %271 : i32 to index
    %c0_57 = arith.constant 0 : index
    %273 = vector.load %arg7[%272, %c0_57] : memref<16x64xf32, #tpu.memory_space<vmem>>, vector<2x64xf32>
    %cst_58 = arith.constant dense<0.000000e+00> : vector<2x64xf32>
    %274 = tpu.matmul %260, %10, %cst_58 {dimension_numbers = #tpu.dot_dimension_numbers<[1], [0], [0], [1], [0, 0, 1, 1], [], []>} : vector<2x16xf32>, vector<16x64xf32>, vector<2x64xf32> -> vector<2x64xf32>
    %275 = arith.addf %273, %274 : vector<2x64xf32>
    %276 = vector.extract_strided_slice %275 {offsets = [0, 0], sizes = [2, 16], strides = [1, 1]} : vector<2x64xf32> to vector<2x16xf32>
    %277 = arith.negf %276 : vector<2x16xf32>
    %278 = math.exp %277 : vector<2x16xf32>
    %cst_59 = arith.constant 1.000000e+00 : f32
    %279 = vector.broadcast %cst_59 : f32 to vector<2x16xf32>
    %280 = arith.addf %279, %278 : vector<2x16xf32>
    %281 = arith.divf %279, %280 : vector<2x16xf32>
    %282 = vector.extract_strided_slice %275 {offsets = [0, 16], sizes = [2, 16], strides = [1, 1]} : vector<2x64xf32> to vector<2x16xf32>
    %283 = arith.negf %282 : vector<2x16xf32>
    %284 = math.exp %283 : vector<2x16xf32>
    %cst_60 = arith.constant 1.000000e+00 : f32
    %285 = vector.broadcast %cst_60 : f32 to vector<2x16xf32>
    %286 = arith.addf %285, %284 : vector<2x16xf32>
    %287 = arith.divf %285, %286 : vector<2x16xf32>
    %288 = vector.extract_strided_slice %275 {offsets = [0, 32], sizes = [2, 16], strides = [1, 1]} : vector<2x64xf32> to vector<2x16xf32>
    %289 = math.tanh %288 : vector<2x16xf32>
    %290 = vector.extract_strided_slice %275 {offsets = [0, 48], sizes = [2, 16], strides = [1, 1]} : vector<2x64xf32> to vector<2x16xf32>
    %291 = arith.negf %290 : vector<2x16xf32>
    %292 = math.exp %291 : vector<2x16xf32>
    %cst_61 = arith.constant 1.000000e+00 : f32
    %293 = vector.broadcast %cst_61 : f32 to vector<2x16xf32>
    %294 = arith.addf %293, %292 : vector<2x16xf32>
    %295 = arith.divf %293, %294 : vector<2x16xf32>
    %296 = arith.mulf %287, %263 : vector<2x16xf32>
    %297 = arith.mulf %281, %289 : vector<2x16xf32>
    %298 = arith.addf %296, %297 : vector<2x16xf32>
    %299 = math.tanh %298 : vector<2x16xf32>
    %300 = arith.mulf %295, %299 : vector<2x16xf32>
    %301 = vector.broadcast %c3_i32 : i32 to vector<2x1xi32>
    %302 = arith.cmpi sgt, %12, %301 : vector<2x1xi32>
    %c2_i32_62 = arith.constant 2 : i32
    %303 = arith.muli %270, %c2_i32_62 : i32
    %304 = arith.index_cast %303 : i32 to index
    %c0_63 = arith.constant 0 : index
    %305 = vector.load %arg8[%304, %c0_63] : memref<16x64xf32, #tpu.memory_space<vmem>>, vector<2x64xf32>
    %cst_64 = arith.constant dense<0.000000e+00> : vector<2x64xf32>
    %306 = tpu.matmul %266, %11, %cst_64 {dimension_numbers = #tpu.dot_dimension_numbers<[1], [0], [0], [1], [0, 0, 1, 1], [], []>} : vector<2x16xf32>, vector<16x64xf32>, vector<2x64xf32> -> vector<2x64xf32>
    %307 = arith.addf %305, %306 : vector<2x64xf32>
    %308 = vector.extract_strided_slice %307 {offsets = [0, 0], sizes = [2, 16], strides = [1, 1]} : vector<2x64xf32> to vector<2x16xf32>
    %309 = arith.negf %308 : vector<2x16xf32>
    %310 = math.exp %309 : vector<2x16xf32>
    %cst_65 = arith.constant 1.000000e+00 : f32
    %311 = vector.broadcast %cst_65 : f32 to vector<2x16xf32>
    %312 = arith.addf %311, %310 : vector<2x16xf32>
    %313 = arith.divf %311, %312 : vector<2x16xf32>
    %314 = vector.extract_strided_slice %307 {offsets = [0, 16], sizes = [2, 16], strides = [1, 1]} : vector<2x64xf32> to vector<2x16xf32>
    %315 = arith.negf %314 : vector<2x16xf32>
    %316 = math.exp %315 : vector<2x16xf32>
    %cst_66 = arith.constant 1.000000e+00 : f32
    %317 = vector.broadcast %cst_66 : f32 to vector<2x16xf32>
    %318 = arith.addf %317, %316 : vector<2x16xf32>
    %319 = arith.divf %317, %318 : vector<2x16xf32>
    %320 = vector.extract_strided_slice %307 {offsets = [0, 32], sizes = [2, 16], strides = [1, 1]} : vector<2x64xf32> to vector<2x16xf32>
    %321 = math.tanh %320 : vector<2x16xf32>
    %322 = vector.extract_strided_slice %307 {offsets = [0, 48], sizes = [2, 16], strides = [1, 1]} : vector<2x64xf32> to vector<2x16xf32>
    %323 = arith.negf %322 : vector<2x16xf32>
    %324 = math.exp %323 : vector<2x16xf32>
    %cst_67 = arith.constant 1.000000e+00 : f32
    %325 = vector.broadcast %cst_67 : f32 to vector<2x16xf32>
    %326 = arith.addf %325, %324 : vector<2x16xf32>
    %327 = arith.divf %325, %326 : vector<2x16xf32>
    %328 = arith.mulf %319, %269 : vector<2x16xf32>
    %329 = arith.mulf %313, %321 : vector<2x16xf32>
    %330 = arith.addf %328, %329 : vector<2x16xf32>
    %331 = math.tanh %330 : vector<2x16xf32>
    %332 = arith.mulf %327, %331 : vector<2x16xf32>
    %333 = vector.broadcast %270 : i32 to vector<2x1xi32>
    %334 = arith.cmpi sgt, %12, %333 : vector<2x1xi32>
    %335 = arith.maximumf %253, %300 : vector<2x16xf32>
    %336 = vector.shape_cast %302 : vector<2x1xi1> to vector<2x1xi1>
    %337 = vector.broadcast %336 : vector<2x1xi1> to vector<2x16xi1>
    %338 = arith.select %337, %335, %253 : vector<2x16xi1>, vector<2x16xf32>
    %339 = arith.maximumf %257, %332 : vector<2x16xf32>
    %340 = vector.shape_cast %334 : vector<2x1xi1> to vector<2x1xi1>
    %341 = vector.broadcast %340 : vector<2x1xi1> to vector<2x16xi1>
    %342 = arith.select %341, %339, %257 : vector<2x16xi1>, vector<2x16xf32>
    %343 = vector.shape_cast %302 : vector<2x1xi1> to vector<2x1xi1>
    %344 = vector.broadcast %343 : vector<2x1xi1> to vector<2x16xi1>
    %345 = arith.select %344, %300, %260 : vector<2x16xi1>, vector<2x16xf32>
    %346 = vector.shape_cast %302 : vector<2x1xi1> to vector<2x1xi1>
    %347 = vector.broadcast %346 : vector<2x1xi1> to vector<2x16xi1>
    %348 = arith.select %347, %298, %263 : vector<2x16xi1>, vector<2x16xf32>
    %349 = vector.shape_cast %334 : vector<2x1xi1> to vector<2x1xi1>
    %350 = vector.broadcast %349 : vector<2x1xi1> to vector<2x16xi1>
    %351 = arith.select %350, %332, %266 : vector<2x16xi1>, vector<2x16xf32>
    %352 = vector.shape_cast %334 : vector<2x1xi1> to vector<2x1xi1>
    %353 = vector.broadcast %352 : vector<2x1xi1> to vector<2x16xi1>
    %354 = arith.select %353, %330, %269 : vector<2x16xi1>, vector<2x16xf32>
    %c4_i32 = arith.constant 4 : i32
    %c7_i32_68 = arith.constant 7 : i32
    %355 = arith.subi %c7_i32_68, %c4_i32 : i32
    %c2_i32_69 = arith.constant 2 : i32
    %356 = arith.muli %c4_i32, %c2_i32_69 : i32
    %357 = arith.index_cast %356 : i32 to index
    %c0_70 = arith.constant 0 : index
    %358 = vector.load %arg7[%357, %c0_70] : memref<16x64xf32, #tpu.memory_space<vmem>>, vector<2x64xf32>
    %cst_71 = arith.constant dense<0.000000e+00> : vector<2x64xf32>
    %359 = tpu.matmul %345, %10, %cst_71 {dimension_numbers = #tpu.dot_dimension_numbers<[1], [0], [0], [1], [0, 0, 1, 1], [], []>} : vector<2x16xf32>, vector<16x64xf32>, vector<2x64xf32> -> vector<2x64xf32>
    %360 = arith.addf %358, %359 : vector<2x64xf32>
    %361 = vector.extract_strided_slice %360 {offsets = [0, 0], sizes = [2, 16], strides = [1, 1]} : vector<2x64xf32> to vector<2x16xf32>
    %362 = arith.negf %361 : vector<2x16xf32>
    %363 = math.exp %362 : vector<2x16xf32>
    %cst_72 = arith.constant 1.000000e+00 : f32
    %364 = vector.broadcast %cst_72 : f32 to vector<2x16xf32>
    %365 = arith.addf %364, %363 : vector<2x16xf32>
    %366 = arith.divf %364, %365 : vector<2x16xf32>
    %367 = vector.extract_strided_slice %360 {offsets = [0, 16], sizes = [2, 16], strides = [1, 1]} : vector<2x64xf32> to vector<2x16xf32>
    %368 = arith.negf %367 : vector<2x16xf32>
    %369 = math.exp %368 : vector<2x16xf32>
    %cst_73 = arith.constant 1.000000e+00 : f32
    %370 = vector.broadcast %cst_73 : f32 to vector<2x16xf32>
    %371 = arith.addf %370, %369 : vector<2x16xf32>
    %372 = arith.divf %370, %371 : vector<2x16xf32>
    %373 = vector.extract_strided_slice %360 {offsets = [0, 32], sizes = [2, 16], strides = [1, 1]} : vector<2x64xf32> to vector<2x16xf32>
    %374 = math.tanh %373 : vector<2x16xf32>
    %375 = vector.extract_strided_slice %360 {offsets = [0, 48], sizes = [2, 16], strides = [1, 1]} : vector<2x64xf32> to vector<2x16xf32>
    %376 = arith.negf %375 : vector<2x16xf32>
    %377 = math.exp %376 : vector<2x16xf32>
    %cst_74 = arith.constant 1.000000e+00 : f32
    %378 = vector.broadcast %cst_74 : f32 to vector<2x16xf32>
    %379 = arith.addf %378, %377 : vector<2x16xf32>
    %380 = arith.divf %378, %379 : vector<2x16xf32>
    %381 = arith.mulf %372, %348 : vector<2x16xf32>
    %382 = arith.mulf %366, %374 : vector<2x16xf32>
    %383 = arith.addf %381, %382 : vector<2x16xf32>
    %384 = math.tanh %383 : vector<2x16xf32>
    %385 = arith.mulf %380, %384 : vector<2x16xf32>
    %386 = vector.broadcast %c4_i32 : i32 to vector<2x1xi32>
    %387 = arith.cmpi sgt, %12, %386 : vector<2x1xi32>
    %c2_i32_75 = arith.constant 2 : i32
    %388 = arith.muli %355, %c2_i32_75 : i32
    %389 = arith.index_cast %388 : i32 to index
    %c0_76 = arith.constant 0 : index
    %390 = vector.load %arg8[%389, %c0_76] : memref<16x64xf32, #tpu.memory_space<vmem>>, vector<2x64xf32>
    %cst_77 = arith.constant dense<0.000000e+00> : vector<2x64xf32>
    %391 = tpu.matmul %351, %11, %cst_77 {dimension_numbers = #tpu.dot_dimension_numbers<[1], [0], [0], [1], [0, 0, 1, 1], [], []>} : vector<2x16xf32>, vector<16x64xf32>, vector<2x64xf32> -> vector<2x64xf32>
    %392 = arith.addf %390, %391 : vector<2x64xf32>
    %393 = vector.extract_strided_slice %392 {offsets = [0, 0], sizes = [2, 16], strides = [1, 1]} : vector<2x64xf32> to vector<2x16xf32>
    %394 = arith.negf %393 : vector<2x16xf32>
    %395 = math.exp %394 : vector<2x16xf32>
    %cst_78 = arith.constant 1.000000e+00 : f32
    %396 = vector.broadcast %cst_78 : f32 to vector<2x16xf32>
    %397 = arith.addf %396, %395 : vector<2x16xf32>
    %398 = arith.divf %396, %397 : vector<2x16xf32>
    %399 = vector.extract_strided_slice %392 {offsets = [0, 16], sizes = [2, 16], strides = [1, 1]} : vector<2x64xf32> to vector<2x16xf32>
    %400 = arith.negf %399 : vector<2x16xf32>
    %401 = math.exp %400 : vector<2x16xf32>
    %cst_79 = arith.constant 1.000000e+00 : f32
    %402 = vector.broadcast %cst_79 : f32 to vector<2x16xf32>
    %403 = arith.addf %402, %401 : vector<2x16xf32>
    %404 = arith.divf %402, %403 : vector<2x16xf32>
    %405 = vector.extract_strided_slice %392 {offsets = [0, 32], sizes = [2, 16], strides = [1, 1]} : vector<2x64xf32> to vector<2x16xf32>
    %406 = math.tanh %405 : vector<2x16xf32>
    %407 = vector.extract_strided_slice %392 {offsets = [0, 48], sizes = [2, 16], strides = [1, 1]} : vector<2x64xf32> to vector<2x16xf32>
    %408 = arith.negf %407 : vector<2x16xf32>
    %409 = math.exp %408 : vector<2x16xf32>
    %cst_80 = arith.constant 1.000000e+00 : f32
    %410 = vector.broadcast %cst_80 : f32 to vector<2x16xf32>
    %411 = arith.addf %410, %409 : vector<2x16xf32>
    %412 = arith.divf %410, %411 : vector<2x16xf32>
    %413 = arith.mulf %404, %354 : vector<2x16xf32>
    %414 = arith.mulf %398, %406 : vector<2x16xf32>
    %415 = arith.addf %413, %414 : vector<2x16xf32>
    %416 = math.tanh %415 : vector<2x16xf32>
    %417 = arith.mulf %412, %416 : vector<2x16xf32>
    %418 = vector.broadcast %355 : i32 to vector<2x1xi32>
    %419 = arith.cmpi sgt, %12, %418 : vector<2x1xi32>
    %420 = arith.maximumf %338, %385 : vector<2x16xf32>
    %421 = vector.shape_cast %387 : vector<2x1xi1> to vector<2x1xi1>
    %422 = vector.broadcast %421 : vector<2x1xi1> to vector<2x16xi1>
    %423 = arith.select %422, %420, %338 : vector<2x16xi1>, vector<2x16xf32>
    %424 = arith.maximumf %342, %417 : vector<2x16xf32>
    %425 = vector.shape_cast %419 : vector<2x1xi1> to vector<2x1xi1>
    %426 = vector.broadcast %425 : vector<2x1xi1> to vector<2x16xi1>
    %427 = arith.select %426, %424, %342 : vector<2x16xi1>, vector<2x16xf32>
    %428 = vector.shape_cast %387 : vector<2x1xi1> to vector<2x1xi1>
    %429 = vector.broadcast %428 : vector<2x1xi1> to vector<2x16xi1>
    %430 = arith.select %429, %385, %345 : vector<2x16xi1>, vector<2x16xf32>
    %431 = vector.shape_cast %387 : vector<2x1xi1> to vector<2x1xi1>
    %432 = vector.broadcast %431 : vector<2x1xi1> to vector<2x16xi1>
    %433 = arith.select %432, %383, %348 : vector<2x16xi1>, vector<2x16xf32>
    %434 = vector.shape_cast %419 : vector<2x1xi1> to vector<2x1xi1>
    %435 = vector.broadcast %434 : vector<2x1xi1> to vector<2x16xi1>
    %436 = arith.select %435, %417, %351 : vector<2x16xi1>, vector<2x16xf32>
    %437 = vector.shape_cast %419 : vector<2x1xi1> to vector<2x1xi1>
    %438 = vector.broadcast %437 : vector<2x1xi1> to vector<2x16xi1>
    %439 = arith.select %438, %415, %354 : vector<2x16xi1>, vector<2x16xf32>
    %c5_i32 = arith.constant 5 : i32
    %c7_i32_81 = arith.constant 7 : i32
    %440 = arith.subi %c7_i32_81, %c5_i32 : i32
    %c2_i32_82 = arith.constant 2 : i32
    %441 = arith.muli %c5_i32, %c2_i32_82 : i32
    %442 = arith.index_cast %441 : i32 to index
    %c0_83 = arith.constant 0 : index
    %443 = vector.load %arg7[%442, %c0_83] : memref<16x64xf32, #tpu.memory_space<vmem>>, vector<2x64xf32>
    %cst_84 = arith.constant dense<0.000000e+00> : vector<2x64xf32>
    %444 = tpu.matmul %430, %10, %cst_84 {dimension_numbers = #tpu.dot_dimension_numbers<[1], [0], [0], [1], [0, 0, 1, 1], [], []>} : vector<2x16xf32>, vector<16x64xf32>, vector<2x64xf32> -> vector<2x64xf32>
    %445 = arith.addf %443, %444 : vector<2x64xf32>
    %446 = vector.extract_strided_slice %445 {offsets = [0, 0], sizes = [2, 16], strides = [1, 1]} : vector<2x64xf32> to vector<2x16xf32>
    %447 = arith.negf %446 : vector<2x16xf32>
    %448 = math.exp %447 : vector<2x16xf32>
    %cst_85 = arith.constant 1.000000e+00 : f32
    %449 = vector.broadcast %cst_85 : f32 to vector<2x16xf32>
    %450 = arith.addf %449, %448 : vector<2x16xf32>
    %451 = arith.divf %449, %450 : vector<2x16xf32>
    %452 = vector.extract_strided_slice %445 {offsets = [0, 16], sizes = [2, 16], strides = [1, 1]} : vector<2x64xf32> to vector<2x16xf32>
    %453 = arith.negf %452 : vector<2x16xf32>
    %454 = math.exp %453 : vector<2x16xf32>
    %cst_86 = arith.constant 1.000000e+00 : f32
    %455 = vector.broadcast %cst_86 : f32 to vector<2x16xf32>
    %456 = arith.addf %455, %454 : vector<2x16xf32>
    %457 = arith.divf %455, %456 : vector<2x16xf32>
    %458 = vector.extract_strided_slice %445 {offsets = [0, 32], sizes = [2, 16], strides = [1, 1]} : vector<2x64xf32> to vector<2x16xf32>
    %459 = math.tanh %458 : vector<2x16xf32>
    %460 = vector.extract_strided_slice %445 {offsets = [0, 48], sizes = [2, 16], strides = [1, 1]} : vector<2x64xf32> to vector<2x16xf32>
    %461 = arith.negf %460 : vector<2x16xf32>
    %462 = math.exp %461 : vector<2x16xf32>
    %cst_87 = arith.constant 1.000000e+00 : f32
    %463 = vector.broadcast %cst_87 : f32 to vector<2x16xf32>
    %464 = arith.addf %463, %462 : vector<2x16xf32>
    %465 = arith.divf %463, %464 : vector<2x16xf32>
    %466 = arith.mulf %457, %433 : vector<2x16xf32>
    %467 = arith.mulf %451, %459 : vector<2x16xf32>
    %468 = arith.addf %466, %467 : vector<2x16xf32>
    %469 = math.tanh %468 : vector<2x16xf32>
    %470 = arith.mulf %465, %469 : vector<2x16xf32>
    %471 = vector.broadcast %c5_i32 : i32 to vector<2x1xi32>
    %472 = arith.cmpi sgt, %12, %471 : vector<2x1xi32>
    %c2_i32_88 = arith.constant 2 : i32
    %473 = arith.muli %440, %c2_i32_88 : i32
    %474 = arith.index_cast %473 : i32 to index
    %c0_89 = arith.constant 0 : index
    %475 = vector.load %arg8[%474, %c0_89] : memref<16x64xf32, #tpu.memory_space<vmem>>, vector<2x64xf32>
    %cst_90 = arith.constant dense<0.000000e+00> : vector<2x64xf32>
    %476 = tpu.matmul %436, %11, %cst_90 {dimension_numbers = #tpu.dot_dimension_numbers<[1], [0], [0], [1], [0, 0, 1, 1], [], []>} : vector<2x16xf32>, vector<16x64xf32>, vector<2x64xf32> -> vector<2x64xf32>
    %477 = arith.addf %475, %476 : vector<2x64xf32>
    %478 = vector.extract_strided_slice %477 {offsets = [0, 0], sizes = [2, 16], strides = [1, 1]} : vector<2x64xf32> to vector<2x16xf32>
    %479 = arith.negf %478 : vector<2x16xf32>
    %480 = math.exp %479 : vector<2x16xf32>
    %cst_91 = arith.constant 1.000000e+00 : f32
    %481 = vector.broadcast %cst_91 : f32 to vector<2x16xf32>
    %482 = arith.addf %481, %480 : vector<2x16xf32>
    %483 = arith.divf %481, %482 : vector<2x16xf32>
    %484 = vector.extract_strided_slice %477 {offsets = [0, 16], sizes = [2, 16], strides = [1, 1]} : vector<2x64xf32> to vector<2x16xf32>
    %485 = arith.negf %484 : vector<2x16xf32>
    %486 = math.exp %485 : vector<2x16xf32>
    %cst_92 = arith.constant 1.000000e+00 : f32
    %487 = vector.broadcast %cst_92 : f32 to vector<2x16xf32>
    %488 = arith.addf %487, %486 : vector<2x16xf32>
    %489 = arith.divf %487, %488 : vector<2x16xf32>
    %490 = vector.extract_strided_slice %477 {offsets = [0, 32], sizes = [2, 16], strides = [1, 1]} : vector<2x64xf32> to vector<2x16xf32>
    %491 = math.tanh %490 : vector<2x16xf32>
    %492 = vector.extract_strided_slice %477 {offsets = [0, 48], sizes = [2, 16], strides = [1, 1]} : vector<2x64xf32> to vector<2x16xf32>
    %493 = arith.negf %492 : vector<2x16xf32>
    %494 = math.exp %493 : vector<2x16xf32>
    %cst_93 = arith.constant 1.000000e+00 : f32
    %495 = vector.broadcast %cst_93 : f32 to vector<2x16xf32>
    %496 = arith.addf %495, %494 : vector<2x16xf32>
    %497 = arith.divf %495, %496 : vector<2x16xf32>
    %498 = arith.mulf %489, %439 : vector<2x16xf32>
    %499 = arith.mulf %483, %491 : vector<2x16xf32>
    %500 = arith.addf %498, %499 : vector<2x16xf32>
    %501 = math.tanh %500 : vector<2x16xf32>
    %502 = arith.mulf %497, %501 : vector<2x16xf32>
    %503 = vector.broadcast %440 : i32 to vector<2x1xi32>
    %504 = arith.cmpi sgt, %12, %503 : vector<2x1xi32>
    %505 = arith.maximumf %423, %470 : vector<2x16xf32>
    %506 = vector.shape_cast %472 : vector<2x1xi1> to vector<2x1xi1>
    %507 = vector.broadcast %506 : vector<2x1xi1> to vector<2x16xi1>
    %508 = arith.select %507, %505, %423 : vector<2x16xi1>, vector<2x16xf32>
    %509 = arith.maximumf %427, %502 : vector<2x16xf32>
    %510 = vector.shape_cast %504 : vector<2x1xi1> to vector<2x1xi1>
    %511 = vector.broadcast %510 : vector<2x1xi1> to vector<2x16xi1>
    %512 = arith.select %511, %509, %427 : vector<2x16xi1>, vector<2x16xf32>
    %513 = vector.shape_cast %472 : vector<2x1xi1> to vector<2x1xi1>
    %514 = vector.broadcast %513 : vector<2x1xi1> to vector<2x16xi1>
    %515 = arith.select %514, %470, %430 : vector<2x16xi1>, vector<2x16xf32>
    %516 = vector.shape_cast %472 : vector<2x1xi1> to vector<2x1xi1>
    %517 = vector.broadcast %516 : vector<2x1xi1> to vector<2x16xi1>
    %518 = arith.select %517, %468, %433 : vector<2x16xi1>, vector<2x16xf32>
    %519 = vector.shape_cast %504 : vector<2x1xi1> to vector<2x1xi1>
    %520 = vector.broadcast %519 : vector<2x1xi1> to vector<2x16xi1>
    %521 = arith.select %520, %502, %436 : vector<2x16xi1>, vector<2x16xf32>
    %522 = vector.shape_cast %504 : vector<2x1xi1> to vector<2x1xi1>
    %523 = vector.broadcast %522 : vector<2x1xi1> to vector<2x16xi1>
    %524 = arith.select %523, %500, %439 : vector<2x16xi1>, vector<2x16xf32>
    %c6_i32 = arith.constant 6 : i32
    %c7_i32_94 = arith.constant 7 : i32
    %525 = arith.subi %c7_i32_94, %c6_i32 : i32
    %c2_i32_95 = arith.constant 2 : i32
    %526 = arith.muli %c6_i32, %c2_i32_95 : i32
    %527 = arith.index_cast %526 : i32 to index
    %c0_96 = arith.constant 0 : index
    %528 = vector.load %arg7[%527, %c0_96] : memref<16x64xf32, #tpu.memory_space<vmem>>, vector<2x64xf32>
    %cst_97 = arith.constant dense<0.000000e+00> : vector<2x64xf32>
    %529 = tpu.matmul %515, %10, %cst_97 {dimension_numbers = #tpu.dot_dimension_numbers<[1], [0], [0], [1], [0, 0, 1, 1], [], []>} : vector<2x16xf32>, vector<16x64xf32>, vector<2x64xf32> -> vector<2x64xf32>
    %530 = arith.addf %528, %529 : vector<2x64xf32>
    %531 = vector.extract_strided_slice %530 {offsets = [0, 0], sizes = [2, 16], strides = [1, 1]} : vector<2x64xf32> to vector<2x16xf32>
    %532 = arith.negf %531 : vector<2x16xf32>
    %533 = math.exp %532 : vector<2x16xf32>
    %cst_98 = arith.constant 1.000000e+00 : f32
    %534 = vector.broadcast %cst_98 : f32 to vector<2x16xf32>
    %535 = arith.addf %534, %533 : vector<2x16xf32>
    %536 = arith.divf %534, %535 : vector<2x16xf32>
    %537 = vector.extract_strided_slice %530 {offsets = [0, 16], sizes = [2, 16], strides = [1, 1]} : vector<2x64xf32> to vector<2x16xf32>
    %538 = arith.negf %537 : vector<2x16xf32>
    %539 = math.exp %538 : vector<2x16xf32>
    %cst_99 = arith.constant 1.000000e+00 : f32
    %540 = vector.broadcast %cst_99 : f32 to vector<2x16xf32>
    %541 = arith.addf %540, %539 : vector<2x16xf32>
    %542 = arith.divf %540, %541 : vector<2x16xf32>
    %543 = vector.extract_strided_slice %530 {offsets = [0, 32], sizes = [2, 16], strides = [1, 1]} : vector<2x64xf32> to vector<2x16xf32>
    %544 = math.tanh %543 : vector<2x16xf32>
    %545 = vector.extract_strided_slice %530 {offsets = [0, 48], sizes = [2, 16], strides = [1, 1]} : vector<2x64xf32> to vector<2x16xf32>
    %546 = arith.negf %545 : vector<2x16xf32>
    %547 = math.exp %546 : vector<2x16xf32>
    %cst_100 = arith.constant 1.000000e+00 : f32
    %548 = vector.broadcast %cst_100 : f32 to vector<2x16xf32>
    %549 = arith.addf %548, %547 : vector<2x16xf32>
    %550 = arith.divf %548, %549 : vector<2x16xf32>
    %551 = arith.mulf %542, %518 : vector<2x16xf32>
    %552 = arith.mulf %536, %544 : vector<2x16xf32>
    %553 = arith.addf %551, %552 : vector<2x16xf32>
    %554 = math.tanh %553 : vector<2x16xf32>
    %555 = arith.mulf %550, %554 : vector<2x16xf32>
    %556 = vector.broadcast %c6_i32 : i32 to vector<2x1xi32>
    %557 = arith.cmpi sgt, %12, %556 : vector<2x1xi32>
    %c2_i32_101 = arith.constant 2 : i32
    %558 = arith.muli %525, %c2_i32_101 : i32
    %559 = arith.index_cast %558 : i32 to index
    %c0_102 = arith.constant 0 : index
    %560 = vector.load %arg8[%559, %c0_102] : memref<16x64xf32, #tpu.memory_space<vmem>>, vector<2x64xf32>
    %cst_103 = arith.constant dense<0.000000e+00> : vector<2x64xf32>
    %561 = tpu.matmul %521, %11, %cst_103 {dimension_numbers = #tpu.dot_dimension_numbers<[1], [0], [0], [1], [0, 0, 1, 1], [], []>} : vector<2x16xf32>, vector<16x64xf32>, vector<2x64xf32> -> vector<2x64xf32>
    %562 = arith.addf %560, %561 : vector<2x64xf32>
    %563 = vector.extract_strided_slice %562 {offsets = [0, 0], sizes = [2, 16], strides = [1, 1]} : vector<2x64xf32> to vector<2x16xf32>
    %564 = arith.negf %563 : vector<2x16xf32>
    %565 = math.exp %564 : vector<2x16xf32>
    %cst_104 = arith.constant 1.000000e+00 : f32
    %566 = vector.broadcast %cst_104 : f32 to vector<2x16xf32>
    %567 = arith.addf %566, %565 : vector<2x16xf32>
    %568 = arith.divf %566, %567 : vector<2x16xf32>
    %569 = vector.extract_strided_slice %562 {offsets = [0, 16], sizes = [2, 16], strides = [1, 1]} : vector<2x64xf32> to vector<2x16xf32>
    %570 = arith.negf %569 : vector<2x16xf32>
    %571 = math.exp %570 : vector<2x16xf32>
    %cst_105 = arith.constant 1.000000e+00 : f32
    %572 = vector.broadcast %cst_105 : f32 to vector<2x16xf32>
    %573 = arith.addf %572, %571 : vector<2x16xf32>
    %574 = arith.divf %572, %573 : vector<2x16xf32>
    %575 = vector.extract_strided_slice %562 {offsets = [0, 32], sizes = [2, 16], strides = [1, 1]} : vector<2x64xf32> to vector<2x16xf32>
    %576 = math.tanh %575 : vector<2x16xf32>
    %577 = vector.extract_strided_slice %562 {offsets = [0, 48], sizes = [2, 16], strides = [1, 1]} : vector<2x64xf32> to vector<2x16xf32>
    %578 = arith.negf %577 : vector<2x16xf32>
    %579 = math.exp %578 : vector<2x16xf32>
    %cst_106 = arith.constant 1.000000e+00 : f32
    %580 = vector.broadcast %cst_106 : f32 to vector<2x16xf32>
    %581 = arith.addf %580, %579 : vector<2x16xf32>
    %582 = arith.divf %580, %581 : vector<2x16xf32>
    %583 = arith.mulf %574, %524 : vector<2x16xf32>
    %584 = arith.mulf %568, %576 : vector<2x16xf32>
    %585 = arith.addf %583, %584 : vector<2x16xf32>
    %586 = math.tanh %585 : vector<2x16xf32>
    %587 = arith.mulf %582, %586 : vector<2x16xf32>
    %588 = vector.broadcast %525 : i32 to vector<2x1xi32>
    %589 = arith.cmpi sgt, %12, %588 : vector<2x1xi32>
    %590 = arith.maximumf %508, %555 : vector<2x16xf32>
    %591 = vector.shape_cast %557 : vector<2x1xi1> to vector<2x1xi1>
    %592 = vector.broadcast %591 : vector<2x1xi1> to vector<2x16xi1>
    %593 = arith.select %592, %590, %508 : vector<2x16xi1>, vector<2x16xf32>
    %594 = arith.maximumf %512, %587 : vector<2x16xf32>
    %595 = vector.shape_cast %589 : vector<2x1xi1> to vector<2x1xi1>
    %596 = vector.broadcast %595 : vector<2x1xi1> to vector<2x16xi1>
    %597 = arith.select %596, %594, %512 : vector<2x16xi1>, vector<2x16xf32>
    %598 = vector.shape_cast %557 : vector<2x1xi1> to vector<2x1xi1>
    %599 = vector.broadcast %598 : vector<2x1xi1> to vector<2x16xi1>
    %600 = arith.select %599, %555, %515 : vector<2x16xi1>, vector<2x16xf32>
    %601 = vector.shape_cast %557 : vector<2x1xi1> to vector<2x1xi1>
    %602 = vector.broadcast %601 : vector<2x1xi1> to vector<2x16xi1>
    %603 = arith.select %602, %553, %518 : vector<2x16xi1>, vector<2x16xf32>
    %604 = vector.shape_cast %589 : vector<2x1xi1> to vector<2x1xi1>
    %605 = vector.broadcast %604 : vector<2x1xi1> to vector<2x16xi1>
    %606 = arith.select %605, %587, %521 : vector<2x16xi1>, vector<2x16xf32>
    %607 = vector.shape_cast %589 : vector<2x1xi1> to vector<2x1xi1>
    %608 = vector.broadcast %607 : vector<2x1xi1> to vector<2x16xi1>
    %609 = arith.select %608, %585, %524 : vector<2x16xi1>, vector<2x16xf32>
    %c7_i32_107 = arith.constant 7 : i32
    %c7_i32_108 = arith.constant 7 : i32
    %610 = arith.subi %c7_i32_108, %c7_i32_107 : i32
    %c2_i32_109 = arith.constant 2 : i32
    %611 = arith.muli %c7_i32_107, %c2_i32_109 : i32
    %612 = arith.index_cast %611 : i32 to index
    %c0_110 = arith.constant 0 : index
    %613 = vector.load %arg7[%612, %c0_110] : memref<16x64xf32, #tpu.memory_space<vmem>>, vector<2x64xf32>
    %cst_111 = arith.constant dense<0.000000e+00> : vector<2x64xf32>
    %614 = tpu.matmul %600, %10, %cst_111 {dimension_numbers = #tpu.dot_dimension_numbers<[1], [0], [0], [1], [0, 0, 1, 1], [], []>} : vector<2x16xf32>, vector<16x64xf32>, vector<2x64xf32> -> vector<2x64xf32>
    %615 = arith.addf %613, %614 : vector<2x64xf32>
    %616 = vector.extract_strided_slice %615 {offsets = [0, 0], sizes = [2, 16], strides = [1, 1]} : vector<2x64xf32> to vector<2x16xf32>
    %617 = arith.negf %616 : vector<2x16xf32>
    %618 = math.exp %617 : vector<2x16xf32>
    %cst_112 = arith.constant 1.000000e+00 : f32
    %619 = vector.broadcast %cst_112 : f32 to vector<2x16xf32>
    %620 = arith.addf %619, %618 : vector<2x16xf32>
    %621 = arith.divf %619, %620 : vector<2x16xf32>
    %622 = vector.extract_strided_slice %615 {offsets = [0, 16], sizes = [2, 16], strides = [1, 1]} : vector<2x64xf32> to vector<2x16xf32>
    %623 = arith.negf %622 : vector<2x16xf32>
    %624 = math.exp %623 : vector<2x16xf32>
    %cst_113 = arith.constant 1.000000e+00 : f32
    %625 = vector.broadcast %cst_113 : f32 to vector<2x16xf32>
    %626 = arith.addf %625, %624 : vector<2x16xf32>
    %627 = arith.divf %625, %626 : vector<2x16xf32>
    %628 = vector.extract_strided_slice %615 {offsets = [0, 32], sizes = [2, 16], strides = [1, 1]} : vector<2x64xf32> to vector<2x16xf32>
    %629 = math.tanh %628 : vector<2x16xf32>
    %630 = vector.extract_strided_slice %615 {offsets = [0, 48], sizes = [2, 16], strides = [1, 1]} : vector<2x64xf32> to vector<2x16xf32>
    %631 = arith.negf %630 : vector<2x16xf32>
    %632 = math.exp %631 : vector<2x16xf32>
    %cst_114 = arith.constant 1.000000e+00 : f32
    %633 = vector.broadcast %cst_114 : f32 to vector<2x16xf32>
    %634 = arith.addf %633, %632 : vector<2x16xf32>
    %635 = arith.divf %633, %634 : vector<2x16xf32>
    %636 = arith.mulf %627, %603 : vector<2x16xf32>
    %637 = arith.mulf %621, %629 : vector<2x16xf32>
    %638 = arith.addf %636, %637 : vector<2x16xf32>
    %639 = math.tanh %638 : vector<2x16xf32>
    %640 = arith.mulf %635, %639 : vector<2x16xf32>
    %641 = vector.broadcast %c7_i32_107 : i32 to vector<2x1xi32>
    %642 = arith.cmpi sgt, %12, %641 : vector<2x1xi32>
    %c2_i32_115 = arith.constant 2 : i32
    %643 = arith.muli %610, %c2_i32_115 : i32
    %644 = arith.index_cast %643 : i32 to index
    %c0_116 = arith.constant 0 : index
    %645 = vector.load %arg8[%644, %c0_116] : memref<16x64xf32, #tpu.memory_space<vmem>>, vector<2x64xf32>
    %cst_117 = arith.constant dense<0.000000e+00> : vector<2x64xf32>
    %646 = tpu.matmul %606, %11, %cst_117 {dimension_numbers = #tpu.dot_dimension_numbers<[1], [0], [0], [1], [0, 0, 1, 1], [], []>} : vector<2x16xf32>, vector<16x64xf32>, vector<2x64xf32> -> vector<2x64xf32>
    %647 = arith.addf %645, %646 : vector<2x64xf32>
    %648 = vector.extract_strided_slice %647 {offsets = [0, 0], sizes = [2, 16], strides = [1, 1]} : vector<2x64xf32> to vector<2x16xf32>
    %649 = arith.negf %648 : vector<2x16xf32>
    %650 = math.exp %649 : vector<2x16xf32>
    %cst_118 = arith.constant 1.000000e+00 : f32
    %651 = vector.broadcast %cst_118 : f32 to vector<2x16xf32>
    %652 = arith.addf %651, %650 : vector<2x16xf32>
    %653 = arith.divf %651, %652 : vector<2x16xf32>
    %654 = vector.extract_strided_slice %647 {offsets = [0, 16], sizes = [2, 16], strides = [1, 1]} : vector<2x64xf32> to vector<2x16xf32>
    %655 = arith.negf %654 : vector<2x16xf32>
    %656 = math.exp %655 : vector<2x16xf32>
    %cst_119 = arith.constant 1.000000e+00 : f32
    %657 = vector.broadcast %cst_119 : f32 to vector<2x16xf32>
    %658 = arith.addf %657, %656 : vector<2x16xf32>
    %659 = arith.divf %657, %658 : vector<2x16xf32>
    %660 = vector.extract_strided_slice %647 {offsets = [0, 32], sizes = [2, 16], strides = [1, 1]} : vector<2x64xf32> to vector<2x16xf32>
    %661 = math.tanh %660 : vector<2x16xf32>
    %662 = vector.extract_strided_slice %647 {offsets = [0, 48], sizes = [2, 16], strides = [1, 1]} : vector<2x64xf32> to vector<2x16xf32>
    %663 = arith.negf %662 : vector<2x16xf32>
    %664 = math.exp %663 : vector<2x16xf32>
    %cst_120 = arith.constant 1.000000e+00 : f32
    %665 = vector.broadcast %cst_120 : f32 to vector<2x16xf32>
    %666 = arith.addf %665, %664 : vector<2x16xf32>
    %667 = arith.divf %665, %666 : vector<2x16xf32>
    %668 = arith.mulf %659, %609 : vector<2x16xf32>
    %669 = arith.mulf %653, %661 : vector<2x16xf32>
    %670 = arith.addf %668, %669 : vector<2x16xf32>
    %671 = math.tanh %670 : vector<2x16xf32>
    %672 = arith.mulf %667, %671 : vector<2x16xf32>
    %673 = vector.broadcast %610 : i32 to vector<2x1xi32>
    %674 = arith.cmpi sgt, %12, %673 : vector<2x1xi32>
    %675 = arith.maximumf %593, %640 : vector<2x16xf32>
    %676 = vector.shape_cast %642 : vector<2x1xi1> to vector<2x1xi1>
    %677 = vector.broadcast %676 : vector<2x1xi1> to vector<2x16xi1>
    %678 = arith.select %677, %675, %593 : vector<2x16xi1>, vector<2x16xf32>
    %679 = arith.maximumf %597, %672 : vector<2x16xf32>
    %680 = vector.shape_cast %674 : vector<2x1xi1> to vector<2x1xi1>
    %681 = vector.broadcast %680 : vector<2x1xi1> to vector<2x16xi1>
    %682 = arith.select %681, %679, %597 : vector<2x16xi1>, vector<2x16xf32>
    %683 = vector.shape_cast %642 : vector<2x1xi1> to vector<2x1xi1>
    %684 = vector.broadcast %683 : vector<2x1xi1> to vector<2x16xi1>
    %685 = arith.select %684, %640, %600 : vector<2x16xi1>, vector<2x16xf32>
    %686 = vector.shape_cast %642 : vector<2x1xi1> to vector<2x1xi1>
    %687 = vector.broadcast %686 : vector<2x1xi1> to vector<2x16xi1>
    %688 = arith.select %687, %638, %603 : vector<2x16xi1>, vector<2x16xf32>
    %689 = vector.shape_cast %674 : vector<2x1xi1> to vector<2x1xi1>
    %690 = vector.broadcast %689 : vector<2x1xi1> to vector<2x16xi1>
    %691 = arith.select %690, %672, %606 : vector<2x16xi1>, vector<2x16xf32>
    %692 = vector.shape_cast %674 : vector<2x1xi1> to vector<2x1xi1>
    %693 = vector.broadcast %692 : vector<2x1xi1> to vector<2x16xi1>
    %694 = arith.select %693, %670, %609 : vector<2x16xi1>, vector<2x16xf32>
    %c8_i32 = arith.constant 8 : i32
    %c1_i32_121 = arith.constant 1 : i32
    %695 = vector.broadcast %c1_i32_121 : i32 to vector<2x1xi32>
    %696 = arith.cmpi sge, %12, %695 : vector<2x1xi32>
    %cst_122 = arith.constant 0.000000e+00 : f32
    %697 = vector.shape_cast %696 : vector<2x1xi1> to vector<2x1xi1>
    %698 = vector.broadcast %697 : vector<2x1xi1> to vector<2x16xi1>
    %699 = vector.broadcast %cst_122 : f32 to vector<2x16xf32>
    %700 = arith.select %698, %678, %699 : vector<2x16xi1>, vector<2x16xf32>
    %c0_123 = arith.constant 0 : index
    %c0_124 = arith.constant 0 : index
    %701 = vector.load %arg6[%c0_123, %c0_124] : memref<2x32xf32, #tpu.memory_space<vmem>>, vector<2x16xf32>
    tpu.vector_store %arg6[%c0_123, %c0_124], %700 {strides = array<i32>} : memref<2x32xf32, #tpu.memory_space<vmem>>, vector<2x16xf32>,
    %cst_125 = arith.constant 0.000000e+00 : f32
    %702 = vector.shape_cast %696 : vector<2x1xi1> to vector<2x1xi1>
    %703 = vector.broadcast %702 : vector<2x1xi1> to vector<2x16xi1>
    %704 = vector.broadcast %cst_125 : f32 to vector<2x16xf32>
    %705 = arith.select %703, %682, %704 : vector<2x16xi1>, vector<2x16xf32>
    %c0_126 = arith.constant 0 : index
    %c16 = arith.constant 16 : index
    %706 = vector.load %arg6[%c0_126, %c16] : memref<2x32xf32, #tpu.memory_space<vmem>>, vector<2x16xf32>
    tpu.vector_store %arg6[%c0_126, %c16], %705 {strides = array<i32>} : memref<2x32xf32, #tpu.memory_space<vmem>>, vector<2x16xf32>,
    return
  }
}

</mosaic_0001>

<llo_original>
// kernel: lstm_encoder_forward.2
$region0: #{lstm_encoder_forward.2}
  #allocation0 [shape = 'u32[]', space=smem, size = 0x4, offset = 0x4, fixed_abs, tag = 'smem constant byte address 0x4 - core index']
  #allocation1 [shape = 'u32[72,128]{1,0:T(1,128)}', space=vmem, size = 0x9000, scoped, tag = 'internal scratch']
  #allocation2 [shape = 'f32[16,64]{1,0:T(8,128)}', space=vmem, size = 0x2000, scoped, tag = 'scratch operand']
  #allocation3 [shape = 'f32[16,64]{1,0:T(8,128)}', space=vmem, size = 0x2000, scoped, tag = 'scratch operand']
  #allocation4 [shape = 'f32[16,16]{1,0:T(8,128)}', space=vmem, size = 0x2000, scoped, tag = 'scratch operand']
  #allocation5 [shape = 'f32[16,16]{1,0:T(8,128)}', space=vmem, size = 0x2000, scoped, tag = 'scratch operand']
  %s0 = inlined_call_operand.vmem [shape: f32[16,32], index: 0, kind: input, shape index: {}]
  %s1 = inlined_call_operand.vmem [shape: f32[32,128], index: 1, kind: input, shape index: {}]
  %s2 = inlined_call_operand.vmem [shape: f32[16,64], index: 2, kind: input, shape index: {}]
  %s3 = inlined_call_operand.vmem [shape: f32[16,64], index: 3, kind: input, shape index: {}]
  %s4 = inlined_call_operand.vmem [shape: f32[1,128], index: 4, kind: input, shape index: {}]
  %s5 = inlined_call_operand.vmem [shape: s32[2,1], index: 5, kind: input, shape index: {}]
  %s6 = inlined_call_operand.vmem [shape: f32[16,32], index: 6, kind: output, shape index: {}]
  %s7 = sld [smem:[#allocation0]]
  $region34: #{lstm_encoder_forward.2} parent=0
    _
  %s9 = ssub.s32 1, %s7
  %s10 = scalar_select 0, %s9, %s7
  // Predicated region
  $region2: #{lstm_encoder_forward.2} parent=0 // pred_check
    _
  $region3: #{lstm_encoder_forward.2} parent=0 // pred_check_branch
    %12 = sbr.rel (0) target = $region5
  $region4: #{lstm_encoder_forward.2} parent=0 // pred_region
    _
  $region5: #{lstm_encoder_forward.2} parent=0 // pred_fallthru
    _
  // Predicated region
  $region6: #{lstm_encoder_forward.2} parent=0 // pred_check
    _
  $region7: #{lstm_encoder_forward.2} parent=0 // pred_check_branch
    %14 = sbr.rel (0) target = $region9
  $region8: #{lstm_encoder_forward.2} parent=0 // pred_region
    _
  $region9: #{lstm_encoder_forward.2} parent=0 // pred_fallthru
    _
  // Predicated region
  $region10: #{lstm_encoder_forward.2} parent=0 // pred_check
    _
  $region11: #{lstm_encoder_forward.2} parent=0 // pred_check_branch
    %16 = sbr.rel (0) target = $region13
  $region12: #{lstm_encoder_forward.2} parent=0 // pred_region
    _
  $region13: #{lstm_encoder_forward.2} parent=0 // pred_fallthru
    _
  // Predicated region
  $region14: #{lstm_encoder_forward.2} parent=0 // pred_check
    _
  $region15: #{lstm_encoder_forward.2} parent=0 // pred_check_branch
    %18 = sbr.rel (0) target = $region17
  $region16: #{lstm_encoder_forward.2} parent=0 // pred_region
    _
  $region17: #{lstm_encoder_forward.2} parent=0 // pred_fallthru
    _
  // Predicated region
  $region18: #{lstm_encoder_forward.2} parent=0 // pred_check
    _
  $region19: #{lstm_encoder_forward.2} parent=0 // pred_check_branch
    %20 = sbr.rel (0) target = $region21
  $region20: #{lstm_encoder_forward.2} parent=0 // pred_region
    _
  $region21: #{lstm_encoder_forward.2} parent=0 // pred_fallthru
    _
  // Predicated region
  $region22: #{lstm_encoder_forward.2} parent=0 // pred_check
    _
  $region23: #{lstm_encoder_forward.2} parent=0 // pred_check_branch
    %22 = sbr.rel (0) target = $region25
  $region24: #{lstm_encoder_forward.2} parent=0 // pred_region
    _
  $region25: #{lstm_encoder_forward.2} parent=0 // pred_fallthru
    _
  %v23 = vld [vmem:[%s0] sm:$0xff]
  %v24 = vld [vmem:[%s0 + $0x8] sm:$0xff]
  %v25 = vld [vmem:[%s1] sm:$0xff]
  %v26 = vld [vmem:[%s1 + $0x8] sm:$0xff]
  %v27 = vld [vmem:[%s1 + $0x10] sm:$0xff]
  %v28 = vld [vmem:[%s1 + $0x18] sm:$0xff]
  %v29 = vld [vmem:[%s4] sm:$0x1]
  %v31 = vperm.slane %v29, 0
  %vm33 = vcmask 261120
  %v35 = vsel %vm33, %v23, 0
  %v38 = vsel %vm33, %v24, 0
  %40 = vmatpush.msra.mxu0 0.0
  %41 = vmatpush.msra.mxu0 0.0
  %42 = vmatpush.msra.mxu0 0.0
  %43 = vmatpush.msra.mxu0 0.0
  %44 = vmatpush.msra.mxu0 0.0
  %45 = vmatpush.msra.mxu0 0.0
  %46 = vmatpush.msra.mxu0 0.0
  %47 = vmatpush.msra.mxu0 0.0
  %48 = vmatpush.msra.mxu0 0.0
  %49 = vmatpush.msra.mxu0 0.0
  %50 = vmatpush.msra.mxu0 0.0
  %51 = vmatpush.msra.mxu0 0.0
  %52 = vmatpush.msra.mxu0 %v28
  %53 = vmatpush.msra.mxu0 %v27
  %54 = vmatpush.msra.mxu0 %v26
  %55 = vmatpush.msra.mxu0 %v25
  %56 = vmatmul.f32.gmra.mxu0 %v35
  %v57 = vpop.f32.mrf.mxu0
  %v58 = vadd.f32 %v31, %v57
  %59 = vmatmul.f32.gmra.mxu0 %v38
  %v60 = vpop.f32.mrf.mxu0
  %v61 = vadd.f32 %v31, %v60
  %62 = vdwg.mxu0
  %vm63 = vcmask 523264
  %64 = vst.msk [vmem:[#allocation2] sm:$0xff] %vm63, %v58
  %65 = vst.msk [vmem:[#allocation2 + $0x8] sm:$0xff] %vm63, %v61
  %68 = vrot.lane.b32.xlu0 %v58, 64
  %v69 = vpop.permute.xlu0 %68
  %70 = vrot.lane.b32.xlu0 %v61, 64
  %v71 = vpop.permute.xlu0 %70
  %74 = vst.msk [vmem:[#allocation3] sm:$0xff] %vm63, %v69
  %75 = vst.msk [vmem:[#allocation3 + $0x8] sm:$0xff] %vm63, %v71
  %v76 = vld [vmem:[%s2] sm:$0xff]
  %v77 = vld [vmem:[%s2 + $0x8] sm:$0xff]
  %v78 = vld [vmem:[%s3] sm:$0xff]
  %v79 = vld [vmem:[%s3 + $0x8] sm:$0xff]
  %v80 = vld [vmem:[%s5] sm:$0x3]
  %v81 = vld [vmem:[#allocation2] sm:$0x3]
  %vm82 = vcmask 130048
  %v84 = vsel %vm82, 0.0, 0
  %86 = vmatpush.msra.mxu0 0.0
  %87 = vmatpush.msra.mxu0 0.0
  %88 = vmatpush.msra.mxu0 0.0
  %89 = vmatpush.msra.mxu0 0.0
  %90 = vmatpush.msra.mxu0 0.0
  %91 = vmatpush.msra.mxu0 0.0
  %92 = vmatpush.msra.mxu0 0.0
  %93 = vmatpush.msra.mxu0 0.0
  %94 = vmatpush.msra.mxu0 0.0
  %95 = vmatpush.msra.mxu0 0.0
  %96 = vmatpush.msra.mxu0 0.0
  %97 = vmatpush.msra.mxu0 0.0
  %98 = vmatpush.msra.mxu0 0.0
  %99 = vmatpush.msra.mxu0 0.0
  %100 = vmatpush.msra.mxu0 %v77
  %101 = vmatpush.msra.mxu0 %v76
  %102 = vmatmul.f32.gmra.mxu0 %v84
  %v103 = vpop.f32.mrf.mxu0
  %v104 = vadd.f32 0.0, %v103
  %105 = vdwg.mxu0
  %v106 = vadd.f32 %v81, %v104
  %v107 = vxor.u32 %v106, 2147483648
  %v108 = vmul.f32 %v107, 1.442695
  %v109 = vpow.pop %v108
  %v110 = vadd.f32 %v109, 1.0
  %v111 = vrcp.pop %v110
  %v112 = vmul.f32 %v110, %v111
  %v113 = vsub.f32 1.0, %v112
  %v114 = vmul.f32 %v111, %v113
  %v115 = vadd.f32 %v111, %v114
  %vm116 = vweird.f32 %v110
  %vm117 = vweird.f32 %v111
  %vm118 = vmor %vm116, %vm117
  %v119 = vsel %vm118, %v111, %v115
  %v120 = vand.u32 2147483647, %v110
  %vm121 = vcmp.eq.f32.partialorder %v120, 8.507059e+37
  %v122 = vand.u32 %v110, 2147483648
  %v123 = vor.u32 1.1754944e-38, %v122
  %v124 = vsel %vm121, %v123, %v119
  %v125 = vmul.f32 1.0, %v124
  %v126 = vtanh.pop %v106
  %v127 = vmul.f32 %v125, 0.0
  %129 = vrot.lane.b32.xlu0 %v126, 96
  %v130 = vpop.permute.xlu0 %129
  %v132 = vmul.f32 %v125, %v130
  %134 = vrot.lane.b32.xlu0 %v132, 16
  %v135 = vpop.permute.xlu0 %134
  %v137 = vadd.f32 %v127, %v135
  %v138 = vtanh.pop %v137
  %140 = vrot.lane.b32.xlu0 %v138, 32
  %v141 = vpop.permute.xlu0 %140
  %v143 = vmul.f32 %v125, %v141
  %vm144 = vcmp.gt.s32.totalorder %v80, 0
  %v145 = vld [vmem:[#allocation3 + $0xe] sm:$0x3]
  %146 = vmatpush.msra.mxu0 0.0
  %147 = vmatpush.msra.mxu0 0.0
  %148 = vmatpush.msra.mxu0 0.0
  %149 = vmatpush.msra.mxu0 0.0
  %150 = vmatpush.msra.mxu0 0.0
  %151 = vmatpush.msra.mxu0 0.0
  %152 = vmatpush.msra.mxu0 0.0
  %153 = vmatpush.msra.mxu0 0.0
  %154 = vmatpush.msra.mxu0 0.0
  %155 = vmatpush.msra.mxu0 0.0
  %156 = vmatpush.msra.mxu0 0.0
  %157 = vmatpush.msra.mxu0 0.0
  %158 = vmatpush.msra.mxu0 0.0
  %159 = vmatpush.msra.mxu0 0.0
  %160 = vmatpush.msra.mxu0 %v79
  %161 = vmatpush.msra.mxu0 %v78
  %162 = vmatmul.f32.gmra.mxu0 %v84
  %v163 = vpop.f32.mrf.mxu0
  %v164 = vadd.f32 0.0, %v163
  %165 = vdwg.mxu0
  %v166 = vadd.f32 %v145, %v164
  %v167 = vxor.u32 %v166, 2147483648
  %v168 = vmul.f32 %v167, 1.442695
  %v169 = vpow.pop %v168
  %v170 = vadd.f32 %v169, 1.0
  %v171 = vrcp.pop %v170
  %v172 = vmul.f32 %v170, %v171
  %v173 = vsub.f32 1.0, %v172
  %v174 = vmul.f32 %v171, %v173
  %v175 = vadd.f32 %v171, %v174
  %vm176 = vweird.f32 %v170
  %vm177 = vweird.f32 %v171
  %vm178 = vmor %vm176, %vm177
  %v179 = vsel %vm178, %v171, %v175
  %v180 = vand.u32 2147483647, %v170
  %vm181 = vcmp.eq.f32.partialorder %v180, 8.507059e+37
  %v182 = vand.u32 %v170, 2147483648
  %v183 = vor.u32 1.1754944e-38, %v182
  %v184 = vsel %vm181, %v183, %v179
  %v185 = vmul.f32 1.0, %v184
  %v186 = vtanh.pop %v166
  %v187 = vmul.f32 %v185, 0.0
  %189 = vrot.lane.b32.xlu0 %v186, 96
  %v190 = vpop.permute.xlu0 %189
  %v192 = vmul.f32 %v185, %v190
  %194 = vrot.lane.b32.xlu0 %v192, 16
  %v195 = vpop.permute.xlu0 %194
  %v197 = vadd.f32 %v187, %v195
  %v198 = vtanh.pop %v197
  %200 = vrot.lane.b32.xlu0 %v198, 32
  %v201 = vpop.permute.xlu0 %200
  %v203 = vmul.f32 %v185, %v201
  %vm204 = vcmp.gt.s32.totalorder %v80, 7
  %v205 = vsel %vm144, 1, 0
  %206 = vset.pattern.permute.xlu0 0
  %207 = vperm.xlu0 %206, %v205
  %v208 = vpop.permute.xlu0 %207
  %vm209 = vcmp.eq.s32.totalorder %v208, 1
  %v210 = vsel %vm209, %v143, 0.0
  %212 = vrot.lane.b32.xlu0 %v210, 80
  %v213 = vpop.permute.xlu0 %212
  %vm215 = vcmask 123904
  %216 = vst.msk [vmem:[#allocation4] sm:$0x3] %vm215, %v213
  %v217 = vsel %vm204, 1, 0
  %218 = vset.pattern.permute.xlu0 0
  %219 = vperm.xlu0 %218, %v217
  %v220 = vpop.permute.xlu0 %219
  %vm221 = vcmp.eq.s32.totalorder %v220, 1
  %v222 = vsel %vm221, %v203, 0.0
  %224 = vrot.lane.b32.xlu0 %v222, 80
  %v225 = vpop.permute.xlu0 %224
  %227 = vst.msk [vmem:[#allocation5 + $0xe] sm:$0x3] %vm215, %v225
  %v228 = vsel %vm209, %v137, 0.0
  %v229 = vsel %vm221, %v197, 0.0
  %v230 = vld [vmem:[#allocation2 + $0x2] sm:$0x3]
  %v231 = vsel %vm82, %v213, 0
  %233 = vmatpush.msra.mxu0 0.0
  %234 = vmatpush.msra.mxu0 0.0
  %235 = vmatpush.msra.mxu0 0.0
  %236 = vmatpush.msra.mxu0 0.0
  %237 = vmatpush.msra.mxu0 0.0
  %238 = vmatpush.msra.mxu0 0.0
  %239 = vmatpush.msra.mxu0 0.0
  %240 = vmatpush.msra.mxu0 0.0
  %241 = vmatpush.msra.mxu0 0.0
  %242 = vmatpush.msra.mxu0 0.0
  %243 = vmatpush.msra.mxu0 0.0
  %244 = vmatpush.msra.mxu0 0.0
  %245 = vmatpush.msra.mxu0 0.0
  %246 = vmatpush.msra.mxu0 0.0
  %247 = vmatpush.msra.mxu0 %v77
  %248 = vmatpush.msra.mxu0 %v76
  %249 = vmatmul.f32.gmra.mxu0 %v231
  %v250 = vpop.f32.mrf.mxu0
  %v251 = vadd.f32 0.0, %v250
  %252 = vdwg.mxu0
  %v253 = vadd.f32 %v230, %v251
  %v254 = vxor.u32 %v253, 2147483648
  %v255 = vmul.f32 %v254, 1.442695
  %v256 = vpow.pop %v255
  %v257 = vadd.f32 %v256, 1.0
  %v258 = vrcp.pop %v257
  %v259 = vmul.f32 %v257, %v258
  %v260 = vsub.f32 1.0, %v259
  %v261 = vmul.f32 %v258, %v260
  %v262 = vadd.f32 %v258, %v261
  %vm263 = vweird.f32 %v257
  %vm264 = vweird.f32 %v258
  %vm265 = vmor %vm263, %vm264
  %v266 = vsel %vm265, %v258, %v262
  %v267 = vand.u32 2147483647, %v257
  %vm268 = vcmp.eq.f32.partialorder %v267, 8.507059e+37
  %v269 = vand.u32 %v257, 2147483648
  %v270 = vor.u32 1.1754944e-38, %v269
  %v271 = vsel %vm268, %v270, %v266
  %v272 = vmul.f32 1.0, %v271
  %v273 = vtanh.pop %v253
  %v274 = vmul.f32 %v272, %v228
  %276 = vrot.lane.b32.xlu0 %v273, 96
  %v277 = vpop.permute.xlu0 %276
  %v279 = vmul.f32 %v272, %v277
  %281 = vrot.lane.b32.xlu0 %v279, 16
  %v282 = vpop.permute.xlu0 %281
  %v284 = vadd.f32 %v274, %v282
  %v285 = vtanh.pop %v284
  %287 = vrot.lane.b32.xlu0 %v285, 32
  %v288 = vpop.permute.xlu0 %287
  %v290 = vmul.f32 %v272, %v288
  %vm291 = vcmp.gt.s32.totalorder %v80, 1
  %v292 = vld [vmem:[#allocation3 + $0xc] sm:$0x3]
  %v293 = vsel %vm82, %v225, 0
  %295 = vmatpush.msra.mxu0 0.0
  %296 = vmatpush.msra.mxu0 0.0
  %297 = vmatpush.msra.mxu0 0.0
  %298 = vmatpush.msra.mxu0 0.0
  %299 = vmatpush.msra.mxu0 0.0
  %300 = vmatpush.msra.mxu0 0.0
  %301 = vmatpush.msra.mxu0 0.0
  %302 = vmatpush.msra.mxu0 0.0
  %303 = vmatpush.msra.mxu0 0.0
  %304 = vmatpush.msra.mxu0 0.0
  %305 = vmatpush.msra.mxu0 0.0
  %306 = vmatpush.msra.mxu0 0.0
  %307 = vmatpush.msra.mxu0 0.0
  %308 = vmatpush.msra.mxu0 0.0
  %309 = vmatpush.msra.mxu0 %v79
  %310 = vmatpush.msra.mxu0 %v78
  %311 = vmatmul.f32.gmra.mxu0 %v293
  %v312 = vpop.f32.mrf.mxu0
  %v313 = vadd.f32 0.0, %v312
  %314 = vdwg.mxu0
  %v315 = vadd.f32 %v292, %v313
  %v316 = vxor.u32 %v315, 2147483648
  %v317 = vmul.f32 %v316, 1.442695
  %v318 = vpow.pop %v317
  %v319 = vadd.f32 %v318, 1.0
  %v320 = vrcp.pop %v319
  %v321 = vmul.f32 %v319, %v320
  %v322 = vsub.f32 1.0, %v321
  %v323 = vmul.f32 %v320, %v322
  %v324 = vadd.f32 %v320, %v323
  %vm325 = vweird.f32 %v319
  %vm326 = vweird.f32 %v320
  %vm327 = vmor %vm325, %vm326
  %v328 = vsel %vm327, %v320, %v324
  %v329 = vand.u32 2147483647, %v319
  %vm330 = vcmp.eq.f32.partialorder %v329, 8.507059e+37
  %v331 = vand.u32 %v319, 2147483648
  %v332 = vor.u32 1.1754944e-38, %v331
  %v333 = vsel %vm330, %v332, %v328
  %v334 = vmul.f32 1.0, %v333
  %v335 = vtanh.pop %v315
  %v336 = vmul.f32 %v334, %v229
  %338 = vrot.lane.b32.xlu0 %v335, 96
  %v339 = vpop.permute.xlu0 %338
  %v341 = vmul.f32 %v334, %v339
  %343 = vrot.lane.b32.xlu0 %v341, 16
  %v344 = vpop.permute.xlu0 %343
  %v346 = vadd.f32 %v336, %v344
  %v347 = vtanh.pop %v346
  %349 = vrot.lane.b32.xlu0 %v347, 32
  %v350 = vpop.permute.xlu0 %349
  %v352 = vmul.f32 %v334, %v350
  %vm353 = vcmp.gt.s32.totalorder %v80, 6
  %v354 = vsel %vm291, 1, 0
  %355 = vset.pattern.permute.xlu0 0
  %356 = vperm.xlu0 %355, %v354
  %v357 = vpop.permute.xlu0 %356
  %vm358 = vcmp.eq.s32.totalorder %v357, 1
  %v359 = vsel %vm358, %v290, 0.0
  %361 = vrot.lane.b32.xlu0 %v359, 80
  %v362 = vpop.permute.xlu0 %361
  %364 = vst.msk [vmem:[#allocation4 + $0x2] sm:$0x3] %vm215, %v362
  %v365 = vsel %vm353, 1, 0
  %366 = vset.pattern.permute.xlu0 0
  %367 = vperm.xlu0 %366, %v365
  %v368 = vpop.permute.xlu0 %367
  %vm369 = vcmp.eq.s32.totalorder %v368, 1
  %v370 = vsel %vm369, %v352, 0.0
  %372 = vrot.lane.b32.xlu0 %v370, 80
  %v373 = vpop.permute.xlu0 %372
  %375 = vst.msk [vmem:[#allocation5 + $0xc] sm:$0x3] %vm215, %v373
  %v376 = vsel %vm358, %v290, %v210
  %v377 = vsel %vm358, %v284, %v228
  %v378 = vsel %vm369, %v352, %v222
  %v379 = vsel %vm369, %v346, %v229
  %v380 = vld [vmem:[#allocation2 + $0x4] sm:$0x3]
  %382 = vrot.lane.b32.xlu0 %v376, 80
  %v383 = vpop.permute.xlu0 %382
  %v384 = vsel %vm82, %v383, 0
  %386 = vmatpush.msra.mxu0 0.0
  %387 = vmatpush.msra.mxu0 0.0
  %388 = vmatpush.msra.mxu0 0.0
  %389 = vmatpush.msra.mxu0 0.0
  %390 = vmatpush.msra.mxu0 0.0
  %391 = vmatpush.msra.mxu0 0.0
  %392 = vmatpush.msra.mxu0 0.0
  %393 = vmatpush.msra.mxu0 0.0
  %394 = vmatpush.msra.mxu0 0.0
  %395 = vmatpush.msra.mxu0 0.0
  %396 = vmatpush.msra.mxu0 0.0
  %397 = vmatpush.msra.mxu0 0.0
  %398 = vmatpush.msra.mxu0 0.0
  %399 = vmatpush.msra.mxu0 0.0
  %400 = vmatpush.msra.mxu0 %v77
  %401 = vmatpush.msra.mxu0 %v76
  %402 = vmatmul.f32.gmra.mxu0 %v384
  %v403 = vpop.f32.mrf.mxu0
  %v404 = vadd.f32 0.0, %v403
  %405 = vdwg.mxu0
  %v406 = vadd.f32 %v380, %v404
  %v407 = vxor.u32 %v406, 2147483648
  %v408 = vmul.f32 %v407, 1.442695
  %v409 = vpow.pop %v408
  %v410 = vadd.f32 %v409, 1.0
  %v411 = vrcp.pop %v410
  %v412 = vmul.f32 %v410, %v411
  %v413 = vsub.f32 1.0, %v412
  %v414 = vmul.f32 %v411, %v413
  %v415 = vadd.f32 %v411, %v414
  %vm416 = vweird.f32 %v410
  %vm417 = vweird.f32 %v411
  %vm418 = vmor %vm416, %vm417
  %v419 = vsel %vm418, %v411, %v415
  %v420 = vand.u32 2147483647, %v410
  %vm421 = vcmp.eq.f32.partialorder %v420, 8.507059e+37
  %v422 = vand.u32 %v410, 2147483648
  %v423 = vor.u32 1.1754944e-38, %v422
  %v424 = vsel %vm421, %v423, %v419
  %v425 = vmul.f32 1.0, %v424
  %v426 = vtanh.pop %v406
  %v427 = vmul.f32 %v425, %v377
  %429 = vrot.lane.b32.xlu0 %v426, 96
  %v430 = vpop.permute.xlu0 %429
  %v432 = vmul.f32 %v425, %v430
  %434 = vrot.lane.b32.xlu0 %v432, 16
  %v435 = vpop.permute.xlu0 %434
  %v437 = vadd.f32 %v427, %v435
  %v438 = vtanh.pop %v437
  %440 = vrot.lane.b32.xlu0 %v438, 32
  %v441 = vpop.permute.xlu0 %440
  %v443 = vmul.f32 %v425, %v441
  %vm444 = vcmp.gt.s32.totalorder %v80, 2
  %v445 = vld [vmem:[#allocation3 + $0xa] sm:$0x3]
  %447 = vrot.lane.b32.xlu0 %v378, 80
  %v448 = vpop.permute.xlu0 %447
  %v449 = vsel %vm82, %v448, 0
  %451 = vmatpush.msra.mxu0 0.0
  %452 = vmatpush.msra.mxu0 0.0
  %453 = vmatpush.msra.mxu0 0.0
  %454 = vmatpush.msra.mxu0 0.0
  %455 = vmatpush.msra.mxu0 0.0
  %456 = vmatpush.msra.mxu0 0.0
  %457 = vmatpush.msra.mxu0 0.0
  %458 = vmatpush.msra.mxu0 0.0
  %459 = vmatpush.msra.mxu0 0.0
  %460 = vmatpush.msra.mxu0 0.0
  %461 = vmatpush.msra.mxu0 0.0
  %462 = vmatpush.msra.mxu0 0.0
  %463 = vmatpush.msra.mxu0 0.0
  %464 = vmatpush.msra.mxu0 0.0
  %465 = vmatpush.msra.mxu0 %v79
  %466 = vmatpush.msra.mxu0 %v78
  %467 = vmatmul.f32.gmra.mxu0 %v449
  %v468 = vpop.f32.mrf.mxu0
  %v469 = vadd.f32 0.0, %v468
  %470 = vdwg.mxu0
  %v471 = vadd.f32 %v445, %v469
  %v472 = vxor.u32 %v471, 2147483648
  %v473 = vmul.f32 %v472, 1.442695
  %v474 = vpow.pop %v473
  %v475 = vadd.f32 %v474, 1.0
  %v476 = vrcp.pop %v475
  %v477 = vmul.f32 %v475, %v476
  %v478 = vsub.f32 1.0, %v477
  %v479 = vmul.f32 %v476, %v478
  %v480 = vadd.f32 %v476, %v479
  %vm481 = vweird.f32 %v475
  %vm482 = vweird.f32 %v476
  %vm483 = vmor %vm481, %vm482
  %v484 = vsel %vm483, %v476, %v480
  %v485 = vand.u32 2147483647, %v475
  %vm486 = vcmp.eq.f32.partialorder %v485, 8.507059e+37
  %v487 = vand.u32 %v475, 2147483648
  %v488 = vor.u32 1.1754944e-38, %v487
  %v489 = vsel %vm486, %v488, %v484
  %v490 = vmul.f32 1.0, %v489
  %v491 = vtanh.pop %v471
  %v492 = vmul.f32 %v490, %v379
  %494 = vrot.lane.b32.xlu0 %v491, 96
  %v495 = vpop.permute.xlu0 %494
  %v497 = vmul.f32 %v490, %v495
  %499 = vrot.lane.b32.xlu0 %v497, 16
  %v500 = vpop.permute.xlu0 %499
  %v502 = vadd.f32 %v492, %v500
  %v503 = vtanh.pop %v502
  %505 = vrot.lane.b32.xlu0 %v503, 32
  %v506 = vpop.permute.xlu0 %505
  %v508 = vmul.f32 %v490, %v506
  %vm509 = vcmp.gt.s32.totalorder %v80, 5
  %v510 = vsel %vm444, 1, 0
  %511 = vset.pattern.permute.xlu0 0
  %512 = vperm.xlu0 %511, %v510
  %v513 = vpop.permute.xlu0 %512
  %vm514 = vcmp.eq.s32.totalorder %v513, 1
  %v515 = vsel %vm514, %v443, 0.0
  %517 = vrot.lane.b32.xlu0 %v515, 80
  %v518 = vpop.permute.xlu0 %517
  %520 = vst.msk [vmem:[#allocation4 + $0x4] sm:$0x3] %vm215, %v518
  %v521 = vsel %vm509, 1, 0
  %522 = vset.pattern.permute.xlu0 0
  %523 = vperm.xlu0 %522, %v521
  %v524 = vpop.permute.xlu0 %523
  %vm525 = vcmp.eq.s32.totalorder %v524, 1
  %v526 = vsel %vm525, %v508, 0.0
  %528 = vrot.lane.b32.xlu0 %v526, 80
  %v529 = vpop.permute.xlu0 %528
  %531 = vst.msk [vmem:[#allocation5 + $0xa] sm:$0x3] %vm215, %v529
  %v532 = vsel %vm514, %v443, %v376
  %v533 = vsel %vm514, %v437, %v377
  %v534 = vsel %vm525, %v508, %v378
  %v535 = vsel %vm525, %v502, %v379
  %v536 = vld [vmem:[#allocation2 + $0x6] sm:$0x3]
  %538 = vrot.lane.b32.xlu0 %v532, 80
  %v539 = vpop.permute.xlu0 %538
  %v540 = vsel %vm82, %v539, 0
  %542 = vmatpush.msra.mxu0 0.0
  %543 = vmatpush.msra.mxu0 0.0
  %544 = vmatpush.msra.mxu0 0.0
  %545 = vmatpush.msra.mxu0 0.0
  %546 = vmatpush.msra.mxu0 0.0
  %547 = vmatpush.msra.mxu0 0.0
  %548 = vmatpush.msra.mxu0 0.0
  %549 = vmatpush.msra.mxu0 0.0
  %550 = vmatpush.msra.mxu0 0.0
  %551 = vmatpush.msra.mxu0 0.0
  %552 = vmatpush.msra.mxu0 0.0
  %553 = vmatpush.msra.mxu0 0.0
  %554 = vmatpush.msra.mxu0 0.0
  %555 = vmatpush.msra.mxu0 0.0
  %556 = vmatpush.msra.mxu0 %v77
  %557 = vmatpush.msra.mxu0 %v76
  %558 = vmatmul.f32.gmra.mxu0 %v540
  %v559 = vpop.f32.mrf.mxu0
  %v560 = vadd.f32 0.0, %v559
  %561 = vdwg.mxu0
  %v562 = vadd.f32 %v536, %v560
  %v563 = vxor.u32 %v562, 2147483648
  %v564 = vmul.f32 %v563, 1.442695
  %v565 = vpow.pop %v564
  %v566 = vadd.f32 %v565, 1.0
  %v567 = vrcp.pop %v566
  %v568 = vmul.f32 %v566, %v567
  %v569 = vsub.f32 1.0, %v568
  %v570 = vmul.f32 %v567, %v569
  %v571 = vadd.f32 %v567, %v570
  %vm572 = vweird.f32 %v566
  %vm573 = vweird.f32 %v567
  %vm574 = vmor %vm572, %vm573
  %v575 = vsel %vm574, %v567, %v571
  %v576 = vand.u32 2147483647, %v566
  %vm577 = vcmp.eq.f32.partialorder %v576, 8.507059e+37
  %v578 = vand.u32 %v566, 2147483648
  %v579 = vor.u32 1.1754944e-38, %v578
  %v580 = vsel %vm577, %v579, %v575
  %v581 = vmul.f32 1.0, %v580
  %v582 = vtanh.pop %v562
  %v583 = vmul.f32 %v581, %v533
  %585 = vrot.lane.b32.xlu0 %v582, 96
  %v586 = vpop.permute.xlu0 %585
  %v588 = vmul.f32 %v581, %v586
  %590 = vrot.lane.b32.xlu0 %v588, 16
  %v591 = vpop.permute.xlu0 %590
  %v593 = vadd.f32 %v583, %v591
  %v594 = vtanh.pop %v593
  %596 = vrot.lane.b32.xlu0 %v594, 32
  %v597 = vpop.permute.xlu0 %596
  %v599 = vmul.f32 %v581, %v597
  %vm600 = vcmp.gt.s32.totalorder %v80, 3
  %v601 = vld [vmem:[#allocation3 + $0x8] sm:$0x3]
  %603 = vrot.lane.b32.xlu0 %v534, 80
  %v604 = vpop.permute.xlu0 %603
  %v605 = vsel %vm82, %v604, 0
  %607 = vmatpush.msra.mxu0 0.0
  %608 = vmatpush.msra.mxu0 0.0
  %609 = vmatpush.msra.mxu0 0.0
  %610 = vmatpush.msra.mxu0 0.0
  %611 = vmatpush.msra.mxu0 0.0
  %612 = vmatpush.msra.mxu0 0.0
  %613 = vmatpush.msra.mxu0 0.0
  %614 = vmatpush.msra.mxu0 0.0
  %615 = vmatpush.msra.mxu0 0.0
  %616 = vmatpush.msra.mxu0 0.0
  %617 = vmatpush.msra.mxu0 0.0
  %618 = vmatpush.msra.mxu0 0.0
  %619 = vmatpush.msra.mxu0 0.0
  %620 = vmatpush.msra.mxu0 0.0
  %621 = vmatpush.msra.mxu0 %v79
  %622 = vmatpush.msra.mxu0 %v78
  %623 = vmatmul.f32.gmra.mxu0 %v605
  %v624 = vpop.f32.mrf.mxu0
  %v625 = vadd.f32 0.0, %v624
  %626 = vdwg.mxu0
  %v627 = vadd.f32 %v601, %v625
  %v628 = vxor.u32 %v627, 2147483648
  %v629 = vmul.f32 %v628, 1.442695
  %v630 = vpow.pop %v629
  %v631 = vadd.f32 %v630, 1.0
  %v632 = vrcp.pop %v631
  %v633 = vmul.f32 %v631, %v632
  %v634 = vsub.f32 1.0, %v633
  %v635 = vmul.f32 %v632, %v634
  %v636 = vadd.f32 %v632, %v635
  %vm637 = vweird.f32 %v631
  %vm638 = vweird.f32 %v632
  %vm639 = vmor %vm637, %vm638
  %v640 = vsel %vm639, %v632, %v636
  %v641 = vand.u32 2147483647, %v631
  %vm642 = vcmp.eq.f32.partialorder %v641, 8.507059e+37
  %v643 = vand.u32 %v631, 2147483648
  %v644 = vor.u32 1.1754944e-38, %v643
  %v645 = vsel %vm642, %v644, %v640
  %v646 = vmul.f32 1.0, %v645
  %v647 = vtanh.pop %v627
  %v648 = vmul.f32 %v646, %v535
  %650 = vrot.lane.b32.xlu0 %v647, 96
  %v651 = vpop.permute.xlu0 %650
  %v653 = vmul.f32 %v646, %v651
  %655 = vrot.lane.b32.xlu0 %v653, 16
  %v656 = vpop.permute.xlu0 %655
  %v658 = vadd.f32 %v648, %v656
  %v659 = vtanh.pop %v658
  %661 = vrot.lane.b32.xlu0 %v659, 32
  %v662 = vpop.permute.xlu0 %661
  %v664 = vmul.f32 %v646, %v662
  %vm665 = vcmp.gt.s32.totalorder %v80, 4
  %v666 = vsel %vm600, 1, 0
  %667 = vset.pattern.permute.xlu0 0
  %668 = vperm.xlu0 %667, %v666
  %v669 = vpop.permute.xlu0 %668
  %vm670 = vcmp.eq.s32.totalorder %v669, 1
  %v671 = vsel %vm670, %v599, 0.0
  %673 = vrot.lane.b32.xlu0 %v671, 80
  %v674 = vpop.permute.xlu0 %673
  %676 = vst.msk [vmem:[#allocation4 + $0x6] sm:$0x3] %vm215, %v674
  %v677 = vsel %vm665, 1, 0
  %678 = vset.pattern.permute.xlu0 0
  %679 = vperm.xlu0 %678, %v677
  %v680 = vpop.permute.xlu0 %679
  %vm681 = vcmp.eq.s32.totalorder %v680, 1
  %v682 = vsel %vm681, %v664, 0.0
  %684 = vrot.lane.b32.xlu0 %v682, 80
  %v685 = vpop.permute.xlu0 %684
  %687 = vst.msk [vmem:[#allocation5 + $0x8] sm:$0x3] %vm215, %v685
  %v688 = vsel %vm670, %v599, %v532
  %v689 = vsel %vm670, %v593, %v533
  %v690 = vsel %vm681, %v664, %v534
  %v691 = vsel %vm681, %v658, %v535
  %v692 = vld [vmem:[#allocation2 + $0x8] sm:$0x3]
  %694 = vrot.lane.b32.xlu0 %v688, 80
  %v695 = vpop.permute.xlu0 %694
  %v696 = vsel %vm82, %v695, 0
  %698 = vmatpush.msra.mxu0 0.0
  %699 = vmatpush.msra.mxu0 0.0
  %700 = vmatpush.msra.mxu0 0.0
  %701 = vmatpush.msra.mxu0 0.0
  %702 = vmatpush.msra.mxu0 0.0
  %703 = vmatpush.msra.mxu0 0.0
  %704 = vmatpush.msra.mxu0 0.0
  %705 = vmatpush.msra.mxu0 0.0
  %706 = vmatpush.msra.mxu0 0.0
  %707 = vmatpush.msra.mxu0 0.0
  %708 = vmatpush.msra.mxu0 0.0
  %709 = vmatpush.msra.mxu0 0.0
  %710 = vmatpush.msra.mxu0 0.0
  %711 = vmatpush.msra.mxu0 0.0
  %712 = vmatpush.msra.mxu0 %v77
  %713 = vmatpush.msra.mxu0 %v76
  %714 = vmatmul.f32.gmra.mxu0 %v696
  %v715 = vpop.f32.mrf.mxu0
  %v716 = vadd.f32 0.0, %v715
  %717 = vdwg.mxu0
  %v718 = vadd.f32 %v692, %v716
  %v719 = vxor.u32 %v718, 2147483648
  %v720 = vmul.f32 %v719, 1.442695
  %v721 = vpow.pop %v720
  %v722 = vadd.f32 %v721, 1.0
  %v723 = vrcp.pop %v722
  %v724 = vmul.f32 %v722, %v723
  %v725 = vsub.f32 1.0, %v724
  %v726 = vmul.f32 %v723, %v725
  %v727 = vadd.f32 %v723, %v726
  %vm728 = vweird.f32 %v722
  %vm729 = vweird.f32 %v723
  %vm730 = vmor %vm728, %vm729
  %v731 = vsel %vm730, %v723, %v727
  %v732 = vand.u32 2147483647, %v722
  %vm733 = vcmp.eq.f32.partialorder %v732, 8.507059e+37
  %v734 = vand.u32 %v722, 2147483648
  %v735 = vor.u32 1.1754944e-38, %v734
  %v736 = vsel %vm733, %v735, %v731
  %v737 = vmul.f32 1.0, %v736
  %v738 = vtanh.pop %v718
  %v739 = vmul.f32 %v737, %v689
  %741 = vrot.lane.b32.xlu0 %v738, 96
  %v742 = vpop.permute.xlu0 %741
  %v744 = vmul.f32 %v737, %v742
  %746 = vrot.lane.b32.xlu0 %v744, 16
  %v747 = vpop.permute.xlu0 %746
  %v749 = vadd.f32 %v739, %v747
  %v750 = vtanh.pop %v749
  %752 = vrot.lane.b32.xlu0 %v750, 32
  %v753 = vpop.permute.xlu0 %752
  %v755 = vmul.f32 %v737, %v753
  %v756 = vld [vmem:[#allocation3 + $0x6] sm:$0x3]
  %758 = vrot.lane.b32.xlu0 %v690, 80
  %v759 = vpop.permute.xlu0 %758
  %v760 = vsel %vm82, %v759, 0
  %762 = vmatpush.msra.mxu0 0.0
  %763 = vmatpush.msra.mxu0 0.0
  %764 = vmatpush.msra.mxu0 0.0
  %765 = vmatpush.msra.mxu0 0.0
  %766 = vmatpush.msra.mxu0 0.0
  %767 = vmatpush.msra.mxu0 0.0
  %768 = vmatpush.msra.mxu0 0.0
  %769 = vmatpush.msra.mxu0 0.0
  %770 = vmatpush.msra.mxu0 0.0
  %771 = vmatpush.msra.mxu0 0.0
  %772 = vmatpush.msra.mxu0 0.0
  %773 = vmatpush.msra.mxu0 0.0
  %774 = vmatpush.msra.mxu0 0.0
  %775 = vmatpush.msra.mxu0 0.0
  %776 = vmatpush.msra.mxu0 %v79
  %777 = vmatpush.msra.mxu0 %v78
  %778 = vmatmul.f32.gmra.mxu0 %v760
  %v779 = vpop.f32.mrf.mxu0
  %v780 = vadd.f32 0.0, %v779
  %781 = vdwg.mxu0
  %v782 = vadd.f32 %v756, %v780
  %v783 = vxor.u32 %v782, 2147483648
  %v784 = vmul.f32 %v783, 1.442695
  %v785 = vpow.pop %v784
  %v786 = vadd.f32 %v785, 1.0
  %v787 = vrcp.pop %v786
  %v788 = vmul.f32 %v786, %v787
  %v789 = vsub.f32 1.0, %v788
  %v790 = vmul.f32 %v787, %v789
  %v791 = vadd.f32 %v787, %v790
  %vm792 = vweird.f32 %v786
  %vm793 = vweird.f32 %v787
  %vm794 = vmor %vm792, %vm793
  %v795 = vsel %vm794, %v787, %v791
  %v796 = vand.u32 2147483647, %v786
  %vm797 = vcmp.eq.f32.partialorder %v796, 8.507059e+37
  %v798 = vand.u32 %v786, 2147483648
  %v799 = vor.u32 1.1754944e-38, %v798
  %v800 = vsel %vm797, %v799, %v795
  %v801 = vmul.f32 1.0, %v800
  %v802 = vtanh.pop %v782
  %v803 = vmul.f32 %v801, %v691
  %805 = vrot.lane.b32.xlu0 %v802, 96
  %v806 = vpop.permute.xlu0 %805
  %v808 = vmul.f32 %v801, %v806
  %810 = vrot.lane.b32.xlu0 %v808, 16
  %v811 = vpop.permute.xlu0 %810
  %v813 = vadd.f32 %v803, %v811
  %v814 = vtanh.pop %v813
  %816 = vrot.lane.b32.xlu0 %v814, 32
  %v817 = vpop.permute.xlu0 %816
  %v819 = vmul.f32 %v801, %v817
  %v820 = vsel %vm681, %v755, 0.0
  %822 = vrot.lane.b32.xlu0 %v820, 80
  %v823 = vpop.permute.xlu0 %822
  %825 = vst.msk [vmem:[#allocation4 + $0x8] sm:$0x3] %vm215, %v823
  %v826 = vsel %vm670, %v819, 0.0
  %828 = vrot.lane.b32.xlu0 %v826, 80
  %v829 = vpop.permute.xlu0 %828
  %831 = vst.msk [vmem:[#allocation5 + $0x6] sm:$0x3] %vm215, %v829
  %v832 = vsel %vm681, %v755, %v688
  %v833 = vsel %vm681, %v749, %v689
  %v834 = vsel %vm670, %v819, %v690
  %v835 = vsel %vm670, %v813, %v691
  %v836 = vld [vmem:[#allocation2 + $0xa] sm:$0x3]
  %838 = vrot.lane.b32.xlu0 %v832, 80
  %v839 = vpop.permute.xlu0 %838
  %v840 = vsel %vm82, %v839, 0
  %842 = vmatpush.msra.mxu0 0.0
  %843 = vmatpush.msra.mxu0 0.0
  %844 = vmatpush.msra.mxu0 0.0
  %845 = vmatpush.msra.mxu0 0.0
  %846 = vmatpush.msra.mxu0 0.0
  %847 = vmatpush.msra.mxu0 0.0
  %848 = vmatpush.msra.mxu0 0.0
  %849 = vmatpush.msra.mxu0 0.0
  %850 = vmatpush.msra.mxu0 0.0
  %851 = vmatpush.msra.mxu0 0.0
  %852 = vmatpush.msra.mxu0 0.0
  %853 = vmatpush.msra.mxu0 0.0
  %854 = vmatpush.msra.mxu0 0.0
  %855 = vmatpush.msra.mxu0 0.0
  %856 = vmatpush.msra.mxu0 %v77
  %857 = vmatpush.msra.mxu0 %v76
  %858 = vmatmul.f32.gmra.mxu0 %v840
  %v859 = vpop.f32.mrf.mxu0
  %v860 = vadd.f32 0.0, %v859
  %861 = vdwg.mxu0
  %v862 = vadd.f32 %v836, %v860
  %v863 = vxor.u32 %v862, 2147483648
  %v864 = vmul.f32 %v863, 1.442695
  %v865 = vpow.pop %v864
  %v866 = vadd.f32 %v865, 1.0
  %v867 = vrcp.pop %v866
  %v868 = vmul.f32 %v866, %v867
  %v869 = vsub.f32 1.0, %v868
  %v870 = vmul.f32 %v867, %v869
  %v871 = vadd.f32 %v867, %v870
  %vm872 = vweird.f32 %v866
  %vm873 = vweird.f32 %v867
  %vm874 = vmor %vm872, %vm873
  %v875 = vsel %vm874, %v867, %v871
  %v876 = vand.u32 2147483647, %v866
  %vm877 = vcmp.eq.f32.partialorder %v876, 8.507059e+37
  %v878 = vand.u32 %v866, 2147483648
  %v879 = vor.u32 1.1754944e-38, %v878
  %v880 = vsel %vm877, %v879, %v875
  %v881 = vmul.f32 1.0, %v880
  %v882 = vtanh.pop %v862
  %v883 = vmul.f32 %v881, %v833
  %885 = vrot.lane.b32.xlu0 %v882, 96
  %v886 = vpop.permute.xlu0 %885
  %v888 = vmul.f32 %v881, %v886
  %890 = vrot.lane.b32.xlu0 %v888, 16
  %v891 = vpop.permute.xlu0 %890
  %v893 = vadd.f32 %v883, %v891
  %v894 = vtanh.pop %v893
  %896 = vrot.lane.b32.xlu0 %v894, 32
  %v897 = vpop.permute.xlu0 %896
  %v899 = vmul.f32 %v881, %v897
  %v900 = vld [vmem:[#allocation3 + $0x4] sm:$0x3]
  %902 = vrot.lane.b32.xlu0 %v834, 80
  %v903 = vpop.permute.xlu0 %902
  %v904 = vsel %vm82, %v903, 0
  %906 = vmatpush.msra.mxu0 0.0
  %907 = vmatpush.msra.mxu0 0.0
  %908 = vmatpush.msra.mxu0 0.0
  %909 = vmatpush.msra.mxu0 0.0
  %910 = vmatpush.msra.mxu0 0.0
  %911 = vmatpush.msra.mxu0 0.0
  %912 = vmatpush.msra.mxu0 0.0
  %913 = vmatpush.msra.mxu0 0.0
  %914 = vmatpush.msra.mxu0 0.0
  %915 = vmatpush.msra.mxu0 0.0
  %916 = vmatpush.msra.mxu0 0.0
  %917 = vmatpush.msra.mxu0 0.0
  %918 = vmatpush.msra.mxu0 0.0
  %919 = vmatpush.msra.mxu0 0.0
  %920 = vmatpush.msra.mxu0 %v79
  %921 = vmatpush.msra.mxu0 %v78
  %922 = vmatmul.f32.gmra.mxu0 %v904
  %v923 = vpop.f32.mrf.mxu0
  %v924 = vadd.f32 0.0, %v923
  %925 = vdwg.mxu0
  %v926 = vadd.f32 %v900, %v924
  %v927 = vxor.u32 %v926, 2147483648
  %v928 = vmul.f32 %v927, 1.442695
  %v929 = vpow.pop %v928
  %v930 = vadd.f32 %v929, 1.0
  %v931 = vrcp.pop %v930
  %v932 = vmul.f32 %v930, %v931
  %v933 = vsub.f32 1.0, %v932
  %v934 = vmul.f32 %v931, %v933
  %v935 = vadd.f32 %v931, %v934
  %vm936 = vweird.f32 %v930
  %vm937 = vweird.f32 %v931
  %vm938 = vmor %vm936, %vm937
  %v939 = vsel %vm938, %v931, %v935
  %v940 = vand.u32 2147483647, %v930
  %vm941 = vcmp.eq.f32.partialorder %v940, 8.507059e+37
  %v942 = vand.u32 %v930, 2147483648
  %v943 = vor.u32 1.1754944e-38, %v942
  %v944 = vsel %vm941, %v943, %v939
  %v945 = vmul.f32 1.0, %v944
  %v946 = vtanh.pop %v926
  %v947 = vmul.f32 %v945, %v835
  %949 = vrot.lane.b32.xlu0 %v946, 96
  %v950 = vpop.permute.xlu0 %949
  %v952 = vmul.f32 %v945, %v950
  %954 = vrot.lane.b32.xlu0 %v952, 16
  %v955 = vpop.permute.xlu0 %954
  %v957 = vadd.f32 %v947, %v955
  %v958 = vtanh.pop %v957
  %960 = vrot.lane.b32.xlu0 %v958, 32
  %v961 = vpop.permute.xlu0 %960
  %v963 = vmul.f32 %v945, %v961
  %v964 = vsel %vm525, %v899, 0.0
  %966 = vrot.lane.b32.xlu0 %v964, 80
  %v967 = vpop.permute.xlu0 %966
  %969 = vst.msk [vmem:[#allocation4 + $0xa] sm:$0x3] %vm215, %v967
  %v970 = vsel %vm514, %v963, 0.0
  %972 = vrot.lane.b32.xlu0 %v970, 80
  %v973 = vpop.permute.xlu0 %972
  %975 = vst.msk [vmem:[#allocation5 + $0x4] sm:$0x3] %vm215, %v973
  %v976 = vsel %vm525, %v899, %v832
  %v977 = vsel %vm525, %v893, %v833
  %v978 = vsel %vm514, %v963, %v834
  %v979 = vsel %vm514, %v957, %v835
  %v980 = vld [vmem:[#allocation2 + $0xc] sm:$0x3]
  %982 = vrot.lane.b32.xlu0 %v976, 80
  %v983 = vpop.permute.xlu0 %982
  %v984 = vsel %vm82, %v983, 0
  %986 = vmatpush.msra.mxu0 0.0
  %987 = vmatpush.msra.mxu0 0.0
  %988 = vmatpush.msra.mxu0 0.0
  %989 = vmatpush.msra.mxu0 0.0
  %990 = vmatpush.msra.mxu0 0.0
  %991 = vmatpush.msra.mxu0 0.0
  %992 = vmatpush.msra.mxu0 0.0
  %993 = vmatpush.msra.mxu0 0.0
  %994 = vmatpush.msra.mxu0 0.0
  %995 = vmatpush.msra.mxu0 0.0
  %996 = vmatpush.msra.mxu0 0.0
  %997 = vmatpush.msra.mxu0 0.0
  %998 = vmatpush.msra.mxu0 0.0
  %999 = vmatpush.msra.mxu0 0.0
  %1000 = vmatpush.msra.mxu0 %v77
  %1001 = vmatpush.msra.mxu0 %v76
  %1002 = vmatmul.f32.gmra.mxu0 %v984
  %v1003 = vpop.f32.mrf.mxu0
  %v1004 = vadd.f32 0.0, %v1003
  %1005 = vdwg.mxu0
  %v1006 = vadd.f32 %v980, %v1004
  %v1007 = vxor.u32 %v1006, 2147483648
  %v1008 = vmul.f32 %v1007, 1.442695
  %v1009 = vpow.pop %v1008
  %v1010 = vadd.f32 %v1009, 1.0
  %v1011 = vrcp.pop %v1010
  %v1012 = vmul.f32 %v1010, %v1011
  %v1013 = vsub.f32 1.0, %v1012
  %v1014 = vmul.f32 %v1011, %v1013
  %v1015 = vadd.f32 %v1011, %v1014
  %vm1016 = vweird.f32 %v1010
  %vm1017 = vweird.f32 %v1011
  %vm1018 = vmor %vm1016, %vm1017
  %v1019 = vsel %vm1018, %v1011, %v1015
  %v1020 = vand.u32 2147483647, %v1010
  %vm1021 = vcmp.eq.f32.partialorder %v1020, 8.507059e+37
  %v1022 = vand.u32 %v1010, 2147483648
  %v1023 = vor.u32 1.1754944e-38, %v1022
  %v1024 = vsel %vm1021, %v1023, %v1019
  %v1025 = vmul.f32 1.0, %v1024
  %v1026 = vtanh.pop %v1006
  %v1027 = vmul.f32 %v1025, %v977
  %1029 = vrot.lane.b32.xlu0 %v1026, 96
  %v1030 = vpop.permute.xlu0 %1029
  %v1032 = vmul.f32 %v1025, %v1030
  %1034 = vrot.lane.b32.xlu0 %v1032, 16
  %v1035 = vpop.permute.xlu0 %1034
  %v1037 = vadd.f32 %v1027, %v1035
  %v1038 = vtanh.pop %v1037
  %1040 = vrot.lane.b32.xlu0 %v1038, 32
  %v1041 = vpop.permute.xlu0 %1040
  %v1043 = vmul.f32 %v1025, %v1041
  %v1044 = vld [vmem:[#allocation3 + $0x2] sm:$0x3]
  %1046 = vrot.lane.b32.xlu0 %v978, 80
  %v1047 = vpop.permute.xlu0 %1046
  %v1048 = vsel %vm82, %v1047, 0
  %1050 = vmatpush.msra.mxu0 0.0
  %1051 = vmatpush.msra.mxu0 0.0
  %1052 = vmatpush.msra.mxu0 0.0
  %1053 = vmatpush.msra.mxu0 0.0
  %1054 = vmatpush.msra.mxu0 0.0
  %1055 = vmatpush.msra.mxu0 0.0
  %1056 = vmatpush.msra.mxu0 0.0
  %1057 = vmatpush.msra.mxu0 0.0
  %1058 = vmatpush.msra.mxu0 0.0
  %1059 = vmatpush.msra.mxu0 0.0
  %1060 = vmatpush.msra.mxu0 0.0
  %1061 = vmatpush.msra.mxu0 0.0
  %1062 = vmatpush.msra.mxu0 0.0
  %1063 = vmatpush.msra.mxu0 0.0
  %1064 = vmatpush.msra.mxu0 %v79
  %1065 = vmatpush.msra.mxu0 %v78
  %1066 = vmatmul.f32.gmra.mxu0 %v1048
  %v1067 = vpop.f32.mrf.mxu0
  %v1068 = vadd.f32 0.0, %v1067
  %1069 = vdwg.mxu0
  %v1070 = vadd.f32 %v1044, %v1068
  %v1071 = vxor.u32 %v1070, 2147483648
  %v1072 = vmul.f32 %v1071, 1.442695
  %v1073 = vpow.pop %v1072
  %v1074 = vadd.f32 %v1073, 1.0
  %v1075 = vrcp.pop %v1074
  %v1076 = vmul.f32 %v1074, %v1075
  %v1077 = vsub.f32 1.0, %v1076
  %v1078 = vmul.f32 %v1075, %v1077
  %v1079 = vadd.f32 %v1075, %v1078
  %vm1080 = vweird.f32 %v1074
  %vm1081 = vweird.f32 %v1075
  %vm1082 = vmor %vm1080, %vm1081
  %v1083 = vsel %vm1082, %v1075, %v1079
  %v1084 = vand.u32 2147483647, %v1074
  %vm1085 = vcmp.eq.f32.partialorder %v1084, 8.507059e+37
  %v1086 = vand.u32 %v1074, 2147483648
  %v1087 = vor.u32 1.1754944e-38, %v1086
  %v1088 = vsel %vm1085, %v1087, %v1083
  %v1089 = vmul.f32 1.0, %v1088
  %v1090 = vtanh.pop %v1070
  %v1091 = vmul.f32 %v1089, %v979
  %1093 = vrot.lane.b32.xlu0 %v1090, 96
  %v1094 = vpop.permute.xlu0 %1093
  %v1096 = vmul.f32 %v1089, %v1094
  %1098 = vrot.lane.b32.xlu0 %v1096, 16
  %v1099 = vpop.permute.xlu0 %1098
  %v1101 = vadd.f32 %v1091, %v1099
  %v1102 = vtanh.pop %v1101
  %1104 = vrot.lane.b32.xlu0 %v1102, 32
  %v1105 = vpop.permute.xlu0 %1104
  %v1107 = vmul.f32 %v1089, %v1105
  %v1108 = vsel %vm369, %v1043, 0.0
  %1110 = vrot.lane.b32.xlu0 %v1108, 80
  %v1111 = vpop.permute.xlu0 %1110
  %1113 = vst.msk [vmem:[#allocation4 + $0xc] sm:$0x3] %vm215, %v1111
  %v1114 = vsel %vm358, %v1107, 0.0
  %1116 = vrot.lane.b32.xlu0 %v1114, 80
  %v1117 = vpop.permute.xlu0 %1116
  %1119 = vst.msk [vmem:[#allocation5 + $0x2] sm:$0x3] %vm215, %v1117
  %v1120 = vsel %vm369, %v1043, %v976
  %v1121 = vsel %vm369, %v1037, %v977
  %v1122 = vsel %vm358, %v1107, %v978
  %v1123 = vsel %vm358, %v1101, %v979
  %v1124 = vld [vmem:[#allocation2 + $0xe] sm:$0x3]
  %1126 = vrot.lane.b32.xlu0 %v1120, 80
  %v1127 = vpop.permute.xlu0 %1126
  %v1128 = vsel %vm82, %v1127, 0
  %1130 = vmatpush.msra.mxu0 0.0
  %1131 = vmatpush.msra.mxu0 0.0
  %1132 = vmatpush.msra.mxu0 0.0
  %1133 = vmatpush.msra.mxu0 0.0
  %1134 = vmatpush.msra.mxu0 0.0
  %1135 = vmatpush.msra.mxu0 0.0
  %1136 = vmatpush.msra.mxu0 0.0
  %1137 = vmatpush.msra.mxu0 0.0
  %1138 = vmatpush.msra.mxu0 0.0
  %1139 = vmatpush.msra.mxu0 0.0
  %1140 = vmatpush.msra.mxu0 0.0
  %1141 = vmatpush.msra.mxu0 0.0
  %1142 = vmatpush.msra.mxu0 0.0
  %1143 = vmatpush.msra.mxu0 0.0
  %1144 = vmatpush.msra.mxu0 %v77
  %1145 = vmatpush.msra.mxu0 %v76
  %1146 = vmatmul.f32.gmra.mxu0 %v1128
  %v1147 = vpop.f32.mrf.mxu0
  %v1148 = vadd.f32 0.0, %v1147
  %1149 = vdwg.mxu0
  %v1150 = vadd.f32 %v1124, %v1148
  %v1151 = vxor.u32 %v1150, 2147483648
  %v1152 = vmul.f32 %v1151, 1.442695
  %v1153 = vpow.pop %v1152
  %v1154 = vadd.f32 %v1153, 1.0
  %v1155 = vrcp.pop %v1154
  %v1156 = vmul.f32 %v1154, %v1155
  %v1157 = vsub.f32 1.0, %v1156
  %v1158 = vmul.f32 %v1155, %v1157
  %v1159 = vadd.f32 %v1155, %v1158
  %vm1160 = vweird.f32 %v1154
  %vm1161 = vweird.f32 %v1155
  %vm1162 = vmor %vm1160, %vm1161
  %v1163 = vsel %vm1162, %v1155, %v1159
  %v1164 = vand.u32 2147483647, %v1154
  %vm1165 = vcmp.eq.f32.partialorder %v1164, 8.507059e+37
  %v1166 = vand.u32 %v1154, 2147483648
  %v1167 = vor.u32 1.1754944e-38, %v1166
  %v1168 = vsel %vm1165, %v1167, %v1163
  %v1169 = vmul.f32 1.0, %v1168
  %v1170 = vtanh.pop %v1150
  %v1171 = vmul.f32 %v1169, %v1121
  %1173 = vrot.lane.b32.xlu0 %v1170, 96
  %v1174 = vpop.permute.xlu0 %1173
  %v1176 = vmul.f32 %v1169, %v1174
  %1178 = vrot.lane.b32.xlu0 %v1176, 16
  %v1179 = vpop.permute.xlu0 %1178
  %v1181 = vadd.f32 %v1171, %v1179
  %v1182 = vtanh.pop %v1181
  %1184 = vrot.lane.b32.xlu0 %v1182, 32
  %v1185 = vpop.permute.xlu0 %1184
  %v1187 = vmul.f32 %v1169, %v1185
  %v1188 = vld [vmem:[#allocation3] sm:$0x3]
  %1190 = vrot.lane.b32.xlu0 %v1122, 80
  %v1191 = vpop.permute.xlu0 %1190
  %v1192 = vsel %vm82, %v1191, 0
  %1194 = vmatpush.msra.mxu0 0.0
  %1195 = vmatpush.msra.mxu0 0.0
  %1196 = vmatpush.msra.mxu0 0.0
  %1197 = vmatpush.msra.mxu0 0.0
  %1198 = vmatpush.msra.mxu0 0.0
  %1199 = vmatpush.msra.mxu0 0.0
  %1200 = vmatpush.msra.mxu0 0.0
  %1201 = vmatpush.msra.mxu0 0.0
  %1202 = vmatpush.msra.mxu0 0.0
  %1203 = vmatpush.msra.mxu0 0.0
  %1204 = vmatpush.msra.mxu0 0.0
  %1205 = vmatpush.msra.mxu0 0.0
  %1206 = vmatpush.msra.mxu0 0.0
  %1207 = vmatpush.msra.mxu0 0.0
  %1208 = vmatpush.msra.mxu0 %v79
  %1209 = vmatpush.msra.mxu0 %v78
  %1210 = vmatmul.f32.gmra.mxu0 %v1192
  %v1211 = vpop.f32.mrf.mxu0
  %v1212 = vadd.f32 0.0, %v1211
  %1213 = vdwg.mxu0
  %v1214 = vadd.f32 %v1188, %v1212
  %v1215 = vxor.u32 %v1214, 2147483648
  %v1216 = vmul.f32 %v1215, 1.442695
  %v1217 = vpow.pop %v1216
  %v1218 = vadd.f32 %v1217, 1.0
  %v1219 = vrcp.pop %v1218
  %v1220 = vmul.f32 %v1218, %v1219
  %v1221 = vsub.f32 1.0, %v1220
  %v1222 = vmul.f32 %v1219, %v1221
  %v1223 = vadd.f32 %v1219, %v1222
  %vm1224 = vweird.f32 %v1218
  %vm1225 = vweird.f32 %v1219
  %vm1226 = vmor %vm1224, %vm1225
  %v1227 = vsel %vm1226, %v1219, %v1223
  %v1228 = vand.u32 2147483647, %v1218
  %vm1229 = vcmp.eq.f32.partialorder %v1228, 8.507059e+37
  %v1230 = vand.u32 %v1218, 2147483648
  %v1231 = vor.u32 1.1754944e-38, %v1230
  %v1232 = vsel %vm1229, %v1231, %v1227
  %v1233 = vmul.f32 1.0, %v1232
  %v1234 = vtanh.pop %v1214
  %v1235 = vmul.f32 %v1233, %v1123
  %1237 = vrot.lane.b32.xlu0 %v1234, 96
  %v1238 = vpop.permute.xlu0 %1237
  %v1240 = vmul.f32 %v1233, %v1238
  %1242 = vrot.lane.b32.xlu0 %v1240, 16
  %v1243 = vpop.permute.xlu0 %1242
  %v1245 = vadd.f32 %v1235, %v1243
  %v1246 = vtanh.pop %v1245
  %1248 = vrot.lane.b32.xlu0 %v1246, 32
  %v1249 = vpop.permute.xlu0 %1248
  %v1251 = vmul.f32 %v1233, %v1249
  %v1252 = vsel %vm221, %v1187, 0.0
  %1254 = vrot.lane.b32.xlu0 %v1252, 80
  %v1255 = vpop.permute.xlu0 %1254
  %1257 = vst.msk [vmem:[#allocation4 + $0xe] sm:$0x3] %vm215, %v1255
  %v1258 = vsel %vm209, %v1251, 0.0
  %1260 = vrot.lane.b32.xlu0 %v1258, 80
  %v1261 = vpop.permute.xlu0 %1260
  %1263 = vst.msk [vmem:[#allocation5] sm:$0x3] %vm215, %v1261
  %v1264 = vld [vmem:[#allocation4] sm:$0xff]
  %v1265 = vld [vmem:[#allocation4 + $0x8] sm:$0xff]
  %1266 = vst.msk [vmem:[%s6] sm:$0xff] %vm82, %v1264
  %1267 = vst.msk [vmem:[%s6 + $0x8] sm:$0xff] %vm82, %v1265
  %v1268 = vld [vmem:[#allocation5] sm:$0xff]
  %v1269 = vld [vmem:[#allocation5 + $0x8] sm:$0xff]
  %1272 = vrot.lane.b32.xlu0 %v1268, 16
  %v1273 = vpop.permute.xlu0 %1272
  %1274 = vrot.lane.b32.xlu0 %v1269, 16
  %v1275 = vpop.permute.xlu0 %1274
  %vm1278 = vcmask 261248
  %1279 = vst.msk [vmem:[%s6] sm:$0xff] %vm1278, %v1273
  %1280 = vst.msk [vmem:[%s6 + $0x8] sm:$0xff] %vm1278, %v1275
  // Predicated region
  $region26: #{lstm_encoder_forward.2} parent=0 // pred_check
    _
  $region27: #{lstm_encoder_forward.2} parent=0 // pred_check_branch
    %1282 = sbr.rel (0) target = $region29
  $region28: #{lstm_encoder_forward.2} parent=0 // pred_region
    _
  $region29: #{lstm_encoder_forward.2} parent=0 // pred_fallthru
    _
  // Predicated region
  $region30: #{lstm_encoder_forward.2} parent=0 // pred_check
    _
  $region31: #{lstm_encoder_forward.2} parent=0 // pred_check_branch
    %1284 = sbr.rel (0) target = $region33
  $region32: #{lstm_encoder_forward.2} parent=0 // pred_region
    _
  $region33: #{lstm_encoder_forward.2} parent=0 // pred_fallthru
    _

// kernel: lstm_encoder_forward.3
$region0: #{lstm_encoder_forward.3}
  #allocation0 [shape = 'u32[]', space=smem, size = 0x4, offset = 0x4, fixed_abs, tag = 'smem constant byte address 0x4 - core index']
  #allocation1 [shape = 'u32[72,128]{1,0:T(1,128)}', space=vmem, size = 0x9000, scoped, tag = 'internal scratch']
  #allocation2 [shape = 'f32[16,64]{1,0:T(8,128)}', space=vmem, size = 0x2000, scoped, tag = 'scratch operand']
  #allocation3 [shape = 'f32[16,64]{1,0:T(8,128)}', space=vmem, size = 0x2000, scoped, tag = 'scratch operand']
  %s0 = inlined_call_operand.vmem [shape: f32[16,32], index: 0, kind: input, shape index: {}]
  %s1 = inlined_call_operand.vmem [shape: f32[32,128], index: 1, kind: input, shape index: {}]
  %s2 = inlined_call_operand.vmem [shape: f32[16,64], index: 2, kind: input, shape index: {}]
  %s3 = inlined_call_operand.vmem [shape: f32[16,64], index: 3, kind: input, shape index: {}]
  %s4 = inlined_call_operand.vmem [shape: f32[1,128], index: 4, kind: input, shape index: {}]
  %s5 = inlined_call_operand.vmem [shape: s32[2,1], index: 5, kind: input, shape index: {}]
  %s6 = inlined_call_operand.hbm [shape: f32[2,32], index: 6, kind: output, shape index: {}]
  %s7 = sld [smem:[#allocation0]]
  $region34: #{lstm_encoder_forward.3} parent=0
    _
  %s9 = ssub.s32 1, %s7
  %s10 = scalar_select 0, %s9, %s7
  $region1: #{lstm_encoder_forward.3} parent=0
    #allocation4 [shape = 'u8[1024]{0}', space=vmem, size = 0x400, scoped, tag = 'output window, operand 0, single buffered']
    #allocation5 [shape = 's32[1]{0}', space=sflag, size = 0x4, scoped, tag = 'scoped memory for lstm_encoder_forward.3']
    %11 = vsyncpa [#allocation5], 0
    // Predicated region
    $region2: #{lstm_encoder_forward.3} parent=1 // pred_check
      _
    $region3: #{lstm_encoder_forward.3} parent=1 // pred_check_branch
      %13 = sbr.rel (0) target = $region5
    $region4: #{lstm_encoder_forward.3} parent=1 // pred_region
      _
    $region5: #{lstm_encoder_forward.3} parent=1 // pred_fallthru
      _
    // Predicated region
    $region6: #{lstm_encoder_forward.3} parent=1 // pred_check
      _
    $region7: #{lstm_encoder_forward.3} parent=1 // pred_check_branch
      %15 = sbr.rel (0) target = $region9
    $region8: #{lstm_encoder_forward.3} parent=1 // pred_region
      _
    $region9: #{lstm_encoder_forward.3} parent=1 // pred_fallthru
      _
    // Predicated region
    $region10: #{lstm_encoder_forward.3} parent=1 // pred_check
      _
    $region11: #{lstm_encoder_forward.3} parent=1 // pred_check_branch
      %17 = sbr.rel (0) target = $region13
    $region12: #{lstm_encoder_forward.3} parent=1 // pred_region
      _
    $region13: #{lstm_encoder_forward.3} parent=1 // pred_fallthru
      _
    // Predicated region
    $region14: #{lstm_encoder_forward.3} parent=1 // pred_check
      _
    $region15: #{lstm_encoder_forward.3} parent=1 // pred_check_branch
      %19 = sbr.rel (0) target = $region17
    $region16: #{lstm_encoder_forward.3} parent=1 // pred_region
      _
    $region17: #{lstm_encoder_forward.3} parent=1 // pred_fallthru
      _
    // Predicated region
    $region18: #{lstm_encoder_forward.3} parent=1 // pred_check
      _
    $region19: #{lstm_encoder_forward.3} parent=1 // pred_check_branch
      %21 = sbr.rel (0) target = $region21
    $region20: #{lstm_encoder_forward.3} parent=1 // pred_region
      _
    $region21: #{lstm_encoder_forward.3} parent=1 // pred_fallthru
      _
    // Predicated region
    $region22: #{lstm_encoder_forward.3} parent=1 // pred_check
      _
    $region23: #{lstm_encoder_forward.3} parent=1 // pred_check_branch
      %23 = sbr.rel (0) target = $region25
    $region24: #{lstm_encoder_forward.3} parent=1 // pred_region
      _
    $region25: #{lstm_encoder_forward.3} parent=1 // pred_fallthru
      _
    %v24 = vld [vmem:[%s0] sm:$0xff]
    %v25 = vld [vmem:[%s0 + $0x8] sm:$0xff]
    %v26 = vld [vmem:[%s1] sm:$0xff]
    %v27 = vld [vmem:[%s1 + $0x8] sm:$0xff]
    %v28 = vld [vmem:[%s1 + $0x10] sm:$0xff]
    %v29 = vld [vmem:[%s1 + $0x18] sm:$0xff]
    %v30 = vld [vmem:[%s4] sm:$0x1]
    %v32 = vperm.slane %v30, 0
    %vm34 = vcmask 261120
    %v36 = vsel %vm34, %v24, 0
    %v39 = vsel %vm34, %v25, 0
    %41 = vmatpush.msra.mxu0 0.0
    %42 = vmatpush.msra.mxu0 0.0
    %43 = vmatpush.msra.mxu0 0.0
    %44 = vmatpush.msra.mxu0 0.0
    %45 = vmatpush.msra.mxu0 0.0
    %46 = vmatpush.msra.mxu0 0.0
    %47 = vmatpush.msra.mxu0 0.0
    %48 = vmatpush.msra.mxu0 0.0
    %49 = vmatpush.msra.mxu0 0.0
    %50 = vmatpush.msra.mxu0 0.0
    %51 = vmatpush.msra.mxu0 0.0
    %52 = vmatpush.msra.mxu0 0.0
    %53 = vmatpush.msra.mxu0 %v29
    %54 = vmatpush.msra.mxu0 %v28
    %55 = vmatpush.msra.mxu0 %v27
    %56 = vmatpush.msra.mxu0 %v26
    %57 = vmatmul.f32.gmra.mxu0 %v36
    %v58 = vpop.f32.mrf.mxu0
    %v59 = vadd.f32 %v32, %v58
    %60 = vmatmul.f32.gmra.mxu0 %v39
    %v61 = vpop.f32.mrf.mxu0
    %v62 = vadd.f32 %v32, %v61
    %63 = vdwg.mxu0
    %vm64 = vcmask 523264
    %65 = vst.msk [vmem:[#allocation2] sm:$0xff] %vm64, %v59
    %66 = vst.msk [vmem:[#allocation2 + $0x8] sm:$0xff] %vm64, %v62
    %69 = vrot.lane.b32.xlu0 %v59, 64
    %v70 = vpop.permute.xlu0 %69
    %71 = vrot.lane.b32.xlu0 %v62, 64
    %v72 = vpop.permute.xlu0 %71
    %75 = vst.msk [vmem:[#allocation3] sm:$0xff] %vm64, %v70
    %76 = vst.msk [vmem:[#allocation3 + $0x8] sm:$0xff] %vm64, %v72
    %v77 = vld [vmem:[%s2] sm:$0xff]
    %v78 = vld [vmem:[%s2 + $0x8] sm:$0xff]
    %v79 = vld [vmem:[%s3] sm:$0xff]
    %v80 = vld [vmem:[%s3 + $0x8] sm:$0xff]
    %v81 = vld [vmem:[%s5] sm:$0x3]
    %v82 = vld [vmem:[#allocation2] sm:$0x3]
    %vm83 = vcmask 130048
    %v85 = vsel %vm83, 0.0, 0
    %87 = vmatpush.msra.mxu0 0.0
    %88 = vmatpush.msra.mxu0 0.0
    %89 = vmatpush.msra.mxu0 0.0
    %90 = vmatpush.msra.mxu0 0.0
    %91 = vmatpush.msra.mxu0 0.0
    %92 = vmatpush.msra.mxu0 0.0
    %93 = vmatpush.msra.mxu0 0.0
    %94 = vmatpush.msra.mxu0 0.0
    %95 = vmatpush.msra.mxu0 0.0
    %96 = vmatpush.msra.mxu0 0.0
    %97 = vmatpush.msra.mxu0 0.0
    %98 = vmatpush.msra.mxu0 0.0
    %99 = vmatpush.msra.mxu0 0.0
    %100 = vmatpush.msra.mxu0 0.0
    %101 = vmatpush.msra.mxu0 %v78
    %102 = vmatpush.msra.mxu0 %v77
    %103 = vmatmul.f32.gmra.mxu0 %v85
    %v104 = vpop.f32.mrf.mxu0
    %v105 = vadd.f32 0.0, %v104
    %106 = vdwg.mxu0
    %v107 = vadd.f32 %v82, %v105
    %v108 = vxor.u32 %v107, 2147483648
    %v109 = vmul.f32 %v108, 1.442695
    %v110 = vpow.pop %v109
    %v111 = vadd.f32 %v110, 1.0
    %v112 = vrcp.pop %v111
    %v113 = vmul.f32 %v111, %v112
    %v114 = vsub.f32 1.0, %v113
    %v115 = vmul.f32 %v112, %v114
    %v116 = vadd.f32 %v112, %v115
    %vm117 = vweird.f32 %v111
    %vm118 = vweird.f32 %v112
    %vm119 = vmor %vm117, %vm118
    %v120 = vsel %vm119, %v112, %v116
    %v121 = vand.u32 2147483647, %v111
    %vm122 = vcmp.eq.f32.partialorder %v121, 8.507059e+37
    %v123 = vand.u32 %v111, 2147483648
    %v124 = vor.u32 1.1754944e-38, %v123
    %v125 = vsel %vm122, %v124, %v120
    %v126 = vmul.f32 1.0, %v125
    %v127 = vtanh.pop %v107
    %v128 = vmul.f32 %v126, 0.0
    %130 = vrot.lane.b32.xlu0 %v127, 96
    %v131 = vpop.permute.xlu0 %130
    %v133 = vmul.f32 %v126, %v131
    %135 = vrot.lane.b32.xlu0 %v133, 16
    %v136 = vpop.permute.xlu0 %135
    %v138 = vadd.f32 %v128, %v136
    %v139 = vtanh.pop %v138
    %141 = vrot.lane.b32.xlu0 %v139, 32
    %v142 = vpop.permute.xlu0 %141
    %v144 = vmul.f32 %v126, %v142
    %vm145 = vcmp.gt.s32.totalorder %v81, 0
    %v146 = vld [vmem:[#allocation3 + $0xe] sm:$0x3]
    %147 = vmatpush.msra.mxu0 0.0
    %148 = vmatpush.msra.mxu0 0.0
    %149 = vmatpush.msra.mxu0 0.0
    %150 = vmatpush.msra.mxu0 0.0
    %151 = vmatpush.msra.mxu0 0.0
    %152 = vmatpush.msra.mxu0 0.0
    %153 = vmatpush.msra.mxu0 0.0
    %154 = vmatpush.msra.mxu0 0.0
    %155 = vmatpush.msra.mxu0 0.0
    %156 = vmatpush.msra.mxu0 0.0
    %157 = vmatpush.msra.mxu0 0.0
    %158 = vmatpush.msra.mxu0 0.0
    %159 = vmatpush.msra.mxu0 0.0
    %160 = vmatpush.msra.mxu0 0.0
    %161 = vmatpush.msra.mxu0 %v80
    %162 = vmatpush.msra.mxu0 %v79
    %163 = vmatmul.f32.gmra.mxu0 %v85
    %v164 = vpop.f32.mrf.mxu0
    %v165 = vadd.f32 0.0, %v164
    %166 = vdwg.mxu0
    %v167 = vadd.f32 %v146, %v165
    %v168 = vxor.u32 %v167, 2147483648
    %v169 = vmul.f32 %v168, 1.442695
    %v170 = vpow.pop %v169
    %v171 = vadd.f32 %v170, 1.0
    %v172 = vrcp.pop %v171
    %v173 = vmul.f32 %v171, %v172
    %v174 = vsub.f32 1.0, %v173
    %v175 = vmul.f32 %v172, %v174
    %v176 = vadd.f32 %v172, %v175
    %vm177 = vweird.f32 %v171
    %vm178 = vweird.f32 %v172
    %vm179 = vmor %vm177, %vm178
    %v180 = vsel %vm179, %v172, %v176
    %v181 = vand.u32 2147483647, %v171
    %vm182 = vcmp.eq.f32.partialorder %v181, 8.507059e+37
    %v183 = vand.u32 %v171, 2147483648
    %v184 = vor.u32 1.1754944e-38, %v183
    %v185 = vsel %vm182, %v184, %v180
    %v186 = vmul.f32 1.0, %v185
    %v187 = vtanh.pop %v167
    %v188 = vmul.f32 %v186, 0.0
    %190 = vrot.lane.b32.xlu0 %v187, 96
    %v191 = vpop.permute.xlu0 %190
    %v193 = vmul.f32 %v186, %v191
    %195 = vrot.lane.b32.xlu0 %v193, 16
    %v196 = vpop.permute.xlu0 %195
    %v198 = vadd.f32 %v188, %v196
    %v199 = vtanh.pop %v198
    %201 = vrot.lane.b32.xlu0 %v199, 32
    %v202 = vpop.permute.xlu0 %201
    %v204 = vmul.f32 %v186, %v202
    %vm205 = vcmp.gt.s32.totalorder %v81, 7
    %v206 = vsel %vm145, 1, 0
    %207 = vset.pattern.permute.xlu0 0
    %208 = vperm.xlu0 %207, %v206
    %v209 = vpop.permute.xlu0 %208
    %vm210 = vcmp.eq.s32.totalorder %v209, 1
    %v211 = vsel %vm210, %v144, -inf
    %v212 = vsel %vm205, 1, 0
    %213 = vset.pattern.permute.xlu0 0
    %214 = vperm.xlu0 %213, %v212
    %v215 = vpop.permute.xlu0 %214
    %vm216 = vcmp.eq.s32.totalorder %v215, 1
    %v217 = vsel %vm216, %v204, -inf
    %v218 = vsel %vm210, %v144, 0.0
    %v219 = vsel %vm210, %v138, 0.0
    %v220 = vsel %vm216, %v204, 0.0
    %v221 = vsel %vm216, %v198, 0.0
    %v222 = vld [vmem:[#allocation2 + $0x2] sm:$0x3]
    %224 = vrot.lane.b32.xlu0 %v218, 80
    %v225 = vpop.permute.xlu0 %224
    %v226 = vsel %vm83, %v225, 0
    %228 = vmatpush.msra.mxu0 0.0
    %229 = vmatpush.msra.mxu0 0.0
    %230 = vmatpush.msra.mxu0 0.0
    %231 = vmatpush.msra.mxu0 0.0
    %232 = vmatpush.msra.mxu0 0.0
    %233 = vmatpush.msra.mxu0 0.0
    %234 = vmatpush.msra.mxu0 0.0
    %235 = vmatpush.msra.mxu0 0.0
    %236 = vmatpush.msra.mxu0 0.0
    %237 = vmatpush.msra.mxu0 0.0
    %238 = vmatpush.msra.mxu0 0.0
    %239 = vmatpush.msra.mxu0 0.0
    %240 = vmatpush.msra.mxu0 0.0
    %241 = vmatpush.msra.mxu0 0.0
    %242 = vmatpush.msra.mxu0 %v78
    %243 = vmatpush.msra.mxu0 %v77
    %244 = vmatmul.f32.gmra.mxu0 %v226
    %v245 = vpop.f32.mrf.mxu0
    %v246 = vadd.f32 0.0, %v245
    %247 = vdwg.mxu0
    %v248 = vadd.f32 %v222, %v246
    %v249 = vxor.u32 %v248, 2147483648
    %v250 = vmul.f32 %v249, 1.442695
    %v251 = vpow.pop %v250
    %v252 = vadd.f32 %v251, 1.0
    %v253 = vrcp.pop %v252
    %v254 = vmul.f32 %v252, %v253
    %v255 = vsub.f32 1.0, %v254
    %v256 = vmul.f32 %v253, %v255
    %v257 = vadd.f32 %v253, %v256
    %vm258 = vweird.f32 %v252
    %vm259 = vweird.f32 %v253
    %vm260 = vmor %vm258, %vm259
    %v261 = vsel %vm260, %v253, %v257
    %v262 = vand.u32 2147483647, %v252
    %vm263 = vcmp.eq.f32.partialorder %v262, 8.507059e+37
    %v264 = vand.u32 %v252, 2147483648
    %v265 = vor.u32 1.1754944e-38, %v264
    %v266 = vsel %vm263, %v265, %v261
    %v267 = vmul.f32 1.0, %v266
    %v268 = vtanh.pop %v248
    %v269 = vmul.f32 %v267, %v219
    %271 = vrot.lane.b32.xlu0 %v268, 96
    %v272 = vpop.permute.xlu0 %271
    %v274 = vmul.f32 %v267, %v272
    %276 = vrot.lane.b32.xlu0 %v274, 16
    %v277 = vpop.permute.xlu0 %276
    %v279 = vadd.f32 %v269, %v277
    %v280 = vtanh.pop %v279
    %282 = vrot.lane.b32.xlu0 %v280, 32
    %v283 = vpop.permute.xlu0 %282
    %v285 = vmul.f32 %v267, %v283
    %vm286 = vcmp.gt.s32.totalorder %v81, 1
    %v287 = vld [vmem:[#allocation3 + $0xc] sm:$0x3]
    %289 = vrot.lane.b32.xlu0 %v220, 80
    %v290 = vpop.permute.xlu0 %289
    %v291 = vsel %vm83, %v290, 0
    %293 = vmatpush.msra.mxu0 0.0
    %294 = vmatpush.msra.mxu0 0.0
    %295 = vmatpush.msra.mxu0 0.0
    %296 = vmatpush.msra.mxu0 0.0
    %297 = vmatpush.msra.mxu0 0.0
    %298 = vmatpush.msra.mxu0 0.0
    %299 = vmatpush.msra.mxu0 0.0
    %300 = vmatpush.msra.mxu0 0.0
    %301 = vmatpush.msra.mxu0 0.0
    %302 = vmatpush.msra.mxu0 0.0
    %303 = vmatpush.msra.mxu0 0.0
    %304 = vmatpush.msra.mxu0 0.0
    %305 = vmatpush.msra.mxu0 0.0
    %306 = vmatpush.msra.mxu0 0.0
    %307 = vmatpush.msra.mxu0 %v80
    %308 = vmatpush.msra.mxu0 %v79
    %309 = vmatmul.f32.gmra.mxu0 %v291
    %v310 = vpop.f32.mrf.mxu0
    %v311 = vadd.f32 0.0, %v310
    %312 = vdwg.mxu0
    %v313 = vadd.f32 %v287, %v311
    %v314 = vxor.u32 %v313, 2147483648
    %v315 = vmul.f32 %v314, 1.442695
    %v316 = vpow.pop %v315
    %v317 = vadd.f32 %v316, 1.0
    %v318 = vrcp.pop %v317
    %v319 = vmul.f32 %v317, %v318
    %v320 = vsub.f32 1.0, %v319
    %v321 = vmul.f32 %v318, %v320
    %v322 = vadd.f32 %v318, %v321
    %vm323 = vweird.f32 %v317
    %vm324 = vweird.f32 %v318
    %vm325 = vmor %vm323, %vm324
    %v326 = vsel %vm325, %v318, %v322
    %v327 = vand.u32 2147483647, %v317
    %vm328 = vcmp.eq.f32.partialorder %v327, 8.507059e+37
    %v329 = vand.u32 %v317, 2147483648
    %v330 = vor.u32 1.1754944e-38, %v329
    %v331 = vsel %vm328, %v330, %v326
    %v332 = vmul.f32 1.0, %v331
    %v333 = vtanh.pop %v313
    %v334 = vmul.f32 %v332, %v221
    %336 = vrot.lane.b32.xlu0 %v333, 96
    %v337 = vpop.permute.xlu0 %336
    %v339 = vmul.f32 %v332, %v337
    %341 = vrot.lane.b32.xlu0 %v339, 16
    %v342 = vpop.permute.xlu0 %341
    %v344 = vadd.f32 %v334, %v342
    %v345 = vtanh.pop %v344
    %347 = vrot.lane.b32.xlu0 %v345, 32
    %v348 = vpop.permute.xlu0 %347
    %v350 = vmul.f32 %v332, %v348
    %vm351 = vcmp.gt.s32.totalorder %v81, 6
    %v352 = vmax.f32 %v211, %v285
    %v353 = vsel %vm286, 1, 0
    %354 = vset.pattern.permute.xlu0 0
    %355 = vperm.xlu0 %354, %v353
    %v356 = vpop.permute.xlu0 %355
    %vm357 = vcmp.eq.s32.totalorder %v356, 1
    %v358 = vsel %vm357, %v352, %v211
    %v359 = vmax.f32 %v217, %v350
    %v360 = vsel %vm351, 1, 0
    %361 = vset.pattern.permute.xlu0 0
    %362 = vperm.xlu0 %361, %v360
    %v363 = vpop.permute.xlu0 %362
    %vm364 = vcmp.eq.s32.totalorder %v363, 1
    %v365 = vsel %vm364, %v359, %v217
    %v366 = vsel %vm357, %v285, %v218
    %v367 = vsel %vm357, %v279, %v219
    %v368 = vsel %vm364, %v350, %v220
    %v369 = vsel %vm364, %v344, %v221
    %v370 = vld [vmem:[#allocation2 + $0x4] sm:$0x3]
    %372 = vrot.lane.b32.xlu0 %v366, 80
    %v373 = vpop.permute.xlu0 %372
    %v374 = vsel %vm83, %v373, 0
    %376 = vmatpush.msra.mxu0 0.0
    %377 = vmatpush.msra.mxu0 0.0
    %378 = vmatpush.msra.mxu0 0.0
    %379 = vmatpush.msra.mxu0 0.0
    %380 = vmatpush.msra.mxu0 0.0
    %381 = vmatpush.msra.mxu0 0.0
    %382 = vmatpush.msra.mxu0 0.0
    %383 = vmatpush.msra.mxu0 0.0
    %384 = vmatpush.msra.mxu0 0.0
    %385 = vmatpush.msra.mxu0 0.0
    %386 = vmatpush.msra.mxu0 0.0
    %387 = vmatpush.msra.mxu0 0.0
    %388 = vmatpush.msra.mxu0 0.0
    %389 = vmatpush.msra.mxu0 0.0
    %390 = vmatpush.msra.mxu0 %v78
    %391 = vmatpush.msra.mxu0 %v77
    %392 = vmatmul.f32.gmra.mxu0 %v374
    %v393 = vpop.f32.mrf.mxu0
    %v394 = vadd.f32 0.0, %v393
    %395 = vdwg.mxu0
    %v396 = vadd.f32 %v370, %v394
    %v397 = vxor.u32 %v396, 2147483648
    %v398 = vmul.f32 %v397, 1.442695
    %v399 = vpow.pop %v398
    %v400 = vadd.f32 %v399, 1.0
    %v401 = vrcp.pop %v400
    %v402 = vmul.f32 %v400, %v401
    %v403 = vsub.f32 1.0, %v402
    %v404 = vmul.f32 %v401, %v403
    %v405 = vadd.f32 %v401, %v404
    %vm406 = vweird.f32 %v400
    %vm407 = vweird.f32 %v401
    %vm408 = vmor %vm406, %vm407
    %v409 = vsel %vm408, %v401, %v405
    %v410 = vand.u32 2147483647, %v400
    %vm411 = vcmp.eq.f32.partialorder %v410, 8.507059e+37
    %v412 = vand.u32 %v400, 2147483648
    %v413 = vor.u32 1.1754944e-38, %v412
    %v414 = vsel %vm411, %v413, %v409
    %v415 = vmul.f32 1.0, %v414
    %v416 = vtanh.pop %v396
    %v417 = vmul.f32 %v415, %v367
    %419 = vrot.lane.b32.xlu0 %v416, 96
    %v420 = vpop.permute.xlu0 %419
    %v422 = vmul.f32 %v415, %v420
    %424 = vrot.lane.b32.xlu0 %v422, 16
    %v425 = vpop.permute.xlu0 %424
    %v427 = vadd.f32 %v417, %v425
    %v428 = vtanh.pop %v427
    %430 = vrot.lane.b32.xlu0 %v428, 32
    %v431 = vpop.permute.xlu0 %430
    %v433 = vmul.f32 %v415, %v431
    %vm434 = vcmp.gt.s32.totalorder %v81, 2
    %v435 = vld [vmem:[#allocation3 + $0xa] sm:$0x3]
    %437 = vrot.lane.b32.xlu0 %v368, 80
    %v438 = vpop.permute.xlu0 %437
    %v439 = vsel %vm83, %v438, 0
    %441 = vmatpush.msra.mxu0 0.0
    %442 = vmatpush.msra.mxu0 0.0
    %443 = vmatpush.msra.mxu0 0.0
    %444 = vmatpush.msra.mxu0 0.0
    %445 = vmatpush.msra.mxu0 0.0
    %446 = vmatpush.msra.mxu0 0.0
    %447 = vmatpush.msra.mxu0 0.0
    %448 = vmatpush.msra.mxu0 0.0
    %449 = vmatpush.msra.mxu0 0.0
    %450 = vmatpush.msra.mxu0 0.0
    %451 = vmatpush.msra.mxu0 0.0
    %452 = vmatpush.msra.mxu0 0.0
    %453 = vmatpush.msra.mxu0 0.0
    %454 = vmatpush.msra.mxu0 0.0
    %455 = vmatpush.msra.mxu0 %v80
    %456 = vmatpush.msra.mxu0 %v79
    %457 = vmatmul.f32.gmra.mxu0 %v439
    %v458 = vpop.f32.mrf.mxu0
    %v459 = vadd.f32 0.0, %v458
    %460 = vdwg.mxu0
    %v461 = vadd.f32 %v435, %v459
    %v462 = vxor.u32 %v461, 2147483648
    %v463 = vmul.f32 %v462, 1.442695
    %v464 = vpow.pop %v463
    %v465 = vadd.f32 %v464, 1.0
    %v466 = vrcp.pop %v465
    %v467 = vmul.f32 %v465, %v466
    %v468 = vsub.f32 1.0, %v467
    %v469 = vmul.f32 %v466, %v468
    %v470 = vadd.f32 %v466, %v469
    %vm471 = vweird.f32 %v465
    %vm472 = vweird.f32 %v466
    %vm473 = vmor %vm471, %vm472
    %v474 = vsel %vm473, %v466, %v470
    %v475 = vand.u32 2147483647, %v465
    %vm476 = vcmp.eq.f32.partialorder %v475, 8.507059e+37
    %v477 = vand.u32 %v465, 2147483648
    %v478 = vor.u32 1.1754944e-38, %v477
    %v479 = vsel %vm476, %v478, %v474
    %v480 = vmul.f32 1.0, %v479
    %v481 = vtanh.pop %v461
    %v482 = vmul.f32 %v480, %v369
    %484 = vrot.lane.b32.xlu0 %v481, 96
    %v485 = vpop.permute.xlu0 %484
    %v487 = vmul.f32 %v480, %v485
    %489 = vrot.lane.b32.xlu0 %v487, 16
    %v490 = vpop.permute.xlu0 %489
    %v492 = vadd.f32 %v482, %v490
    %v493 = vtanh.pop %v492
    %495 = vrot.lane.b32.xlu0 %v493, 32
    %v496 = vpop.permute.xlu0 %495
    %v498 = vmul.f32 %v480, %v496
    %vm499 = vcmp.gt.s32.totalorder %v81, 5
    %v500 = vmax.f32 %v358, %v433
    %v501 = vsel %vm434, 1, 0
    %502 = vset.pattern.permute.xlu0 0
    %503 = vperm.xlu0 %502, %v501
    %v504 = vpop.permute.xlu0 %503
    %vm505 = vcmp.eq.s32.totalorder %v504, 1
    %v506 = vsel %vm505, %v500, %v358
    %v507 = vmax.f32 %v365, %v498
    %v508 = vsel %vm499, 1, 0
    %509 = vset.pattern.permute.xlu0 0
    %510 = vperm.xlu0 %509, %v508
    %v511 = vpop.permute.xlu0 %510
    %vm512 = vcmp.eq.s32.totalorder %v511, 1
    %v513 = vsel %vm512, %v507, %v365
    %v514 = vsel %vm505, %v433, %v366
    %v515 = vsel %vm505, %v427, %v367
    %v516 = vsel %vm512, %v498, %v368
    %v517 = vsel %vm512, %v492, %v369
    %v518 = vld [vmem:[#allocation2 + $0x6] sm:$0x3]
    %520 = vrot.lane.b32.xlu0 %v514, 80
    %v521 = vpop.permute.xlu0 %520
    %v522 = vsel %vm83, %v521, 0
    %524 = vmatpush.msra.mxu0 0.0
    %525 = vmatpush.msra.mxu0 0.0
    %526 = vmatpush.msra.mxu0 0.0
    %527 = vmatpush.msra.mxu0 0.0
    %528 = vmatpush.msra.mxu0 0.0
    %529 = vmatpush.msra.mxu0 0.0
    %530 = vmatpush.msra.mxu0 0.0
    %531 = vmatpush.msra.mxu0 0.0
    %532 = vmatpush.msra.mxu0 0.0
    %533 = vmatpush.msra.mxu0 0.0
    %534 = vmatpush.msra.mxu0 0.0
    %535 = vmatpush.msra.mxu0 0.0
    %536 = vmatpush.msra.mxu0 0.0
    %537 = vmatpush.msra.mxu0 0.0
    %538 = vmatpush.msra.mxu0 %v78
    %539 = vmatpush.msra.mxu0 %v77
    %540 = vmatmul.f32.gmra.mxu0 %v522
    %v541 = vpop.f32.mrf.mxu0
    %v542 = vadd.f32 0.0, %v541
    %543 = vdwg.mxu0
    %v544 = vadd.f32 %v518, %v542
    %v545 = vxor.u32 %v544, 2147483648
    %v546 = vmul.f32 %v545, 1.442695
    %v547 = vpow.pop %v546
    %v548 = vadd.f32 %v547, 1.0
    %v549 = vrcp.pop %v548
    %v550 = vmul.f32 %v548, %v549
    %v551 = vsub.f32 1.0, %v550
    %v552 = vmul.f32 %v549, %v551
    %v553 = vadd.f32 %v549, %v552
    %vm554 = vweird.f32 %v548
    %vm555 = vweird.f32 %v549
    %vm556 = vmor %vm554, %vm555
    %v557 = vsel %vm556, %v549, %v553
    %v558 = vand.u32 2147483647, %v548
    %vm559 = vcmp.eq.f32.partialorder %v558, 8.507059e+37
    %v560 = vand.u32 %v548, 2147483648
    %v561 = vor.u32 1.1754944e-38, %v560
    %v562 = vsel %vm559, %v561, %v557
    %v563 = vmul.f32 1.0, %v562
    %v564 = vtanh.pop %v544
    %v565 = vmul.f32 %v563, %v515
    %567 = vrot.lane.b32.xlu0 %v564, 96
    %v568 = vpop.permute.xlu0 %567
    %v570 = vmul.f32 %v563, %v568
    %572 = vrot.lane.b32.xlu0 %v570, 16
    %v573 = vpop.permute.xlu0 %572
    %v575 = vadd.f32 %v565, %v573
    %v576 = vtanh.pop %v575
    %578 = vrot.lane.b32.xlu0 %v576, 32
    %v579 = vpop.permute.xlu0 %578
    %v581 = vmul.f32 %v563, %v579
    %vm582 = vcmp.gt.s32.totalorder %v81, 3
    %v583 = vld [vmem:[#allocation3 + $0x8] sm:$0x3]
    %585 = vrot.lane.b32.xlu0 %v516, 80
    %v586 = vpop.permute.xlu0 %585
    %v587 = vsel %vm83, %v586, 0
    %589 = vmatpush.msra.mxu0 0.0
    %590 = vmatpush.msra.mxu0 0.0
    %591 = vmatpush.msra.mxu0 0.0
    %592 = vmatpush.msra.mxu0 0.0
    %593 = vmatpush.msra.mxu0 0.0
    %594 = vmatpush.msra.mxu0 0.0
    %595 = vmatpush.msra.mxu0 0.0
    %596 = vmatpush.msra.mxu0 0.0
    %597 = vmatpush.msra.mxu0 0.0
    %598 = vmatpush.msra.mxu0 0.0
    %599 = vmatpush.msra.mxu0 0.0
    %600 = vmatpush.msra.mxu0 0.0
    %601 = vmatpush.msra.mxu0 0.0
    %602 = vmatpush.msra.mxu0 0.0
    %603 = vmatpush.msra.mxu0 %v80
    %604 = vmatpush.msra.mxu0 %v79
    %605 = vmatmul.f32.gmra.mxu0 %v587
    %v606 = vpop.f32.mrf.mxu0
    %v607 = vadd.f32 0.0, %v606
    %608 = vdwg.mxu0
    %v609 = vadd.f32 %v583, %v607
    %v610 = vxor.u32 %v609, 2147483648
    %v611 = vmul.f32 %v610, 1.442695
    %v612 = vpow.pop %v611
    %v613 = vadd.f32 %v612, 1.0
    %v614 = vrcp.pop %v613
    %v615 = vmul.f32 %v613, %v614
    %v616 = vsub.f32 1.0, %v615
    %v617 = vmul.f32 %v614, %v616
    %v618 = vadd.f32 %v614, %v617
    %vm619 = vweird.f32 %v613
    %vm620 = vweird.f32 %v614
    %vm621 = vmor %vm619, %vm620
    %v622 = vsel %vm621, %v614, %v618
    %v623 = vand.u32 2147483647, %v613
    %vm624 = vcmp.eq.f32.partialorder %v623, 8.507059e+37
    %v625 = vand.u32 %v613, 2147483648
    %v626 = vor.u32 1.1754944e-38, %v625
    %v627 = vsel %vm624, %v626, %v622
    %v628 = vmul.f32 1.0, %v627
    %v629 = vtanh.pop %v609
    %v630 = vmul.f32 %v628, %v517
    %632 = vrot.lane.b32.xlu0 %v629, 96
    %v633 = vpop.permute.xlu0 %632
    %v635 = vmul.f32 %v628, %v633
    %637 = vrot.lane.b32.xlu0 %v635, 16
    %v638 = vpop.permute.xlu0 %637
    %v640 = vadd.f32 %v630, %v638
    %v641 = vtanh.pop %v640
    %643 = vrot.lane.b32.xlu0 %v641, 32
    %v644 = vpop.permute.xlu0 %643
    %v646 = vmul.f32 %v628, %v644
    %vm647 = vcmp.gt.s32.totalorder %v81, 4
    %v648 = vmax.f32 %v506, %v581
    %v649 = vsel %vm582, 1, 0
    %650 = vset.pattern.permute.xlu0 0
    %651 = vperm.xlu0 %650, %v649
    %v652 = vpop.permute.xlu0 %651
    %vm653 = vcmp.eq.s32.totalorder %v652, 1
    %v654 = vsel %vm653, %v648, %v506
    %v655 = vmax.f32 %v513, %v646
    %v656 = vsel %vm647, 1, 0
    %657 = vset.pattern.permute.xlu0 0
    %658 = vperm.xlu0 %657, %v656
    %v659 = vpop.permute.xlu0 %658
    %vm660 = vcmp.eq.s32.totalorder %v659, 1
    %v661 = vsel %vm660, %v655, %v513
    %v662 = vsel %vm653, %v581, %v514
    %v663 = vsel %vm653, %v575, %v515
    %v664 = vsel %vm660, %v646, %v516
    %v665 = vsel %vm660, %v640, %v517
    %v666 = vld [vmem:[#allocation2 + $0x8] sm:$0x3]
    %668 = vrot.lane.b32.xlu0 %v662, 80
    %v669 = vpop.permute.xlu0 %668
    %v670 = vsel %vm83, %v669, 0
    %672 = vmatpush.msra.mxu0 0.0
    %673 = vmatpush.msra.mxu0 0.0
    %674 = vmatpush.msra.mxu0 0.0
    %675 = vmatpush.msra.mxu0 0.0
    %676 = vmatpush.msra.mxu0 0.0
    %677 = vmatpush.msra.mxu0 0.0
    %678 = vmatpush.msra.mxu0 0.0
    %679 = vmatpush.msra.mxu0 0.0
    %680 = vmatpush.msra.mxu0 0.0
    %681 = vmatpush.msra.mxu0 0.0
    %682 = vmatpush.msra.mxu0 0.0
    %683 = vmatpush.msra.mxu0 0.0
    %684 = vmatpush.msra.mxu0 0.0
    %685 = vmatpush.msra.mxu0 0.0
    %686 = vmatpush.msra.mxu0 %v78
    %687 = vmatpush.msra.mxu0 %v77
    %688 = vmatmul.f32.gmra.mxu0 %v670
    %v689 = vpop.f32.mrf.mxu0
    %v690 = vadd.f32 0.0, %v689
    %691 = vdwg.mxu0
    %v692 = vadd.f32 %v666, %v690
    %v693 = vxor.u32 %v692, 2147483648
    %v694 = vmul.f32 %v693, 1.442695
    %v695 = vpow.pop %v694
    %v696 = vadd.f32 %v695, 1.0
    %v697 = vrcp.pop %v696
    %v698 = vmul.f32 %v696, %v697
    %v699 = vsub.f32 1.0, %v698
    %v700 = vmul.f32 %v697, %v699
    %v701 = vadd.f32 %v697, %v700
    %vm702 = vweird.f32 %v696
    %vm703 = vweird.f32 %v697
    %vm704 = vmor %vm702, %vm703
    %v705 = vsel %vm704, %v697, %v701
    %v706 = vand.u32 2147483647, %v696
    %vm707 = vcmp.eq.f32.partialorder %v706, 8.507059e+37
    %v708 = vand.u32 %v696, 2147483648
    %v709 = vor.u32 1.1754944e-38, %v708
    %v710 = vsel %vm707, %v709, %v705
    %v711 = vmul.f32 1.0, %v710
    %v712 = vtanh.pop %v692
    %v713 = vmul.f32 %v711, %v663
    %715 = vrot.lane.b32.xlu0 %v712, 96
    %v716 = vpop.permute.xlu0 %715
    %v718 = vmul.f32 %v711, %v716
    %720 = vrot.lane.b32.xlu0 %v718, 16
    %v721 = vpop.permute.xlu0 %720
    %v723 = vadd.f32 %v713, %v721
    %v724 = vtanh.pop %v723
    %726 = vrot.lane.b32.xlu0 %v724, 32
    %v727 = vpop.permute.xlu0 %726
    %v729 = vmul.f32 %v711, %v727
    %v730 = vld [vmem:[#allocation3 + $0x6] sm:$0x3]
    %732 = vrot.lane.b32.xlu0 %v664, 80
    %v733 = vpop.permute.xlu0 %732
    %v734 = vsel %vm83, %v733, 0
    %736 = vmatpush.msra.mxu0 0.0
    %737 = vmatpush.msra.mxu0 0.0
    %738 = vmatpush.msra.mxu0 0.0
    %739 = vmatpush.msra.mxu0 0.0
    %740 = vmatpush.msra.mxu0 0.0
    %741 = vmatpush.msra.mxu0 0.0
    %742 = vmatpush.msra.mxu0 0.0
    %743 = vmatpush.msra.mxu0 0.0
    %744 = vmatpush.msra.mxu0 0.0
    %745 = vmatpush.msra.mxu0 0.0
    %746 = vmatpush.msra.mxu0 0.0
    %747 = vmatpush.msra.mxu0 0.0
    %748 = vmatpush.msra.mxu0 0.0
    %749 = vmatpush.msra.mxu0 0.0
    %750 = vmatpush.msra.mxu0 %v80
    %751 = vmatpush.msra.mxu0 %v79
    %752 = vmatmul.f32.gmra.mxu0 %v734
    %v753 = vpop.f32.mrf.mxu0
    %v754 = vadd.f32 0.0, %v753
    %755 = vdwg.mxu0
    %v756 = vadd.f32 %v730, %v754
    %v757 = vxor.u32 %v756, 2147483648
    %v758 = vmul.f32 %v757, 1.442695
    %v759 = vpow.pop %v758
    %v760 = vadd.f32 %v759, 1.0
    %v761 = vrcp.pop %v760
    %v762 = vmul.f32 %v760, %v761
    %v763 = vsub.f32 1.0, %v762
    %v764 = vmul.f32 %v761, %v763
    %v765 = vadd.f32 %v761, %v764
    %vm766 = vweird.f32 %v760
    %vm767 = vweird.f32 %v761
    %vm768 = vmor %vm766, %vm767
    %v769 = vsel %vm768, %v761, %v765
    %v770 = vand.u32 2147483647, %v760
    %vm771 = vcmp.eq.f32.partialorder %v770, 8.507059e+37
    %v772 = vand.u32 %v760, 2147483648
    %v773 = vor.u32 1.1754944e-38, %v772
    %v774 = vsel %vm771, %v773, %v769
    %v775 = vmul.f32 1.0, %v774
    %v776 = vtanh.pop %v756
    %v777 = vmul.f32 %v775, %v665
    %779 = vrot.lane.b32.xlu0 %v776, 96
    %v780 = vpop.permute.xlu0 %779
    %v782 = vmul.f32 %v775, %v780
    %784 = vrot.lane.b32.xlu0 %v782, 16
    %v785 = vpop.permute.xlu0 %784
    %v787 = vadd.f32 %v777, %v785
    %v788 = vtanh.pop %v787
    %790 = vrot.lane.b32.xlu0 %v788, 32
    %v791 = vpop.permute.xlu0 %790
    %v793 = vmul.f32 %v775, %v791
    %v794 = vmax.f32 %v654, %v729
    %v795 = vsel %vm660, %v794, %v654
    %v796 = vmax.f32 %v661, %v793
    %v797 = vsel %vm653, %v796, %v661
    %v798 = vsel %vm660, %v729, %v662
    %v799 = vsel %vm660, %v723, %v663
    %v800 = vsel %vm653, %v793, %v664
    %v801 = vsel %vm653, %v787, %v665
    %v802 = vld [vmem:[#allocation2 + $0xa] sm:$0x3]
    %804 = vrot.lane.b32.xlu0 %v798, 80
    %v805 = vpop.permute.xlu0 %804
    %v806 = vsel %vm83, %v805, 0
    %808 = vmatpush.msra.mxu0 0.0
    %809 = vmatpush.msra.mxu0 0.0
    %810 = vmatpush.msra.mxu0 0.0
    %811 = vmatpush.msra.mxu0 0.0
    %812 = vmatpush.msra.mxu0 0.0
    %813 = vmatpush.msra.mxu0 0.0
    %814 = vmatpush.msra.mxu0 0.0
    %815 = vmatpush.msra.mxu0 0.0
    %816 = vmatpush.msra.mxu0 0.0
    %817 = vmatpush.msra.mxu0 0.0
    %818 = vmatpush.msra.mxu0 0.0
    %819 = vmatpush.msra.mxu0 0.0
    %820 = vmatpush.msra.mxu0 0.0
    %821 = vmatpush.msra.mxu0 0.0
    %822 = vmatpush.msra.mxu0 %v78
    %823 = vmatpush.msra.mxu0 %v77
    %824 = vmatmul.f32.gmra.mxu0 %v806
    %v825 = vpop.f32.mrf.mxu0
    %v826 = vadd.f32 0.0, %v825
    %827 = vdwg.mxu0
    %v828 = vadd.f32 %v802, %v826
    %v829 = vxor.u32 %v828, 2147483648
    %v830 = vmul.f32 %v829, 1.442695
    %v831 = vpow.pop %v830
    %v832 = vadd.f32 %v831, 1.0
    %v833 = vrcp.pop %v832
    %v834 = vmul.f32 %v832, %v833
    %v835 = vsub.f32 1.0, %v834
    %v836 = vmul.f32 %v833, %v835
    %v837 = vadd.f32 %v833, %v836
    %vm838 = vweird.f32 %v832
    %vm839 = vweird.f32 %v833
    %vm840 = vmor %vm838, %vm839
    %v841 = vsel %vm840, %v833, %v837
    %v842 = vand.u32 2147483647, %v832
    %vm843 = vcmp.eq.f32.partialorder %v842, 8.507059e+37
    %v844 = vand.u32 %v832, 2147483648
    %v845 = vor.u32 1.1754944e-38, %v844
    %v846 = vsel %vm843, %v845, %v841
    %v847 = vmul.f32 1.0, %v846
    %v848 = vtanh.pop %v828
    %v849 = vmul.f32 %v847, %v799
    %851 = vrot.lane.b32.xlu0 %v848, 96
    %v852 = vpop.permute.xlu0 %851
    %v854 = vmul.f32 %v847, %v852
    %856 = vrot.lane.b32.xlu0 %v854, 16
    %v857 = vpop.permute.xlu0 %856
    %v859 = vadd.f32 %v849, %v857
    %v860 = vtanh.pop %v859
    %862 = vrot.lane.b32.xlu0 %v860, 32
    %v863 = vpop.permute.xlu0 %862
    %v865 = vmul.f32 %v847, %v863
    %v866 = vld [vmem:[#allocation3 + $0x4] sm:$0x3]
    %868 = vrot.lane.b32.xlu0 %v800, 80
    %v869 = vpop.permute.xlu0 %868
    %v870 = vsel %vm83, %v869, 0
    %872 = vmatpush.msra.mxu0 0.0
    %873 = vmatpush.msra.mxu0 0.0
    %874 = vmatpush.msra.mxu0 0.0
    %875 = vmatpush.msra.mxu0 0.0
    %876 = vmatpush.msra.mxu0 0.0
    %877 = vmatpush.msra.mxu0 0.0
    %878 = vmatpush.msra.mxu0 0.0
    %879 = vmatpush.msra.mxu0 0.0
    %880 = vmatpush.msra.mxu0 0.0
    %881 = vmatpush.msra.mxu0 0.0
    %882 = vmatpush.msra.mxu0 0.0
    %883 = vmatpush.msra.mxu0 0.0
    %884 = vmatpush.msra.mxu0 0.0
    %885 = vmatpush.msra.mxu0 0.0
    %886 = vmatpush.msra.mxu0 %v80
    %887 = vmatpush.msra.mxu0 %v79
    %888 = vmatmul.f32.gmra.mxu0 %v870
    %v889 = vpop.f32.mrf.mxu0
    %v890 = vadd.f32 0.0, %v889
    %891 = vdwg.mxu0
    %v892 = vadd.f32 %v866, %v890
    %v893 = vxor.u32 %v892, 2147483648
    %v894 = vmul.f32 %v893, 1.442695
    %v895 = vpow.pop %v894
    %v896 = vadd.f32 %v895, 1.0
    %v897 = vrcp.pop %v896
    %v898 = vmul.f32 %v896, %v897
    %v899 = vsub.f32 1.0, %v898
    %v900 = vmul.f32 %v897, %v899
    %v901 = vadd.f32 %v897, %v900
    %vm902 = vweird.f32 %v896
    %vm903 = vweird.f32 %v897
    %vm904 = vmor %vm902, %vm903
    %v905 = vsel %vm904, %v897, %v901
    %v906 = vand.u32 2147483647, %v896
    %vm907 = vcmp.eq.f32.partialorder %v906, 8.507059e+37
    %v908 = vand.u32 %v896, 2147483648
    %v909 = vor.u32 1.1754944e-38, %v908
    %v910 = vsel %vm907, %v909, %v905
    %v911 = vmul.f32 1.0, %v910
    %v912 = vtanh.pop %v892
    %v913 = vmul.f32 %v911, %v801
    %915 = vrot.lane.b32.xlu0 %v912, 96
    %v916 = vpop.permute.xlu0 %915
    %v918 = vmul.f32 %v911, %v916
    %920 = vrot.lane.b32.xlu0 %v918, 16
    %v921 = vpop.permute.xlu0 %920
    %v923 = vadd.f32 %v913, %v921
    %v924 = vtanh.pop %v923
    %926 = vrot.lane.b32.xlu0 %v924, 32
    %v927 = vpop.permute.xlu0 %926
    %v929 = vmul.f32 %v911, %v927
    %v930 = vmax.f32 %v795, %v865
    %v931 = vsel %vm512, %v930, %v795
    %v932 = vmax.f32 %v797, %v929
    %v933 = vsel %vm505, %v932, %v797
    %v934 = vsel %vm512, %v865, %v798
    %v935 = vsel %vm512, %v859, %v799
    %v936 = vsel %vm505, %v929, %v800
    %v937 = vsel %vm505, %v923, %v801
    %v938 = vld [vmem:[#allocation2 + $0xc] sm:$0x3]
    %940 = vrot.lane.b32.xlu0 %v934, 80
    %v941 = vpop.permute.xlu0 %940
    %v942 = vsel %vm83, %v941, 0
    %944 = vmatpush.msra.mxu0 0.0
    %945 = vmatpush.msra.mxu0 0.0
    %946 = vmatpush.msra.mxu0 0.0
    %947 = vmatpush.msra.mxu0 0.0
    %948 = vmatpush.msra.mxu0 0.0
    %949 = vmatpush.msra.mxu0 0.0
    %950 = vmatpush.msra.mxu0 0.0
    %951 = vmatpush.msra.mxu0 0.0
    %952 = vmatpush.msra.mxu0 0.0
    %953 = vmatpush.msra.mxu0 0.0
    %954 = vmatpush.msra.mxu0 0.0
    %955 = vmatpush.msra.mxu0 0.0
    %956 = vmatpush.msra.mxu0 0.0
    %957 = vmatpush.msra.mxu0 0.0
    %958 = vmatpush.msra.mxu0 %v78
    %959 = vmatpush.msra.mxu0 %v77
    %960 = vmatmul.f32.gmra.mxu0 %v942
    %v961 = vpop.f32.mrf.mxu0
    %v962 = vadd.f32 0.0, %v961
    %963 = vdwg.mxu0
    %v964 = vadd.f32 %v938, %v962
    %v965 = vxor.u32 %v964, 2147483648
    %v966 = vmul.f32 %v965, 1.442695
    %v967 = vpow.pop %v966
    %v968 = vadd.f32 %v967, 1.0
    %v969 = vrcp.pop %v968
    %v970 = vmul.f32 %v968, %v969
    %v971 = vsub.f32 1.0, %v970
    %v972 = vmul.f32 %v969, %v971
    %v973 = vadd.f32 %v969, %v972
    %vm974 = vweird.f32 %v968
    %vm975 = vweird.f32 %v969
    %vm976 = vmor %vm974, %vm975
    %v977 = vsel %vm976, %v969, %v973
    %v978 = vand.u32 2147483647, %v968
    %vm979 = vcmp.eq.f32.partialorder %v978, 8.507059e+37
    %v980 = vand.u32 %v968, 2147483648
    %v981 = vor.u32 1.1754944e-38, %v980
    %v982 = vsel %vm979, %v981, %v977
    %v983 = vmul.f32 1.0, %v982
    %v984 = vtanh.pop %v964
    %v985 = vmul.f32 %v983, %v935
    %987 = vrot.lane.b32.xlu0 %v984, 96
    %v988 = vpop.permute.xlu0 %987
    %v990 = vmul.f32 %v983, %v988
    %992 = vrot.lane.b32.xlu0 %v990, 16
    %v993 = vpop.permute.xlu0 %992
    %v995 = vadd.f32 %v985, %v993
    %v996 = vtanh.pop %v995
    %998 = vrot.lane.b32.xlu0 %v996, 32
    %v999 = vpop.permute.xlu0 %998
    %v1001 = vmul.f32 %v983, %v999
    %v1002 = vld [vmem:[#allocation3 + $0x2] sm:$0x3]
    %1004 = vrot.lane.b32.xlu0 %v936, 80
    %v1005 = vpop.permute.xlu0 %1004
    %v1006 = vsel %vm83, %v1005, 0
    %1008 = vmatpush.msra.mxu0 0.0
    %1009 = vmatpush.msra.mxu0 0.0
    %1010 = vmatpush.msra.mxu0 0.0
    %1011 = vmatpush.msra.mxu0 0.0
    %1012 = vmatpush.msra.mxu0 0.0
    %1013 = vmatpush.msra.mxu0 0.0
    %1014 = vmatpush.msra.mxu0 0.0
    %1015 = vmatpush.msra.mxu0 0.0
    %1016 = vmatpush.msra.mxu0 0.0
    %1017 = vmatpush.msra.mxu0 0.0
    %1018 = vmatpush.msra.mxu0 0.0
    %1019 = vmatpush.msra.mxu0 0.0
    %1020 = vmatpush.msra.mxu0 0.0
    %1021 = vmatpush.msra.mxu0 0.0
    %1022 = vmatpush.msra.mxu0 %v80
    %1023 = vmatpush.msra.mxu0 %v79
    %1024 = vmatmul.f32.gmra.mxu0 %v1006
    %v1025 = vpop.f32.mrf.mxu0
    %v1026 = vadd.f32 0.0, %v1025
    %1027 = vdwg.mxu0
    %v1028 = vadd.f32 %v1002, %v1026
    %v1029 = vxor.u32 %v1028, 2147483648
    %v1030 = vmul.f32 %v1029, 1.442695
    %v1031 = vpow.pop %v1030
    %v1032 = vadd.f32 %v1031, 1.0
    %v1033 = vrcp.pop %v1032
    %v1034 = vmul.f32 %v1032, %v1033
    %v1035 = vsub.f32 1.0, %v1034
    %v1036 = vmul.f32 %v1033, %v1035
    %v1037 = vadd.f32 %v1033, %v1036
    %vm1038 = vweird.f32 %v1032
    %vm1039 = vweird.f32 %v1033
    %vm1040 = vmor %vm1038, %vm1039
    %v1041 = vsel %vm1040, %v1033, %v1037
    %v1042 = vand.u32 2147483647, %v1032
    %vm1043 = vcmp.eq.f32.partialorder %v1042, 8.507059e+37
    %v1044 = vand.u32 %v1032, 2147483648
    %v1045 = vor.u32 1.1754944e-38, %v1044
    %v1046 = vsel %vm1043, %v1045, %v1041
    %v1047 = vmul.f32 1.0, %v1046
    %v1048 = vtanh.pop %v1028
    %v1049 = vmul.f32 %v1047, %v937
    %1051 = vrot.lane.b32.xlu0 %v1048, 96
    %v1052 = vpop.permute.xlu0 %1051
    %v1054 = vmul.f32 %v1047, %v1052
    %1056 = vrot.lane.b32.xlu0 %v1054, 16
    %v1057 = vpop.permute.xlu0 %1056
    %v1059 = vadd.f32 %v1049, %v1057
    %v1060 = vtanh.pop %v1059
    %1062 = vrot.lane.b32.xlu0 %v1060, 32
    %v1063 = vpop.permute.xlu0 %1062
    %v1065 = vmul.f32 %v1047, %v1063
    %v1066 = vmax.f32 %v931, %v1001
    %v1067 = vsel %vm364, %v1066, %v931
    %v1068 = vmax.f32 %v933, %v1065
    %v1069 = vsel %vm357, %v1068, %v933
    %v1070 = vsel %vm364, %v1001, %v934
    %v1071 = vsel %vm364, %v995, %v935
    %v1072 = vsel %vm357, %v1065, %v936
    %v1073 = vsel %vm357, %v1059, %v937
    %v1074 = vld [vmem:[#allocation2 + $0xe] sm:$0x3]
    %1076 = vrot.lane.b32.xlu0 %v1070, 80
    %v1077 = vpop.permute.xlu0 %1076
    %v1078 = vsel %vm83, %v1077, 0
    %1080 = vmatpush.msra.mxu0 0.0
    %1081 = vmatpush.msra.mxu0 0.0
    %1082 = vmatpush.msra.mxu0 0.0
    %1083 = vmatpush.msra.mxu0 0.0
    %1084 = vmatpush.msra.mxu0 0.0
    %1085 = vmatpush.msra.mxu0 0.0
    %1086 = vmatpush.msra.mxu0 0.0
    %1087 = vmatpush.msra.mxu0 0.0
    %1088 = vmatpush.msra.mxu0 0.0
    %1089 = vmatpush.msra.mxu0 0.0
    %1090 = vmatpush.msra.mxu0 0.0
    %1091 = vmatpush.msra.mxu0 0.0
    %1092 = vmatpush.msra.mxu0 0.0
    %1093 = vmatpush.msra.mxu0 0.0
    %1094 = vmatpush.msra.mxu0 %v78
    %1095 = vmatpush.msra.mxu0 %v77
    %1096 = vmatmul.f32.gmra.mxu0 %v1078
    %v1097 = vpop.f32.mrf.mxu0
    %v1098 = vadd.f32 0.0, %v1097
    %1099 = vdwg.mxu0
    %v1100 = vadd.f32 %v1074, %v1098
    %v1101 = vxor.u32 %v1100, 2147483648
    %v1102 = vmul.f32 %v1101, 1.442695
    %v1103 = vpow.pop %v1102
    %v1104 = vadd.f32 %v1103, 1.0
    %v1105 = vrcp.pop %v1104
    %v1106 = vmul.f32 %v1104, %v1105
    %v1107 = vsub.f32 1.0, %v1106
    %v1108 = vmul.f32 %v1105, %v1107
    %v1109 = vadd.f32 %v1105, %v1108
    %vm1110 = vweird.f32 %v1104
    %vm1111 = vweird.f32 %v1105
    %vm1112 = vmor %vm1110, %vm1111
    %v1113 = vsel %vm1112, %v1105, %v1109
    %v1114 = vand.u32 2147483647, %v1104
    %vm1115 = vcmp.eq.f32.partialorder %v1114, 8.507059e+37
    %v1116 = vand.u32 %v1104, 2147483648
    %v1117 = vor.u32 1.1754944e-38, %v1116
    %v1118 = vsel %vm1115, %v1117, %v1113
    %v1119 = vmul.f32 1.0, %v1118
    %v1120 = vtanh.pop %v1100
    %v1121 = vmul.f32 %v1119, %v1071
    %1123 = vrot.lane.b32.xlu0 %v1120, 96
    %v1124 = vpop.permute.xlu0 %1123
    %v1126 = vmul.f32 %v1119, %v1124
    %1128 = vrot.lane.b32.xlu0 %v1126, 16
    %v1129 = vpop.permute.xlu0 %1128
    %v1131 = vadd.f32 %v1121, %v1129
    %v1132 = vtanh.pop %v1131
    %1134 = vrot.lane.b32.xlu0 %v1132, 32
    %v1135 = vpop.permute.xlu0 %1134
    %v1137 = vmul.f32 %v1119, %v1135
    %v1138 = vld [vmem:[#allocation3] sm:$0x3]
    %1140 = vrot.lane.b32.xlu0 %v1072, 80
    %v1141 = vpop.permute.xlu0 %1140
    %v1142 = vsel %vm83, %v1141, 0
    %1144 = vmatpush.msra.mxu0 0.0
    %1145 = vmatpush.msra.mxu0 0.0
    %1146 = vmatpush.msra.mxu0 0.0
    %1147 = vmatpush.msra.mxu0 0.0
    %1148 = vmatpush.msra.mxu0 0.0
    %1149 = vmatpush.msra.mxu0 0.0
    %1150 = vmatpush.msra.mxu0 0.0
    %1151 = vmatpush.msra.mxu0 0.0
    %1152 = vmatpush.msra.mxu0 0.0
    %1153 = vmatpush.msra.mxu0 0.0
    %1154 = vmatpush.msra.mxu0 0.0
    %1155 = vmatpush.msra.mxu0 0.0
    %1156 = vmatpush.msra.mxu0 0.0
    %1157 = vmatpush.msra.mxu0 0.0
    %1158 = vmatpush.msra.mxu0 %v80
    %1159 = vmatpush.msra.mxu0 %v79
    %1160 = vmatmul.f32.gmra.mxu0 %v1142
    %v1161 = vpop.f32.mrf.mxu0
    %v1162 = vadd.f32 0.0, %v1161
    %1163 = vdwg.mxu0
    %v1164 = vadd.f32 %v1138, %v1162
    %v1165 = vxor.u32 %v1164, 2147483648
    %v1166 = vmul.f32 %v1165, 1.442695
    %v1167 = vpow.pop %v1166
    %v1168 = vadd.f32 %v1167, 1.0
    %v1169 = vrcp.pop %v1168
    %v1170 = vmul.f32 %v1168, %v1169
    %v1171 = vsub.f32 1.0, %v1170
    %v1172 = vmul.f32 %v1169, %v1171
    %v1173 = vadd.f32 %v1169, %v1172
    %vm1174 = vweird.f32 %v1168
    %vm1175 = vweird.f32 %v1169
    %vm1176 = vmor %vm1174, %vm1175
    %v1177 = vsel %vm1176, %v1169, %v1173
    %v1178 = vand.u32 2147483647, %v1168
    %vm1179 = vcmp.eq.f32.partialorder %v1178, 8.507059e+37
    %v1180 = vand.u32 %v1168, 2147483648
    %v1181 = vor.u32 1.1754944e-38, %v1180
    %v1182 = vsel %vm1179, %v1181, %v1177
    %v1183 = vmul.f32 1.0, %v1182
    %v1184 = vtanh.pop %v1164
    %v1185 = vmul.f32 %v1183, %v1073
    %1187 = vrot.lane.b32.xlu0 %v1184, 96
    %v1188 = vpop.permute.xlu0 %1187
    %v1190 = vmul.f32 %v1183, %v1188
    %1192 = vrot.lane.b32.xlu0 %v1190, 16
    %v1193 = vpop.permute.xlu0 %1192
    %v1195 = vadd.f32 %v1185, %v1193
    %v1196 = vtanh.pop %v1195
    %1198 = vrot.lane.b32.xlu0 %v1196, 32
    %v1199 = vpop.permute.xlu0 %1198
    %v1201 = vmul.f32 %v1183, %v1199
    %v1202 = vmax.f32 %v1067, %v1137
    %v1203 = vsel %vm216, %v1202, %v1067
    %v1204 = vmax.f32 %v1069, %v1201
    %v1205 = vsel %vm210, %v1204, %v1069
    %vm1206 = vcmp.ge.s32.totalorder %v81, 1
    %v1207 = vsel %vm1206, 1, 0
    %1208 = vset.pattern.permute.xlu0 0
    %1209 = vperm.xlu0 %1208, %v1207
    %v1210 = vpop.permute.xlu0 %1209
    %vm1211 = vcmp.eq.s32.totalorder %v1210, 1
    %v1212 = vsel %vm1211, %v1203, 0.0
    %1214 = vrot.lane.b32.xlu0 %v1212, 80
    %v1215 = vpop.permute.xlu0 %1214
    %vm1217 = vcmask 123904
    %1218 = vst.msk [vmem:[#allocation4] sm:$0x3] %vm1217, %v1215
    %v1219 = vsel %vm1211, %v1205, 0.0
    %1221 = vrot.lane.b32.xlu0 %v1219, 96
    %v1222 = vpop.permute.xlu0 %1221
    %vm1224 = vcmask 255104
    %1225 = vst.msk [vmem:[#allocation4] sm:$0x3] %vm1224, %v1222
    // Predicated region
    $region26: #{lstm_encoder_forward.3} parent=1 // pred_check
      _
    $region27: #{lstm_encoder_forward.3} parent=1 // pred_check_branch
      %1227 = sbr.rel (0) target = $region29
    $region28: #{lstm_encoder_forward.3} parent=1 // pred_region
      %1229 = vsyncadd [#allocation5], 0
      %s1231 = sshll.u32 [#allocation4], 4
      %s1232 = int_to_ptr.vmem [resolvable:$true] %s1231
      %s1233 = sshll.u32 %s6, 4
      %s1234 = int_to_ptr.hbm [resolvable:$true] %s1233
      %1236 = dma.vmem_to_hbm [thread:$0]  %s1232, 32, %s1234, [#allocation5]
    $region29: #{lstm_encoder_forward.3} parent=1 // pred_fallthru
      _
    // Predicated region
    $region30: #{lstm_encoder_forward.3} parent=1 // pred_check
      _
    $region31: #{lstm_encoder_forward.3} parent=1 // pred_check_branch
      %1238 = sbr.rel (0) target = $region33
    $region32: #{lstm_encoder_forward.3} parent=1 // pred_region
      %1240 = dma.done [#allocation5], 32
    $region33: #{lstm_encoder_forward.3} parent=1 // pred_fallthru
      _
    %1241 = vsyncpa [#allocation5], 1

</llo_original>
